<compile_context>
chip_gen: v7x
topology: tpu7x:2x2x1
jax: 0.10.0
libtpu: 0.0.40
codegen_flags: <defaults>
</compile_context>

<pallas_src>
import functools
import math

import jax
import jax.numpy as jnp
from jax.experimental import pallas as pl
from jax.experimental.pallas import tpu as pltpu

INV_SQRT10 = 1.0 / math.sqrt(10.0)
LANE = 128


def _round_up(n, m):
    return ((n + m - 1) // m) * m


# ------------------------------ fused kernel ------------------------------- #

def _fused_forward_kernel(aff_ref,              # SMEM (2*n_layer,) f32: [g1, b1] per layer
                          x_ref,                # (tm, din_pad)   bf16 (lane-padded input)
                          w_in_ref, b_in_ref,   # (din_pad, D) bf16 , (1, D) f32
                          w_ref,                # (1, 2, D, D) bf16  -- layer l slice [w1', w2']
                          b_ref,                # (n_layer, 2, D) f32 -- full stack, resident
                          w_out_ref, b_out_ref,  # (D, dout_pad) bf16, (1, dout_pad) f32
                          o_ref,                # (tm, dout_pad) f32 (lane-dense output)
                          h_ref):               # VMEM scratch (tm, D) f32 -- resident activation
    l = pl.program_id(1)

    # ---- first Linear(input_dim, D): only on the first layer step ----------
    @pl.when(l == 0)
    def _():
        h_ref[...] = (
            jnp.dot(x_ref[...], w_in_ref[...],
                    preferred_element_type=jnp.float32)
            + b_in_ref[...]
        )

    # ---- CNNBlock is identity on the data (conv output discarded) ----------
    # TODO(synk): dead Conv1d(1, 1, k=5) compute from CNNBlock intentionally skipped.

    # ---- ResBlock for layer l (1/sqrt(10) and the second Affine are already
    #      folded into w1'/b1' and w2'/b2' at prepare time) -------------------
    g1 = aff_ref[2 * l]
    be1 = aff_ref[2 * l + 1]
    bl = b_ref[l]                                               # (2, D) f32

    x = h_ref[...]                                              # f32 (tm, D)
    h1 = jnp.tanh((x * g1 + be1).astype(jnp.bfloat16))          # bf16 tanh + MXU operand
    z1 = (jnp.dot(h1, w_ref[0, 0], preferred_element_type=jnp.float32)
          + bl[0:1, :])                                          # == o1*g2 + be2 (f32)
    h2 = jnp.tanh(z1.astype(jnp.bfloat16))
    o2 = (jnp.dot(h2, w_ref[0, 1], preferred_element_type=jnp.float32)
          + bl[1:2, :]) + x                                      # skip stays f32
    h_ref[...] = o2

    # ---- Tanh + Linear(D, output_dim): only on the last layer step ---------
    @pl.when(l == pl.num_programs(1) - 1)
    def _():
        o_ref[...] = (
            jnp.dot(jnp.tanh(o2.astype(jnp.bfloat16)), w_out_ref[...],
                    preferred_element_type=jnp.float32)
            + b_out_ref[...]
        )


# ------------------------------- wrappers ----------------------------------- #

def prepare_params(params, *, matmul_dtype=jnp.bfloat16):
    """Fold constants into weights, stack per-layer params, cast MXU operands."""
    w_in, b_in = params["w_in"], params["b_in"]        # (in, D) f32, (1, D) f32
    w_out, b_out = params["w_out"], params["b_out"]    # (D, out) f32, (1, out) f32
    input_dim, D = w_in.shape
    output_dim = w_out.shape[1]
    din_pad = max(LANE, _round_up(input_dim, LANE))
    dout_pad = max(LANE, _round_up(output_dim, LANE))

    # Zero-pad the tiny K=input_dim contraction to 128 lanes and the narrow
    # output to 128 lanes (lane-dense stores); MXU operands in bf16.
    w_in_p = jnp.zeros((din_pad, D), matmul_dtype).at[:input_dim, :].set(
        w_in.astype(matmul_dtype))
    w_out_p = jnp.zeros((D, dout_pad), matmul_dtype).at[:, :output_dim].set(
        w_out.astype(matmul_dtype))
    b_out_p = jnp.zeros((1, dout_pad), jnp.float32).at[:, :output_dim].set(b_out)

    c = INV_SQRT10
    w_blocks, b_blocks, aff = [], [], []
    for lyr in params["layers"]:
        g1, be1, g2, be2 = (lyr["affine"][0], lyr["affine"][1],
                            lyr["affine"][2], lyr["affine"][3])
        # tanh(o1*g2+be2) == tanh(h1 @ (w1*c*g2) + (b1*c*g2 + be2))
        w1f = (lyr["w1"] * (c * g2)).astype(matmul_dtype)
        b1f = lyr["b1"] * (c * g2) + be2                      # (1, D) f32
        w2f = (lyr["w2"] * c).astype(matmul_dtype)
        b2f = lyr["b2"] * c                                   # (1, D) f32
        w_blocks.append(jnp.stack([w1f, w2f]))                # (2, D, D)
        b_blocks.append(jnp.concatenate([b1f, b2f], axis=0))  # (2, D)
        aff.append(jnp.stack([g1, be1]))
    w_stack = jnp.stack(w_blocks)                             # (n_layer, 2, D, D) bf16
    b_stack = jnp.stack(b_blocks).astype(jnp.float32)         # (n_layer, 2, D)  f32
    affine = jnp.concatenate(aff).astype(jnp.float32)         # (2*n_layer,) flat -> SMEM

    return dict(w_in=w_in_p, b_in=b_in.astype(jnp.float32),
                w_stack=w_stack, b_stack=b_stack,
                w_out=w_out_p, b_out=b_out_p, affine=affine)


@functools.partial(jax.jit, static_argnames=("out_dim", "tm"))
def cnnmlp_forward(x, fp, out_dim, tm=256):
    """x: (B, input_dim) f32; fp: dict from prepare_params().

    tm=256 (single batch tile) is best on single-TC v5e/v6e; on v7x use tm=128
    so the "parallel" batch axis can shard across the two TensorCores.
    """
    B, input_dim = x.shape
    din_pad, D = fp["w_in"].shape
    dout_pad = fp["w_out"].shape[1]
    n_layer = fp["w_stack"].shape[0]
    assert B % tm == 0 and tm % 8 == 0, (B, tm)

    x_pad = jnp.zeros((B, din_pad), fp["w_in"].dtype).at[:, :input_dim].set(
        x.astype(fp["w_in"].dtype))

    out = pl.pallas_call(
        _fused_forward_kernel,
        out_shape=jax.ShapeDtypeStruct((B, dout_pad), jnp.float32),
        grid_spec=pltpu.PrefetchScalarGridSpec(
            num_scalar_prefetch=0,
            grid=(B // tm, n_layer),                                   # l innermost: h stays resident
            in_specs=[
                pl.BlockSpec(memory_space=pltpu.MemorySpace.SMEM),      # affine (g1,b1) scalars
                pl.BlockSpec((tm, din_pad), lambda b, l: (b, 0)),       # x   (1 fetch / batch tile)
                pl.BlockSpec((din_pad, D), lambda b, l: (0, 0)),        # w_in  (fetched once)
                pl.BlockSpec((1, D), lambda b, l: (0, 0)),              # b_in
                pl.BlockSpec((1, 2, D, D), lambda b, l: (l, 0, 0, 0)),  # [w1', w2'] streamed over l
                pl.BlockSpec((n_layer, 2, D), lambda b, l: (0, 0, 0)),  # bias stack, resident
                pl.BlockSpec((D, dout_pad), lambda b, l: (0, 0)),       # w_out (fetched once)
                pl.BlockSpec((1, dout_pad), lambda b, l: (0, 0)),       # b_out
            ],
            out_specs=pl.BlockSpec((tm, dout_pad), lambda b, l: (b, 0)),
            scratch_shapes=[pltpu.VMEM((tm, D), jnp.float32)],          # resident activation
        ),
        compiler_params=pltpu.CompilerParams(
            dimension_semantics=("parallel", "arbitrary")),
    )(fp["affine"], x_pad, fp["w_in"], fp["b_in"],
      fp["w_stack"], fp["b_stack"], fp["w_out"], fp["b_out"])

    return out[:, :out_dim]


# ------------------------- parameter construction --------------------------- #

def init_linear(key, fan_in, fan_out):
    """PyTorch default nn.Linear init: U(-1/sqrt(fan_in), 1/sqrt(fan_in))."""
    k_w, k_b = jax.random.split(key)
    bound = 1.0 / math.sqrt(fan_in)
    w = jax.random.uniform(k_w, (fan_in, fan_out), jnp.float32, -bound, bound)
    b = jax.random.uniform(k_b, (1, fan_out), jnp.float32, -bound, bound)
    return w, b


def init_params(key, input_dim, output_dim, int_dim_arg, n_layer):
    int_dim = int_dim_arg * 128
    keys = jax.random.split(key, 2 + 3 * n_layer)
    w_in, b_in = init_linear(keys[0], input_dim, int_dim)
    layers = []
    for n in range(n_layer):
        w1, b1 = init_linear(keys[1 + 3 * n], int_dim, int_dim)
        w2, b2 = init_linear(keys[2 + 3 * n], int_dim, int_dim)
        # Affine initializes gain=1 / bias=0 in the module; perturb
        # deterministically so the Affine / folding path is actually exercised.
        pert = jax.random.uniform(keys[3 + 3 * n], (4,), jnp.float32, -0.1, 0.1)
        affine = jnp.array([1.0, 0.0, 1.0, 0.0], dtype=jnp.float32) + pert
        layers.append(dict(w1=w1, b1=b1, w2=w2, b2=b2, affine=affine))
    w_out, b_out = init_linear(keys[-1], int_dim, output_dim)
    return dict(w_in=w_in, b_in=b_in, layers=layers, w_out=w_out, b_out=b_out)


# ------------------------------- reference ---------------------------------- #

def reference_forward(x, params):
    h = x @ params["w_in"] + params["b_in"]
    for layer in params["layers"]:
        g1, be1, g2, be2 = layer["affine"]
        o1 = (jnp.tanh(h * g1 + be1) @ layer["w1"] + layer["b1"]) * INV_SQRT10
        h = (jnp.tanh(o1 * g2 + be2) @ layer["w2"] + layer["b2"]) * INV_SQRT10 + h
    return jnp.tanh(h) @ params["w_out"] + params["b_out"]


# --------------------------------- main -------------------------------------- #

if __name__ == "__main__":
    # Shapes implied by the module: CNNBlock reshape(x, (256, 1, 512)) pins
    # batch=256 and int_dim*128=512 (int_dim=4). input_dim / output_dim small.
    BATCH = 256
    INPUT_DIM = 8
    OUTPUT_DIM = 16
    INT_DIM_ARG = 4       # -> hidden width 512
    N_LAYER = 2

    key = jax.random.PRNGKey(0)
    k_params, k_x = jax.random.split(key)
    params = init_params(k_params, INPUT_DIM, OUTPUT_DIM, INT_DIM_ARG, N_LAYER)
    x = jax.random.normal(k_x, (BATCH, INPUT_DIM), dtype=jnp.float32)

    fused = prepare_params(params)
    out = cnnmlp_forward(x, fused, out_dim=OUTPUT_DIM)   # tm=256: single batch tile
    out = jax.block_until_ready(out)

    ref = jax.block_until_ready(reference_forward(x, params))
    assert out.shape == (BATCH, OUTPUT_DIM), out.shape
    # bf16 MXU operands / bf16 tanh with f32 accumulation & residual -> compare
    # against the pure-f32 reference with a bf16-appropriate tolerance.
    max_err = float(jnp.max(jnp.abs(out - ref)))
    assert jnp.allclose(out, ref, rtol=2e-2, atol=2e-2), max_err

    print("KERNEL_OK")
</pallas_src>

<mosaic_0001>
module attributes {stable_mosaic.version = 11 : i64} {
  func.func @_fused_forward_kernel(%arg0: i32, %arg1: i32, %arg2: memref<4xf32, #tpu.memory_space<smem>>, %arg3: memref<256x128xbf16, #tpu.memory_space<vmem>>, %arg4: memref<128x512xbf16, #tpu.memory_space<vmem>>, %arg5: memref<1x512xf32, #tpu.memory_space<vmem>>, %arg6: memref<1x2x512x512xbf16, #tpu.memory_space<vmem>>, %arg7: memref<2x2x512xf32, #tpu.memory_space<vmem>>, %arg8: memref<512x128xbf16, #tpu.memory_space<vmem>>, %arg9: memref<1x128xf32, #tpu.memory_space<vmem>>, %arg10: memref<256x128xf32, #tpu.memory_space<vmem>>, %arg11: memref<256x512xf32, #tpu.memory_space<vmem>>) attributes {dimension_semantics = [#tpu.dimension_semantics<parallel>, #tpu.dimension_semantics<arbitrary>], iteration_bounds = array<i64: 1, 2>, scalar_prefetch = 0 : i64, scratch_operands = 1 : i64, tpu.core_type = #tpu.core_type<tc>, window_params = [{transform_indices = @transform_0, window_bounds = array<i64: 4>}, {transform_indices = @transform_1, window_bounds = array<i64: 256, 128>}, {pipeline_mode = #tpu.pipeline_mode<synchronous>, transform_indices = @transform_2, window_bounds = array<i64: 128, 512>}, {pipeline_mode = #tpu.pipeline_mode<synchronous>, transform_indices = @transform_3, window_bounds = array<i64: 1, 512>}, {transform_indices = @transform_4, window_bounds = array<i64: 1, 2, 512, 512>}, {pipeline_mode = #tpu.pipeline_mode<synchronous>, transform_indices = @transform_5, window_bounds = array<i64: 2, 2, 512>}, {pipeline_mode = #tpu.pipeline_mode<synchronous>, transform_indices = @transform_6, window_bounds = array<i64: 512, 128>}, {pipeline_mode = #tpu.pipeline_mode<synchronous>, transform_indices = @transform_7, window_bounds = array<i64: 1, 128>}, {transform_indices = @transform_8, window_bounds = array<i64: 256, 128>}]} {
    %c0_i32 = arith.constant 0 : i32
    %0 = arith.cmpi eq, %arg1, %c0_i32 : i32
    %1 = arith.extui %0 : i1 to i32
    %c0_i32_0 = arith.constant 0 : i32
    %2 = arith.cmpi ne, %1, %c0_i32_0 : i32
    scf.if %2 {
      %c0_17 = arith.constant 0 : index
      %c0_18 = arith.constant 0 : index
      %39 = vector.load %arg3[%c0_17, %c0_18] : memref<256x128xbf16, #tpu.memory_space<vmem>>, vector<256x128xbf16>
      %c0_19 = arith.constant 0 : index
      %c0_20 = arith.constant 0 : index
      %40 = vector.load %arg4[%c0_19, %c0_20] : memref<128x512xbf16, #tpu.memory_space<vmem>>, vector<128x512xbf16>
      %cst_21 = arith.constant dense<0.000000e+00> : vector<256x512xf32>
      %41 = tpu.matmul %39, %40, %cst_21 {dimension_numbers = #tpu.dot_dimension_numbers<[1], [0], [0], [1], [0, 0, 1, 1], [], []>} : vector<256x128xbf16>, vector<128x512xbf16>, vector<256x512xf32> -> vector<256x512xf32>
      %c0_22 = arith.constant 0 : index
      %c0_23 = arith.constant 0 : index
      %42 = vector.load %arg5[%c0_22, %c0_23] : memref<1x512xf32, #tpu.memory_space<vmem>>, vector<1x512xf32>
      %43 = vector.broadcast %42 : vector<1x512xf32> to vector<256x512xf32>
      %44 = arith.addf %41, %43 : vector<256x512xf32>
      %c0_24 = arith.constant 0 : index
      %c0_25 = arith.constant 0 : index
      %45 = vector.load %arg11[%c0_24, %c0_25] : memref<256x512xf32, #tpu.memory_space<vmem>>, vector<256x512xf32>
      tpu.vector_store %arg11[%c0_24, %c0_25], %44 {strides = array<i32>} : memref<256x512xf32, #tpu.memory_space<vmem>>, vector<256x512xf32>,
    } else {
    }
    %c2_i32 = arith.constant 2 : i32
    %3 = arith.muli %c2_i32, %arg1 : i32
    %4 = arith.index_cast %3 : i32 to index
    %5 = memref.load %arg2[%4] : memref<4xf32, #tpu.memory_space<smem>>
    %c2_i32_1 = arith.constant 2 : i32
    %6 = arith.muli %c2_i32_1, %arg1 : i32
    %c1_i32 = arith.constant 1 : i32
    %7 = arith.addi %6, %c1_i32 : i32
    %8 = arith.index_cast %7 : i32 to index
    %9 = memref.load %arg2[%8] : memref<4xf32, #tpu.memory_space<smem>>
    %10 = arith.index_cast %arg1 : i32 to index
    %c0 = arith.constant 0 : index
    %c0_2 = arith.constant 0 : index
    %11 = vector.load %arg7[%10, %c0, %c0_2] : memref<2x2x512xf32, #tpu.memory_space<vmem>>, vector<1x2x512xf32>
    %12 = vector.shape_cast %11 : vector<1x2x512xf32> to vector<2x512xf32>
    %c0_3 = arith.constant 0 : index
    %c0_4 = arith.constant 0 : index
    %13 = vector.load %arg11[%c0_3, %c0_4] : memref<256x512xf32, #tpu.memory_space<vmem>>, vector<256x512xf32>
    %14 = vector.broadcast %5 : f32 to vector<256x512xf32>
    %15 = arith.mulf %13, %14 : vector<256x512xf32>
    %16 = vector.broadcast %9 : f32 to vector<256x512xf32>
    %17 = arith.addf %15, %16 : vector<256x512xf32>
    %18 = arith.truncf %17 : vector<256x512xf32> to vector<256x512xbf16>
    %19 = math.tanh %18 : vector<256x512xbf16>
    %c0_5 = arith.constant 0 : index
    %c0_6 = arith.constant 0 : index
    %c0_7 = arith.constant 0 : index
    %c0_8 = arith.constant 0 : index
    %20 = vector.load %arg6[%c0_5, %c0_6, %c0_7, %c0_8] : memref<1x2x512x512xbf16, #tpu.memory_space<vmem>>, vector<1x1x512x512xbf16>
    %21 = vector.shape_cast %20 : vector<1x1x512x512xbf16> to vector<512x512xbf16>
    %cst = arith.constant dense<0.000000e+00> : vector<256x512xf32>
    %22 = tpu.matmul %19, %21, %cst {dimension_numbers = #tpu.dot_dimension_numbers<[1], [0], [0], [1], [0, 0, 1, 1], [], []>} : vector<256x512xbf16>, vector<512x512xbf16>, vector<256x512xf32> -> vector<256x512xf32>
    %23 = vector.extract_strided_slice %12 {offsets = [0, 0], sizes = [1, 512], strides = [1, 1]} : vector<2x512xf32> to vector<1x512xf32>
    %24 = vector.broadcast %23 : vector<1x512xf32> to vector<256x512xf32>
    %25 = arith.addf %22, %24 : vector<256x512xf32>
    %26 = arith.truncf %25 : vector<256x512xf32> to vector<256x512xbf16>
    %27 = math.tanh %26 : vector<256x512xbf16>
    %c0_9 = arith.constant 0 : index
    %c1 = arith.constant 1 : index
    %c0_10 = arith.constant 0 : index
    %c0_11 = arith.constant 0 : index
    %28 = vector.load %arg6[%c0_9, %c1, %c0_10, %c0_11] : memref<1x2x512x512xbf16, #tpu.memory_space<vmem>>, vector<1x1x512x512xbf16>
    %29 = vector.shape_cast %28 : vector<1x1x512x512xbf16> to vector<512x512xbf16>
    %cst_12 = arith.constant dense<0.000000e+00> : vector<256x512xf32>
    %30 = tpu.matmul %27, %29, %cst_12 {dimension_numbers = #tpu.dot_dimension_numbers<[1], [0], [0], [1], [0, 0, 1, 1], [], []>} : vector<256x512xbf16>, vector<512x512xbf16>, vector<256x512xf32> -> vector<256x512xf32>
    %31 = vector.extract_strided_slice %12 {offsets = [1, 0], sizes = [1, 512], strides = [1, 1]} : vector<2x512xf32> to vector<1x512xf32>
    %32 = vector.broadcast %31 : vector<1x512xf32> to vector<256x512xf32>
    %33 = arith.addf %30, %32 : vector<256x512xf32>
    %34 = arith.addf %33, %13 : vector<256x512xf32>
    %c0_13 = arith.constant 0 : index
    %c0_14 = arith.constant 0 : index
    %35 = vector.load %arg11[%c0_13, %c0_14] : memref<256x512xf32, #tpu.memory_space<vmem>>, vector<256x512xf32>
    tpu.vector_store %arg11[%c0_13, %c0_14], %34 {strides = array<i32>} : memref<256x512xf32, #tpu.memory_space<vmem>>, vector<256x512xf32>,
    %c1_i32_15 = arith.constant 1 : i32
    %36 = arith.cmpi eq, %arg1, %c1_i32_15 : i32
    %37 = arith.extui %36 : i1 to i32
    %c0_i32_16 = arith.constant 0 : i32
    %38 = arith.cmpi ne, %37, %c0_i32_16 : i32
    scf.if %38 {
      %39 = arith.truncf %34 : vector<256x512xf32> to vector<256x512xbf16>
      %40 = math.tanh %39 : vector<256x512xbf16>
      %c0_17 = arith.constant 0 : index
      %c0_18 = arith.constant 0 : index
      %41 = vector.load %arg8[%c0_17, %c0_18] : memref<512x128xbf16, #tpu.memory_space<vmem>>, vector<512x128xbf16>
      %cst_19 = arith.constant dense<0.000000e+00> : vector<256x128xf32>
      %42 = tpu.matmul %40, %41, %cst_19 {dimension_numbers = #tpu.dot_dimension_numbers<[1], [0], [0], [1], [0, 0, 1, 1], [], []>} : vector<256x512xbf16>, vector<512x128xbf16>, vector<256x128xf32> -> vector<256x128xf32>
      %c0_20 = arith.constant 0 : index
      %c0_21 = arith.constant 0 : index
      %43 = vector.load %arg9[%c0_20, %c0_21] : memref<1x128xf32, #tpu.memory_space<vmem>>, vector<1x128xf32>
      %44 = vector.broadcast %43 : vector<1x128xf32> to vector<256x128xf32>
      %45 = arith.addf %42, %44 : vector<256x128xf32>
      %c0_22 = arith.constant 0 : index
      %c0_23 = arith.constant 0 : index
      %46 = vector.load %arg10[%c0_22, %c0_23] : memref<256x128xf32, #tpu.memory_space<vmem>>, vector<256x128xf32>
      tpu.vector_store %arg10[%c0_22, %c0_23], %45 {strides = array<i32>} : memref<256x128xf32, #tpu.memory_space<vmem>>, vector<256x128xf32>,
    } else {
    }
    return
  }
  func.func @transform_0(%arg0: i32, %arg1: i32) -> i32 {
    %c0_i32 = arith.constant 0 : i32
    %c0_i32_0 = arith.constant 0 : i32
    return %c0_i32 : i32
  }
  func.func @transform_1(%arg0: i32, %arg1: i32) -> (i32, i32) {
    %c0_i32 = arith.constant 0 : i32
    %c0_i32_0 = arith.constant 0 : i32
    return %arg0, %c0_i32 : i32, i32
  }
  func.func @transform_2(%arg0: i32, %arg1: i32) -> (i32, i32) {
    %c0_i32 = arith.constant 0 : i32
    %c0_i32_0 = arith.constant 0 : i32
    %c0_i32_1 = arith.constant 0 : i32
    return %c0_i32, %c0_i32_0 : i32, i32
  }
  func.func @transform_3(%arg0: i32, %arg1: i32) -> (i32, i32) {
    %c0_i32 = arith.constant 0 : i32
    %c0_i32_0 = arith.constant 0 : i32
    %c0_i32_1 = arith.constant 0 : i32
    return %c0_i32, %c0_i32_0 : i32, i32
  }
  func.func @transform_4(%arg0: i32, %arg1: i32) -> (i32, i32, i32, i32) {
    %c0_i32 = arith.constant 0 : i32
    %c0_i32_0 = arith.constant 0 : i32
    %c0_i32_1 = arith.constant 0 : i32
    %c0_i32_2 = arith.constant 0 : i32
    return %arg1, %c0_i32, %c0_i32_0, %c0_i32_1 : i32, i32, i32, i32
  }
  func.func @transform_5(%arg0: i32, %arg1: i32) -> (i32, i32, i32) {
    %c0_i32 = arith.constant 0 : i32
    %c0_i32_0 = arith.constant 0 : i32
    %c0_i32_1 = arith.constant 0 : i32
    %c0_i32_2 = arith.constant 0 : i32
    return %c0_i32, %c0_i32_0, %c0_i32_1 : i32, i32, i32
  }
  func.func @transform_6(%arg0: i32, %arg1: i32) -> (i32, i32) {
    %c0_i32 = arith.constant 0 : i32
    %c0_i32_0 = arith.constant 0 : i32
    %c0_i32_1 = arith.constant 0 : i32
    return %c0_i32, %c0_i32_0 : i32, i32
  }
  func.func @transform_7(%arg0: i32, %arg1: i32) -> (i32, i32) {
    %c0_i32 = arith.constant 0 : i32
    %c0_i32_0 = arith.constant 0 : i32
    %c0_i32_1 = arith.constant 0 : i32
    return %c0_i32, %c0_i32_0 : i32, i32
  }
  func.func @transform_8(%arg0: i32, %arg1: i32) -> (i32, i32) {
    %c0_i32 = arith.constant 0 : i32
    %c0_i32_0 = arith.constant 0 : i32
    return %arg0, %c0_i32 : i32, i32
  }
}

</mosaic_0001>

<llo_original>
// kernel: cnnmlp_forward.1
$region0: #{cnnmlp_forward.1}
  #allocation0 [shape = 'u32[]', space=smem, size = 0x4, offset = 0x4, fixed_abs, tag = 'smem constant byte address 0x4 - core index']
  #allocation1 [shape = 'u32[144,128]{1,0:T(1,128)}', space=vmem, size = 0x12000, scoped, tag = 'internal scratch']
  #allocation2 [shape = 'f32[256,512]{1,0:T(8,128)}', space=vmem, size = 0x80000, scoped, tag = 'scratch operand']
  %s0 = inlined_call_operand.hbm [shape: f32[4], index: 0, kind: input, shape index: {}]
  %s1 = inlined_call_operand.vmem [shape: bf16[256,128], index: 1, kind: input, shape index: {}]
  %s2 = inlined_call_operand.hbm [shape: bf16[128,512], index: 2, kind: input, shape index: {}]
  %s3 = inlined_call_operand.hbm [shape: f32[1,512], index: 3, kind: input, shape index: {}]
  %s4 = inlined_call_operand.hbm [shape: bf16[2,2,512,512], index: 4, kind: input, shape index: {}]
  %s5 = inlined_call_operand.hbm [shape: f32[2,2,512], index: 5, kind: input, shape index: {}]
  %s6 = inlined_call_operand.hbm [shape: bf16[512,128], index: 6, kind: input, shape index: {}]
  %s7 = inlined_call_operand.hbm [shape: f32[1,128], index: 7, kind: input, shape index: {}]
  %s8 = inlined_call_operand.vmem [shape: f32[256,128], index: 8, kind: output, shape index: {}]
  %s9 = sld [smem:[#allocation0]]
  $region101: #{cnnmlp_forward.1} parent=0
    _
  %s11 = ssub.s32 1, %s9
  %s12 = scalar_select 0, %s11, %s9
  $region1: #{cnnmlp_forward.1} parent=0
    #allocation3 [shape = 'u8[512]{0}', space=smem, size = 0x200, scoped, tag = 'input window, operand 0, single buffered']
    #allocation4 [shape = 's32[2]{0}', space=sflag, size = 0x8, scoped, tag = 'scoped memory for cnnmlp_forward.1']
    #allocation5 [shape = 's32[2]{0}', space=sflag, size = 0x8, scoped, tag = 'scoped memory for cnnmlp_forward.1']
    #allocation6 [shape = 'u8[131072]{0}', space=vmem, size = 0x20000, scoped, tag = 'input window, operand 2, single buffered']
    #allocation7 [shape = 'u8[2048]{0}', space=vmem, size = 0x800, scoped, tag = 'input window, operand 3, single buffered']
    #allocation8 [shape = 's32[1]{0}', space=sflag, size = 0x4, scoped, tag = 'scoped memory for cnnmlp_forward.1']
    #allocation9 [shape = 'u8[2097152]{0}', space=vmem, size = 0x200000, scoped, tag = 'input window, operand 4']
    #allocation10 [shape = 'u8[8192]{0}', space=vmem, size = 0x2000, scoped, tag = 'input window, operand 5, single buffered']
    #allocation11 [shape = 'u8[131072]{0}', space=vmem, size = 0x20000, scoped, tag = 'input window, operand 6, single buffered']
    #allocation12 [shape = 's32[1]{0}', space=sflag, size = 0x4, scoped, tag = 'scoped memory for cnnmlp_forward.1']
    #allocation13 [shape = 'u8[512]{0}', space=vmem, size = 0x400, scoped, tag = 'input window, operand 7, single buffered']
    %13 = vsyncpa [#allocation5], 0
    %14 = vsyncpa [#allocation4], 0
    %15 = vsyncpa [#allocation8], 0
    %16 = vsyncpa [#allocation12], 0
    loop: start=0, step=1, limit=4
    $region2: #{cnnmlp_forward.1} parent=1 // loop_pre_header
      _
    $region3: #{cnnmlp_forward.1} parent=1 // loop_header
      %s18 = sphi 0, %s22
      %p19 = scmp.ge.s32.totalorder %s18, 4
      %s25 = sphi 0, %s37
      %s26 = sphi 0, %s33
      %s27 = sphi 0, %s25
      %s28 = sphi 0, %s26
      %s29 = sphi 0, %s27
      %s30 = sphi 0, %s28
      %s38 = sphi 0, %s38
      %s40 = sphi 0, %s38
      %s41 = sphi 0, %s40
      %s55 = sphi 0, %s41
      %s61 = sphi 0, %s63
      %s64 = sphi 0, %s61
      %s65 = sphi 0, %s64
      %s81 = sphi 0, %s65
      %s85 = sphi 0, %s85
      %s87 = sphi 0, %s85
      %s88 = sphi 0, %s87
      %s102 = sphi 0, %s88
      %s106 = sphi 0, %s106
      %s108 = sphi 0, %s106
      %s109 = sphi 0, %s108
      %s123 = sphi 0, %s109
      %s129 = sphi 0, %s131
      %s132 = sphi 0, %s129
      %s133 = sphi 0, %s132
      %s149 = sphi 0, %s133
      %s153 = sphi 0, %s153
      %s155 = sphi 0, %s153
      %s156 = sphi 0, %s155
      %s170 = sphi 0, %s156
      %s174 = sphi 0, %s174
      %s176 = sphi 0, %s174
      %s177 = sphi 0, %s176
      %s191 = sphi 0, %s177
      %s195 = sphi 0, %s195
      %s197 = sphi 0, %s195
      %s198 = sphi 0, %s197
      %s212 = sphi 0, %s198
      %s218 = sphi 0, %s220
      %s221 = sphi 0, %s218
      %s222 = sphi 0, %s221
      %s238 = sphi 0, %s222
    $region4: #{cnnmlp_forward.1} parent=1 // loop_header_branch
      %21 = sbr.rel (%p19) target = $region8
    $region5: #{cnnmlp_forward.1} parent=1 // loop_body
      %s23 = ssub.s32 %s18, 1
      %s24 = ssub.s32 %s18, 2
      %s31 = sadd.s32 1, %s26
      %p32 = scmp.ge.s32.totalorder %s31, 2
      %s33 = scalar_select %p32, 0, %s31
      %s34 = sadd.s32 1, %s25
      %s35 = scalar_select %p32, %s34, %s25
      %p36 = scmp.ge.s32.totalorder %s35, 1
      %s37 = scalar_select %p36, 0, %s35
      %s39 = sadd.s32 %s38, 1
      %p42 = scmp.eq.s32.totalorder %s18, 1
      %p43 = scmp.ne.s32.totalorder %s38, %s40
      %p44 = scmp.eq.s32.totalorder %s18, 0
      %p45 = por %p43, %p44
      %p46 = scmp.ne.s32.totalorder %s38, %s40
      %p47 = scmp.eq.s32.totalorder %s23, 1
      %p48 = por %p46, %p47
      %p49 = scmp.ne.s32.totalorder %s40, %s41
      %p50 = scmp.eq.s32.totalorder %s23, 0
      %p51 = por %p49, %p50
      %p52 = scmp.ne.s32.totalorder %s40, %s41
      %p53 = scmp.eq.s32.totalorder %s24, 1
      %p54 = por %p52, %p53
      %p56 = scmp.ne.s32.totalorder %s41, %s55
      %p57 = scmp.eq.s32.totalorder %s24, 0
      %p58 = por %p56, %p57
      %s59 = ssub.s32 %s25, %s37
      %p60 = scmp.eq.s32.totalorder %s59, 0
      %s62 = sadd.s32 %s61, 1
      %s63 = scalar_select %p60, %s61, %s62
      %p66 = pneg %p60
      %p67 = scmp.eq.s32.totalorder %s18, 1
      %p68 = por %p66, %p67
      %p69 = scmp.ne.s32.totalorder %s61, %s64
      %p70 = scmp.eq.s32.totalorder %s18, 0
      %p71 = por %p69, %p70
      %p72 = scmp.ne.s32.totalorder %s61, %s64
      %p73 = scmp.eq.s32.totalorder %s23, 1
      %p74 = por %p72, %p73
      %p75 = scmp.ne.s32.totalorder %s64, %s65
      %p76 = scmp.eq.s32.totalorder %s23, 0
      %p77 = por %p75, %p76
      %p78 = scmp.ne.s32.totalorder %s64, %s65
      %p79 = scmp.eq.s32.totalorder %s24, 1
      %p80 = por %p78, %p79
      %p82 = scmp.ne.s32.totalorder %s65, %s81
      %p83 = scmp.eq.s32.totalorder %s24, 0
      %p84 = por %p82, %p83
      %s86 = sadd.s32 %s85, 1
      %p89 = scmp.eq.s32.totalorder %s18, 1
      %p90 = scmp.ne.s32.totalorder %s85, %s87
      %p91 = scmp.eq.s32.totalorder %s18, 0
      %p92 = por %p90, %p91
      %p93 = scmp.ne.s32.totalorder %s85, %s87
      %p94 = scmp.eq.s32.totalorder %s23, 1
      %p95 = por %p93, %p94
      %p96 = scmp.ne.s32.totalorder %s87, %s88
      %p97 = scmp.eq.s32.totalorder %s23, 0
      %p98 = por %p96, %p97
      %p99 = scmp.ne.s32.totalorder %s87, %s88
      %p100 = scmp.eq.s32.totalorder %s24, 1
      %p101 = por %p99, %p100
      %p103 = scmp.ne.s32.totalorder %s88, %s102
      %p104 = scmp.eq.s32.totalorder %s24, 0
      %p105 = por %p103, %p104
      %s107 = sadd.s32 %s106, 1
      %p110 = scmp.eq.s32.totalorder %s18, 1
      %p111 = scmp.ne.s32.totalorder %s106, %s108
      %p112 = scmp.eq.s32.totalorder %s18, 0
      %p113 = por %p111, %p112
      %p114 = scmp.ne.s32.totalorder %s106, %s108
      %p115 = scmp.eq.s32.totalorder %s23, 1
      %p116 = por %p114, %p115
      %p117 = scmp.ne.s32.totalorder %s108, %s109
      %p118 = scmp.eq.s32.totalorder %s23, 0
      %p119 = por %p117, %p118
      %p120 = scmp.ne.s32.totalorder %s108, %s109
      %p121 = scmp.eq.s32.totalorder %s24, 1
      %p122 = por %p120, %p121
      %p124 = scmp.ne.s32.totalorder %s109, %s123
      %p125 = scmp.eq.s32.totalorder %s24, 0
      %p126 = por %p124, %p125
      %s127 = ssub.s32 %s26, %s33
      %p128 = scmp.eq.s32.totalorder %s127, 0
      %s130 = sadd.s32 %s129, 1
      %s131 = scalar_select %p128, %s129, %s130
      %p134 = pneg %p128
      %p135 = scmp.eq.s32.totalorder %s18, 1
      %p136 = por %p134, %p135
      %p137 = scmp.ne.s32.totalorder %s129, %s132
      %p138 = scmp.eq.s32.totalorder %s18, 0
      %p139 = por %p137, %p138
      %p140 = scmp.ne.s32.totalorder %s129, %s132
      %p141 = scmp.eq.s32.totalorder %s23, 1
      %p142 = por %p140, %p141
      %p143 = scmp.ne.s32.totalorder %s132, %s133
      %p144 = scmp.eq.s32.totalorder %s23, 0
      %p145 = por %p143, %p144
      %p146 = scmp.ne.s32.totalorder %s132, %s133
      %p147 = scmp.eq.s32.totalorder %s24, 1
      %p148 = por %p146, %p147
      %p150 = scmp.ne.s32.totalorder %s133, %s149
      %p151 = scmp.eq.s32.totalorder %s24, 0
      %p152 = por %p150, %p151
      %s154 = sadd.s32 %s153, 1
      %p157 = scmp.eq.s32.totalorder %s18, 1
      %p158 = scmp.ne.s32.totalorder %s153, %s155
      %p159 = scmp.eq.s32.totalorder %s18, 0
      %p160 = por %p158, %p159
      %p161 = scmp.ne.s32.totalorder %s153, %s155
      %p162 = scmp.eq.s32.totalorder %s23, 1
      %p163 = por %p161, %p162
      %p164 = scmp.ne.s32.totalorder %s155, %s156
      %p165 = scmp.eq.s32.totalorder %s23, 0
      %p166 = por %p164, %p165
      %p167 = scmp.ne.s32.totalorder %s155, %s156
      %p168 = scmp.eq.s32.totalorder %s24, 1
      %p169 = por %p167, %p168
      %p171 = scmp.ne.s32.totalorder %s156, %s170
      %p172 = scmp.eq.s32.totalorder %s24, 0
      %p173 = por %p171, %p172
      %s175 = sadd.s32 %s174, 1
      %p178 = scmp.eq.s32.totalorder %s18, 1
      %p179 = scmp.ne.s32.totalorder %s174, %s176
      %p180 = scmp.eq.s32.totalorder %s18, 0
      %p181 = por %p179, %p180
      %p182 = scmp.ne.s32.totalorder %s174, %s176
      %p183 = scmp.eq.s32.totalorder %s23, 1
      %p184 = por %p182, %p183
      %p185 = scmp.ne.s32.totalorder %s176, %s177
      %p186 = scmp.eq.s32.totalorder %s23, 0
      %p187 = por %p185, %p186
      %p188 = scmp.ne.s32.totalorder %s176, %s177
      %p189 = scmp.eq.s32.totalorder %s24, 1
      %p190 = por %p188, %p189
      %p192 = scmp.ne.s32.totalorder %s177, %s191
      %p193 = scmp.eq.s32.totalorder %s24, 0
      %p194 = por %p192, %p193
      %s196 = sadd.s32 %s195, 1
      %p199 = scmp.eq.s32.totalorder %s18, 1
      %p200 = scmp.ne.s32.totalorder %s195, %s197
      %p201 = scmp.eq.s32.totalorder %s18, 0
      %p202 = por %p200, %p201
      %p203 = scmp.ne.s32.totalorder %s195, %s197
      %p204 = scmp.eq.s32.totalorder %s23, 1
      %p205 = por %p203, %p204
      %p206 = scmp.ne.s32.totalorder %s197, %s198
      %p207 = scmp.eq.s32.totalorder %s23, 0
      %p208 = por %p206, %p207
      %p209 = scmp.ne.s32.totalorder %s197, %s198
      %p210 = scmp.eq.s32.totalorder %s24, 1
      %p211 = por %p209, %p210
      %p213 = scmp.ne.s32.totalorder %s198, %s212
      %p214 = scmp.eq.s32.totalorder %s24, 0
      %p215 = por %p213, %p214
      %s216 = ssub.s32 %s25, %s37
      %p217 = scmp.eq.s32.totalorder %s216, 0
      %s219 = sadd.s32 %s218, 1
      %s220 = scalar_select %p217, %s218, %s219
      %p223 = pneg %p217
      %p224 = scmp.eq.s32.totalorder %s18, 1
      %p225 = por %p223, %p224
      %p226 = scmp.ne.s32.totalorder %s218, %s221
      %p227 = scmp.eq.s32.totalorder %s18, 0
      %p228 = por %p226, %p227
      %p229 = scmp.ne.s32.totalorder %s218, %s221
      %p230 = scmp.eq.s32.totalorder %s23, 1
      %p231 = por %p229, %p230
      %p232 = scmp.ne.s32.totalorder %s221, %s222
      %p233 = scmp.eq.s32.totalorder %s23, 0
      %p234 = por %p232, %p233
      %p235 = scmp.ne.s32.totalorder %s221, %s222
      %p236 = scmp.eq.s32.totalorder %s24, 1
      %p237 = por %p235, %p236
      %p239 = scmp.ne.s32.totalorder %s222, %s238
      %p240 = scmp.eq.s32.totalorder %s24, 0
      %p241 = por %p239, %p240
      %p242 = scmp.le.s32.totalorder 1, %s18
      %p243 = scmp.lt.s32.totalorder %s18, 3
      %p244 = pnand %p242, %p243
      %p245 = pneg %p244
      // Predicated region
      $region9: #{cnnmlp_forward.1} parent=5 // pred_check
        _
      $region10: #{cnnmlp_forward.1} parent=5 // pred_check_branch
        %247 = sbr.rel (%p244) target = $region12
      $region11: #{cnnmlp_forward.1} parent=5 // pred_region
        %s248 = ssub.s32 %s18, 1
        // Predicated region
        $region13: #{cnnmlp_forward.1} parent=11 // pred_check
          %p249 = pneg %p51
        $region14: #{cnnmlp_forward.1} parent=11 // pred_check_branch
          %251 = sbr.rel (%p249) target = $region16
        $region15: #{cnnmlp_forward.1} parent=11 // pred_region
          %s253 = ssub.s32 16, 16
          %254 = vsyncadd [#allocation5], %s253
          %257 = dma.hbm_to_smem %s0, 16, [#allocation3], [#allocation5]
        $region16: #{cnnmlp_forward.1} parent=11 // pred_fallthru
          _
        // Predicated region
        $region17: #{cnnmlp_forward.1} parent=11 // pred_check
          %p258 = pneg %p77
        $region18: #{cnnmlp_forward.1} parent=11 // pred_check_branch
          %260 = sbr.rel (%p258) target = $region20
        $region19: #{cnnmlp_forward.1} parent=11 // pred_region
          %s261 = smul.u32 32, %s27
          %p262 = scmp.lt.s32.totalorder %s261, 31
          %s263 = scalar_select %p262, %s261, 31
          %s264 = smul.addr %s263, 4
          %s265 = scalar_lea.vmem %s1, %s264
          %s266 = smul.u32 32, %s27
        $region20: #{cnnmlp_forward.1} parent=11 // pred_fallthru
          _
        // Predicated region
        $region21: #{cnnmlp_forward.1} parent=11 // pred_check
          %p267 = pneg %p98
        $region22: #{cnnmlp_forward.1} parent=11 // pred_check_branch
          %269 = sbr.rel (%p267) target = $region24
        $region23: #{cnnmlp_forward.1} parent=11 // pred_region
          %s271 = ssub.s32 4096, 4096
          %272 = vsyncadd [#allocation4], %s271
          %s273 = sshll.u32 [#allocation6], 4
          %s274 = int_to_ptr.vmem [resolvable:$true] %s273
          %279 = dma.hbm_to_vmem [thread:$0]  %s2, 4096, %s274, [#allocation4], 256, 256, 16
        $region24: #{cnnmlp_forward.1} parent=11 // pred_fallthru
          _
        // Predicated region
        $region25: #{cnnmlp_forward.1} parent=11 // pred_check
          %p280 = pneg %p119
        $region26: #{cnnmlp_forward.1} parent=11 // pred_check_branch
          %282 = sbr.rel (%p280) target = $region28
        $region27: #{cnnmlp_forward.1} parent=11 // pred_region
          %s284 = ssub.s32 64, 64
          %285 = vsyncadd [#allocation8], %s284
          %s287 = sshll.u32 [#allocation7], 4
          %s288 = int_to_ptr.vmem [resolvable:$true] %s287
          %290 = dma.hbm_to_vmem [thread:$0]  %s3, 64, %s288, [#allocation8]
        $region28: #{cnnmlp_forward.1} parent=11 // pred_fallthru
          _
        // Predicated region
        $region29: #{cnnmlp_forward.1} parent=11 // pred_check
          %p291 = pneg %p166
        $region30: #{cnnmlp_forward.1} parent=11 // pred_check_branch
          %293 = sbr.rel (%p291) target = $region32
        $region31: #{cnnmlp_forward.1} parent=11 // pred_region
          %s295 = ssub.s32 256, 256
          %296 = vsyncadd [#allocation8], %s295
          %s297 = sshll.u32 [#allocation10], 4
          %s298 = int_to_ptr.vmem [resolvable:$true] %s297
          %303 = dma.hbm_to_vmem [thread:$0]  %s5, 256, %s298, [#allocation8], 128, 128, 8
        $region32: #{cnnmlp_forward.1} parent=11 // pred_fallthru
          _
        // Predicated region
        $region33: #{cnnmlp_forward.1} parent=11 // pred_check
          %p304 = pneg %p187
        $region34: #{cnnmlp_forward.1} parent=11 // pred_check_branch
          %306 = sbr.rel (%p304) target = $region36
        $region35: #{cnnmlp_forward.1} parent=11 // pred_region
          %s308 = ssub.s32 4096, 4096
          %309 = vsyncadd [#allocation12], %s308
          %s310 = sshll.u32 [#allocation11], 4
          %s311 = int_to_ptr.vmem [resolvable:$true] %s310
          %316 = dma.hbm_to_vmem [thread:$0]  %s6, 4096, %s311, [#allocation12], 64, 64, 4
        $region36: #{cnnmlp_forward.1} parent=11 // pred_fallthru
          _
        // Predicated region
        $region37: #{cnnmlp_forward.1} parent=11 // pred_check
          %p317 = pneg %p208
        $region38: #{cnnmlp_forward.1} parent=11 // pred_check_branch
          %319 = sbr.rel (%p317) target = $region40
        $region39: #{cnnmlp_forward.1} parent=11 // pred_region
          %s321 = ssub.s32 16, 16
          %322 = vsyncadd [#allocation12], %s321
          %s324 = sshll.u32 [#allocation13], 4
          %s325 = int_to_ptr.vmem [resolvable:$true] %s324
          %327 = dma.hbm_to_vmem [thread:$0]  %s7, 16, %s325, [#allocation12]
        $region40: #{cnnmlp_forward.1} parent=11 // pred_fallthru
          _
      $region12: #{cnnmlp_forward.1} parent=5 // pred_fallthru
        _
      %p328 = scmp.lt.s32.totalorder %s18, 2
      // Predicated region
      $region41: #{cnnmlp_forward.1} parent=5 // pred_check
        %p329 = pneg %p328
      $region42: #{cnnmlp_forward.1} parent=5 // pred_check_branch
        %331 = sbr.rel (%p329) target = $region44
      $region43: #{cnnmlp_forward.1} parent=5 // pred_region
        // Predicated region
        $region45: #{cnnmlp_forward.1} parent=43 // pred_check
          %p332 = pneg %p139
        $region46: #{cnnmlp_forward.1} parent=43 // pred_check_branch
          %334 = sbr.rel (%p332) target = $region48
        $region47: #{cnnmlp_forward.1} parent=43 // pred_region
          %s335 = sand.u32 %s18, 1
          %s336 = scalar_lea.sflag [#allocation4], %s335
          %s337 = sand.u32 %s129, 1
          %s338 = smul.addr %s337, 2048
          %s339 = scalar_lea.vmem [#allocation9], %s338
          %s341 = ssub.s32 32768, 32768
          %342 = vsyncadd %s336, %s341
          %s343 = smul.addr %s26, 512
          %s344 = smul.addr %s343, 64
          %s345 = scalar_lea.hbm %s4, %s344
          %s346 = sshll.u32 %s339, 4
          %s347 = int_to_ptr.vmem [resolvable:$true] %s346
          %352 = dma.hbm_to_vmem [thread:$0]  %s345, 32768, %s347, %s336, 256, 256, 16
        $region48: #{cnnmlp_forward.1} parent=43 // pred_fallthru
          _
      $region44: #{cnnmlp_forward.1} parent=5 // pred_fallthru
        _
      %p353 = scmp.le.s32.totalorder 1, %s18
      %p354 = scmp.lt.s32.totalorder %s18, 3
      %p355 = pnand %p353, %p354
      %p356 = pneg %p355
      // Predicated region
      $region49: #{cnnmlp_forward.1} parent=5 // pred_check
        _
      $region50: #{cnnmlp_forward.1} parent=5 // pred_check_branch
        %358 = sbr.rel (%p355) target = $region52
      $region51: #{cnnmlp_forward.1} parent=5 // pred_region
        %s359 = ssub.s32 %s18, 1
        // Predicated region
        $region53: #{cnnmlp_forward.1} parent=51 // pred_check
          %p360 = pneg %p51
        $region54: #{cnnmlp_forward.1} parent=51 // pred_check_branch
          %362 = sbr.rel (%p360) target = $region56
        $region55: #{cnnmlp_forward.1} parent=51 // pred_region
          %363 = dma.done [#allocation5], 16
        $region56: #{cnnmlp_forward.1} parent=51 // pred_fallthru
          _
        // Predicated region
        $region57: #{cnnmlp_forward.1} parent=51 // pred_check
          %p364 = pneg %p98
        $region58: #{cnnmlp_forward.1} parent=51 // pred_check_branch
          %366 = sbr.rel (%p364) target = $region60
        $region59: #{cnnmlp_forward.1} parent=51 // pred_region
          %367 = dma.done [#allocation4], 4096
        $region60: #{cnnmlp_forward.1} parent=51 // pred_fallthru
          _
        // Predicated region
        $region61: #{cnnmlp_forward.1} parent=51 // pred_check
          %p368 = pneg %p119
        $region62: #{cnnmlp_forward.1} parent=51 // pred_check_branch
          %370 = sbr.rel (%p368) target = $region64
        $region63: #{cnnmlp_forward.1} parent=51 // pred_region
          %371 = dma.done [#allocation8], 64
        $region64: #{cnnmlp_forward.1} parent=51 // pred_fallthru
          _
        %s372 = sand.u32 %s23, 1
        %s373 = scalar_lea.sflag [#allocation4], %s372
        %s374 = sand.u32 %s132, 1
        %s375 = smul.addr %s374, 2048
        %s376 = scalar_lea.vmem [#allocation9], %s375
        // Predicated region
        $region65: #{cnnmlp_forward.1} parent=51 // pred_check
          %p377 = pneg %p145
        $region66: #{cnnmlp_forward.1} parent=51 // pred_check_branch
          %379 = sbr.rel (%p377) target = $region68
        $region67: #{cnnmlp_forward.1} parent=51 // pred_region
          %380 = dma.done %s373, 32768
        $region68: #{cnnmlp_forward.1} parent=51 // pred_fallthru
          _
        // Predicated region
        $region69: #{cnnmlp_forward.1} parent=51 // pred_check
          %p381 = pneg %p166
        $region70: #{cnnmlp_forward.1} parent=51 // pred_check_branch
          %383 = sbr.rel (%p381) target = $region72
        $region71: #{cnnmlp_forward.1} parent=51 // pred_region
          %384 = dma.done [#allocation8], 256
        $region72: #{cnnmlp_forward.1} parent=51 // pred_fallthru
          _
        // Predicated region
        $region73: #{cnnmlp_forward.1} parent=51 // pred_check
          %p385 = pneg %p187
        $region74: #{cnnmlp_forward.1} parent=51 // pred_check_branch
          %387 = sbr.rel (%p385) target = $region76
        $region75: #{cnnmlp_forward.1} parent=51 // pred_region
          %388 = dma.done [#allocation12], 4096
        $region76: #{cnnmlp_forward.1} parent=51 // pred_fallthru
          _
        // Predicated region
        $region77: #{cnnmlp_forward.1} parent=51 // pred_check
          %p389 = pneg %p208
        $region78: #{cnnmlp_forward.1} parent=51 // pred_check_branch
          %391 = sbr.rel (%p389) target = $region80
        $region79: #{cnnmlp_forward.1} parent=51 // pred_region
          %392 = dma.done [#allocation12], 16
        $region80: #{cnnmlp_forward.1} parent=51 // pred_fallthru
          _
        %393 = sfence
        %p394 = pneg %p51
        %p395 = pneg %p48
        %s396 = smul.u32 32, %s27
        %p397 = scmp.lt.s32.totalorder %s396, 31
        %s398 = scalar_select %p397, %s396, 31
        %s399 = smul.addr %s398, 4
        %s400 = scalar_lea.vmem %s1, %s399
        %p401 = pneg %p77
        %p402 = pneg %p74
        %p403 = pneg %p98
        %p404 = pneg %p95
        %p405 = pneg %p119
        %p406 = pneg %p116
        %s407 = sand.u32 %s23, 1
        %s408 = scalar_lea.sflag [#allocation4], %s407
        %s409 = sand.u32 %s132, 1
        %s410 = smul.addr %s409, 2048
        %s411 = scalar_lea.vmem [#allocation9], %s410
        %p412 = pneg %p145
        %p413 = pneg %p142
        %p414 = pneg %p166
        %p415 = pneg %p163
        %p416 = pneg %p187
        %p417 = pneg %p184
        %p418 = pneg %p208
        %p419 = pneg %p205
        %p420 = pneg %p234
        %p421 = pneg %p231
        %s422 = smul.u32 32, %s27
        %p423 = scmp.lt.s32.totalorder %s422, 31
        %s424 = scalar_select %p423, %s422, 31
        %s425 = smul.addr %s424, 8
        %s426 = scalar_lea.vmem %s8, %s425
        %s427 = smul.u32 32, %s27
        %p428 = scmp.lt.s32.totalorder %s427, 31
        %s429 = scalar_select %p428, %s427, 31
        %s430 = smul.addr %s429, 4
        %s431 = scalar_lea.vmem %s1, %s430
        %s432 = smul.u32 32, %s27
        %s433 = smul.u32 32, %s27
        %p434 = scmp.lt.s32.totalorder %s433, 31
        %s435 = scalar_select %p434, %s433, 31
        %s436 = smul.addr %s435, 8
        %s437 = scalar_lea.vmem %s8, %s436
        %s438 = smul.u32 32, %s27
        %p440 = scmp.eq.s32.totalorder %s28, 0
        // Predicated region
        $region81: #{cnnmlp_forward.1} parent=51 // pred_check
          %p441 = pneg %p440
        $region82: #{cnnmlp_forward.1} parent=51 // pred_check_branch
          %443 = sbr.rel (%p441) target = $region84
        $region83: #{cnnmlp_forward.1} parent=51 // pred_region
          %v444 = vld [vmem:[%s431] sm:$0xf]
          %v445 = vld [vmem:[%s431 + $0x4] sm:$0xf]
          %v446 = vld [vmem:[%s431 + $0x8] sm:$0xf]
          %v447 = vld [vmem:[%s431 + $0xc] sm:$0xf]
          %v448 = vld [vmem:[%s431 + $0x10] sm:$0xf]
          %v449 = vld [vmem:[%s431 + $0x14] sm:$0xf]
          %v450 = vld [vmem:[%s431 + $0x18] sm:$0xf]
          %v451 = vld [vmem:[%s431 + $0x1c] sm:$0xf]
          %v452 = vld [vmem:[%s431 + $0x20] sm:$0xf]
          %v453 = vld [vmem:[%s431 + $0x24] sm:$0xf]
          %v454 = vld [vmem:[%s431 + $0x28] sm:$0xf]
          %v455 = vld [vmem:[%s431 + $0x2c] sm:$0xf]
          %v456 = vld [vmem:[%s431 + $0x30] sm:$0xf]
          %v457 = vld [vmem:[%s431 + $0x34] sm:$0xf]
          %v458 = vld [vmem:[%s431 + $0x38] sm:$0xf]
          %v459 = vld [vmem:[%s431 + $0x3c] sm:$0xf]
          %v460 = vld [vmem:[%s431 + $0x40] sm:$0xf]
          %v461 = vld [vmem:[%s431 + $0x44] sm:$0xf]
          %v462 = vld [vmem:[%s431 + $0x48] sm:$0xf]
          %v463 = vld [vmem:[%s431 + $0x4c] sm:$0xf]
          %v464 = vld [vmem:[%s431 + $0x50] sm:$0xf]
          %v465 = vld [vmem:[%s431 + $0x54] sm:$0xf]
          %v466 = vld [vmem:[%s431 + $0x58] sm:$0xf]
          %v467 = vld [vmem:[%s431 + $0x5c] sm:$0xf]
          %v468 = vld [vmem:[%s431 + $0x60] sm:$0xf]
          %v469 = vld [vmem:[%s431 + $0x64] sm:$0xf]
          %v470 = vld [vmem:[%s431 + $0x68] sm:$0xf]
          %v471 = vld [vmem:[%s431 + $0x6c] sm:$0xf]
          %v472 = vld [vmem:[%s431 + $0x70] sm:$0xf]
          %v473 = vld [vmem:[%s431 + $0x74] sm:$0xf]
          %v474 = vld [vmem:[%s431 + $0x78] sm:$0xf]
          %v475 = vld [vmem:[%s431 + $0x7c] sm:$0xf]
          %v476 = vld [vmem:[#allocation6] sm:$0xff]
          %v477 = vld [vmem:[#allocation6 + $0x8] sm:$0xff]
          %v478 = vld [vmem:[#allocation6 + $0x10] sm:$0xff]
          %v479 = vld [vmem:[#allocation6 + $0x18] sm:$0xff]
          %v480 = vld [vmem:[#allocation6 + $0x20] sm:$0xff]
          %v481 = vld [vmem:[#allocation6 + $0x28] sm:$0xff]
          %v482 = vld [vmem:[#allocation6 + $0x30] sm:$0xff]
          %v483 = vld [vmem:[#allocation6 + $0x38] sm:$0xff]
          %v484 = vld [vmem:[#allocation6 + $0x40] sm:$0xff]
          %v485 = vld [vmem:[#allocation6 + $0x48] sm:$0xff]
          %v486 = vld [vmem:[#allocation6 + $0x50] sm:$0xff]
          %v487 = vld [vmem:[#allocation6 + $0x58] sm:$0xff]
          %v488 = vld [vmem:[#allocation6 + $0x60] sm:$0xff]
          %v489 = vld [vmem:[#allocation6 + $0x68] sm:$0xff]
          %v490 = vld [vmem:[#allocation6 + $0x70] sm:$0xff]
          %v491 = vld [vmem:[#allocation6 + $0x78] sm:$0xff]
          %v492 = vld [vmem:[#allocation6 + $0x80] sm:$0xff]
          %v493 = vld [vmem:[#allocation6 + $0x88] sm:$0xff]
          %v494 = vld [vmem:[#allocation6 + $0x90] sm:$0xff]
          %v495 = vld [vmem:[#allocation6 + $0x98] sm:$0xff]
          %v496 = vld [vmem:[#allocation6 + $0xa0] sm:$0xff]
          %v497 = vld [vmem:[#allocation6 + $0xa8] sm:$0xff]
          %v498 = vld [vmem:[#allocation6 + $0xb0] sm:$0xff]
          %v499 = vld [vmem:[#allocation6 + $0xb8] sm:$0xff]
          %v500 = vld [vmem:[#allocation6 + $0xc0] sm:$0xff]
          %v501 = vld [vmem:[#allocation6 + $0xc8] sm:$0xff]
          %v502 = vld [vmem:[#allocation6 + $0xd0] sm:$0xff]
          %v503 = vld [vmem:[#allocation6 + $0xd8] sm:$0xff]
          %v504 = vld [vmem:[#allocation6 + $0xe0] sm:$0xff]
          %v505 = vld [vmem:[#allocation6 + $0xe8] sm:$0xff]
          %v506 = vld [vmem:[#allocation6 + $0xf0] sm:$0xff]
          %v507 = vld [vmem:[#allocation6 + $0xf8] sm:$0xff]
          %v508 = vld [vmem:[#allocation7] sm:$0xf]
          %v510 = vlaneseq
          %v511 = vshrl.u32 %v510, 7
          %v512 = vsub.s32 0, %v511
          %v513 = vrot.slane %v508, %v512
          %v514 = vlaneseq
          %v515 = vshrl.u32 %v514, 7
          %v516 = vsub.s32 1, %v515
          %v517 = vrot.slane %v508, %v516
          %v518 = vlaneseq
          %v519 = vshrl.u32 %v518, 7
          %v520 = vsub.s32 2, %v519
          %v521 = vrot.slane %v508, %v520
          %v522 = vlaneseq
          %v523 = vshrl.u32 %v522, 7
          %v524 = vsub.s32 3, %v523
          %v525 = vrot.slane %v508, %v524
          %v562 = vunpack.c.l.b16 %v444
          %v563 = vunpack.c.l.b16 %v445
          %v564 = vunpack.c.l.b16 %v446
          %v565 = vunpack.c.l.b16 %v447
          %v566 = vunpack.c.l.b16 %v448
          %v567 = vunpack.c.l.b16 %v449
          %v568 = vunpack.c.l.b16 %v450
          %v569 = vunpack.c.l.b16 %v451
          %v570 = vunpack.c.l.b16 %v452
          %v571 = vunpack.c.l.b16 %v453
          %v572 = vunpack.c.l.b16 %v454
          %v573 = vunpack.c.l.b16 %v455
          %v574 = vunpack.c.l.b16 %v456
          %v575 = vunpack.c.l.b16 %v457
          %v576 = vunpack.c.l.b16 %v458
          %v577 = vunpack.c.l.b16 %v459
          %v578 = vunpack.c.l.b16 %v460
          %v579 = vunpack.c.l.b16 %v461
          %v580 = vunpack.c.l.b16 %v462
          %v581 = vunpack.c.l.b16 %v463
          %v582 = vunpack.c.l.b16 %v464
          %v583 = vunpack.c.l.b16 %v465
          %v584 = vunpack.c.l.b16 %v466
          %v585 = vunpack.c.l.b16 %v467
          %v586 = vunpack.c.l.b16 %v468
          %v587 = vunpack.c.l.b16 %v469
          %v588 = vunpack.c.l.b16 %v470
          %v589 = vunpack.c.l.b16 %v471
          %v590 = vunpack.c.l.b16 %v472
          %v591 = vunpack.c.l.b16 %v473
          %v592 = vunpack.c.l.b16 %v474
          %v593 = vunpack.c.l.b16 %v475
          %v594 = vpack.c.b16 %v563, %v562
          %v595 = vpack.c.b16 %v565, %v564
          %v596 = vpack.c.b16 %v567, %v566
          %v597 = vpack.c.b16 %v569, %v568
          %v598 = vpack.c.b16 %v571, %v570
          %v599 = vpack.c.b16 %v573, %v572
          %v600 = vpack.c.b16 %v575, %v574
          %v601 = vpack.c.b16 %v577, %v576
          %v602 = vpack.c.b16 %v579, %v578
          %v603 = vpack.c.b16 %v581, %v580
          %v604 = vpack.c.b16 %v583, %v582
          %v605 = vpack.c.b16 %v585, %v584
          %v606 = vpack.c.b16 %v587, %v586
          %v607 = vpack.c.b16 %v589, %v588
          %v608 = vpack.c.b16 %v591, %v590
          %v609 = vpack.c.b16 %v593, %v592
          %v658 = vunpack.c.l.b16 %v476
          %v659 = vunpack.c.h.b16 %v476
          %v660 = vunpack.c.l.b16 %v477
          %v661 = vunpack.c.h.b16 %v477
          %v662 = vunpack.c.l.b16 %v478
          %v663 = vunpack.c.h.b16 %v478
          %v664 = vunpack.c.l.b16 %v479
          %v665 = vunpack.c.h.b16 %v479
          %v666 = vunpack.c.l.b16 %v480
          %v667 = vunpack.c.h.b16 %v480
          %v668 = vunpack.c.l.b16 %v481
          %v669 = vunpack.c.h.b16 %v481
          %v670 = vunpack.c.l.b16 %v482
          %v671 = vunpack.c.h.b16 %v482
          %v672 = vunpack.c.l.b16 %v483
          %v673 = vunpack.c.h.b16 %v483
          %v674 = vunpack.c.l.b16 %v484
          %v675 = vunpack.c.h.b16 %v484
          %v676 = vunpack.c.l.b16 %v485
          %v677 = vunpack.c.h.b16 %v485
          %v678 = vunpack.c.l.b16 %v486
          %v679 = vunpack.c.h.b16 %v486
          %v680 = vunpack.c.l.b16 %v487
          %v681 = vunpack.c.h.b16 %v487
          %v682 = vunpack.c.l.b16 %v488
          %v683 = vunpack.c.h.b16 %v488
          %v684 = vunpack.c.l.b16 %v489
          %v685 = vunpack.c.h.b16 %v489
          %v686 = vunpack.c.l.b16 %v490
          %v687 = vunpack.c.h.b16 %v490
          %v688 = vunpack.c.l.b16 %v491
          %v689 = vunpack.c.h.b16 %v491
          %v690 = vunpack.c.l.b16 %v492
          %v691 = vunpack.c.h.b16 %v492
          %v692 = vunpack.c.l.b16 %v493
          %v693 = vunpack.c.h.b16 %v493
          %v694 = vunpack.c.l.b16 %v494
          %v695 = vunpack.c.h.b16 %v494
          %v696 = vunpack.c.l.b16 %v495
          %v697 = vunpack.c.h.b16 %v495
          %v698 = vunpack.c.l.b16 %v496
          %v699 = vunpack.c.h.b16 %v496
          %v700 = vunpack.c.l.b16 %v497
          %v701 = vunpack.c.h.b16 %v497
          %v702 = vunpack.c.l.b16 %v498
          %v703 = vunpack.c.h.b16 %v498
          %v704 = vunpack.c.l.b16 %v499
          %v705 = vunpack.c.h.b16 %v499
          %v706 = vunpack.c.l.b16 %v500
          %v707 = vunpack.c.h.b16 %v500
          %v708 = vunpack.c.l.b16 %v501
          %v709 = vunpack.c.h.b16 %v501
          %v710 = vunpack.c.l.b16 %v502
          %v711 = vunpack.c.h.b16 %v502
          %v712 = vunpack.c.l.b16 %v503
          %v713 = vunpack.c.h.b16 %v503
          %v714 = vunpack.c.l.b16 %v504
          %v715 = vunpack.c.h.b16 %v504
          %v716 = vunpack.c.l.b16 %v505
          %v717 = vunpack.c.h.b16 %v505
          %v718 = vunpack.c.l.b16 %v506
          %v719 = vunpack.c.h.b16 %v506
          %v720 = vunpack.c.l.b16 %v507
          %v721 = vunpack.c.h.b16 %v507
          %v722 = vpack.c.b16 %v662, %v658
          %v723 = vpack.c.b16 %v663, %v659
          %v724 = vpack.c.b16 %v664, %v660
          %v725 = vpack.c.b16 %v665, %v661
          %v726 = vpack.c.b16 %v670, %v666
          %v727 = vpack.c.b16 %v671, %v667
          %v728 = vpack.c.b16 %v672, %v668
          %v729 = vpack.c.b16 %v673, %v669
          %v730 = vpack.c.b16 %v678, %v674
          %v731 = vpack.c.b16 %v679, %v675
          %v732 = vpack.c.b16 %v680, %v676
          %v733 = vpack.c.b16 %v681, %v677
          %v734 = vpack.c.b16 %v686, %v682
          %v735 = vpack.c.b16 %v687, %v683
          %v736 = vpack.c.b16 %v688, %v684
          %v737 = vpack.c.b16 %v689, %v685
          %v738 = vpack.c.b16 %v694, %v690
          %v739 = vpack.c.b16 %v695, %v691
          %v740 = vpack.c.b16 %v696, %v692
          %v741 = vpack.c.b16 %v697, %v693
          %v742 = vpack.c.b16 %v702, %v698
          %v743 = vpack.c.b16 %v703, %v699
          %v744 = vpack.c.b16 %v704, %v700
          %v745 = vpack.c.b16 %v705, %v701
          %v746 = vpack.c.b16 %v710, %v706
          %v747 = vpack.c.b16 %v711, %v707
          %v748 = vpack.c.b16 %v712, %v708
          %v749 = vpack.c.b16 %v713, %v709
          %v750 = vpack.c.b16 %v718, %v714
          %v751 = vpack.c.b16 %v719, %v715
          %v752 = vpack.c.b16 %v720, %v716
          %v753 = vpack.c.b16 %v721, %v717
          %786 = vmatprep.subr.bf16.mxu0 %v723
          %787 = vmatpush1.bf16.msra.mxu0 %v722
          %788 = vmatprep.subr.bf16.mxu0 %v727
          %789 = vmatpush1.bf16.msra.mxu0 %v726
          %790 = vmatprep.subr.bf16.mxu0 %v731
          %791 = vmatpush1.bf16.msra.mxu0 %v730
          %792 = vmatprep.subr.bf16.mxu0 %v735
          %793 = vmatpush1.bf16.msra.mxu0 %v734
          %794 = vmatprep.subr.bf16.mxu0 %v739
          %795 = vmatpush1.bf16.msra.mxu0 %v738
          %796 = vmatprep.subr.bf16.mxu0 %v743
          %797 = vmatpush1.bf16.msra.mxu0 %v742
          %798 = vmatprep.subr.bf16.mxu0 %v747
          %799 = vmatpush1.bf16.msra.mxu0 %v746
          %800 = vmatprep.subr.bf16.mxu0 %v751
          %801 = vmatpush1.bf16.msra.mxu0 %v750
          %802 = vmatprep.subr.bf16.mxu0 0
          %803 = vmatpush1.bf16.msra.mxu0 0
          %804 = vmatprep.subr.bf16.mxu0 0
          %805 = vmatpush1.bf16.msra.mxu0 0
          %806 = vmatprep.subr.bf16.mxu0 0
          %807 = vmatpush1.bf16.msra.mxu0 0
          %808 = vmatprep.subr.bf16.mxu0 0
          %809 = vmatpush1.bf16.msra.mxu0 0
          %810 = vmatprep.subr.bf16.mxu0 0
          %811 = vmatpush1.bf16.msra.mxu0 0
          %812 = vmatprep.subr.bf16.mxu0 0
          %813 = vmatpush1.bf16.msra.mxu0 0
          %814 = vmatprep.subr.bf16.mxu0 0
          %815 = vmatpush1.bf16.msra.mxu0 0
          %816 = vmatprep.subr.bf16.mxu0 0
          %817 = vmatpush1.bf16.msra.mxu0 0
          %818 = vmatprep.mubr.bf16.mxu0 0
          %819 = vmatmul.mubr.bf16.gmra.mrb[0].mxu0 %v594
          %v820 = vpop.f32.mrb[0].mxu0
          %v821 = vadd.f32 %v513, %v820
          %v822 = vpop.f32.mrb[0].mxu0
          %v823 = vadd.f32 %v517, %v822
          %v824 = vpop.f32.mrb[0].mxu0
          %v825 = vadd.f32 %v513, %v824
          %v826 = vpop.f32.mrb[0].mxu0
          %v827 = vadd.f32 %v517, %v826
          %828 = vmatprep.mubr.bf16.mxu0 0
          %829 = vmatmul.mubr.bf16.gmra.mrb[0].mxu0 %v595
          %v830 = vpop.f32.mrb[0].mxu0
          %v831 = vadd.f32 %v513, %v830
          %v832 = vpop.f32.mrb[0].mxu0
          %v833 = vadd.f32 %v517, %v832
          %v834 = vpop.f32.mrb[0].mxu0
          %v835 = vadd.f32 %v513, %v834
          %v836 = vpop.f32.mrb[0].mxu0
          %v837 = vadd.f32 %v517, %v836
          %838 = vmatprep.mubr.bf16.mxu0 0
          %839 = vmatmul.mubr.bf16.gmra.mrb[0].mxu0 %v596
          %v840 = vpop.f32.mrb[0].mxu0
          %v841 = vadd.f32 %v513, %v840
          %v842 = vpop.f32.mrb[0].mxu0
          %v843 = vadd.f32 %v517, %v842
          %v844 = vpop.f32.mrb[0].mxu0
          %v845 = vadd.f32 %v513, %v844
          %v846 = vpop.f32.mrb[0].mxu0
          %v847 = vadd.f32 %v517, %v846
          %848 = vmatprep.mubr.bf16.mxu0 0
          %849 = vmatmul.mubr.bf16.gmra.mrb[0].mxu0 %v597
          %v850 = vpop.f32.mrb[0].mxu0
          %v851 = vadd.f32 %v513, %v850
          %v852 = vpop.f32.mrb[0].mxu0
          %v853 = vadd.f32 %v517, %v852
          %v854 = vpop.f32.mrb[0].mxu0
          %v855 = vadd.f32 %v513, %v854
          %v856 = vpop.f32.mrb[0].mxu0
          %v857 = vadd.f32 %v517, %v856
          %858 = vmatprep.mubr.bf16.mxu0 0
          %859 = vmatmul.mubr.bf16.gmra.mrb[0].mxu0 %v598
          %v860 = vpop.f32.mrb[0].mxu0
          %v861 = vadd.f32 %v513, %v860
          %v862 = vpop.f32.mrb[0].mxu0
          %v863 = vadd.f32 %v517, %v862
          %v864 = vpop.f32.mrb[0].mxu0
          %v865 = vadd.f32 %v513, %v864
          %v866 = vpop.f32.mrb[0].mxu0
          %v867 = vadd.f32 %v517, %v866
          %868 = vmatprep.mubr.bf16.mxu0 0
          %869 = vmatmul.mubr.bf16.gmra.mrb[0].mxu0 %v599
          %v870 = vpop.f32.mrb[0].mxu0
          %v871 = vadd.f32 %v513, %v870
          %v872 = vpop.f32.mrb[0].mxu0
          %v873 = vadd.f32 %v517, %v872
          %v874 = vpop.f32.mrb[0].mxu0
          %v875 = vadd.f32 %v513, %v874
          %v876 = vpop.f32.mrb[0].mxu0
          %v877 = vadd.f32 %v517, %v876
          %878 = vmatprep.mubr.bf16.mxu0 0
          %879 = vmatmul.mubr.bf16.gmra.mrb[0].mxu0 %v600
          %v880 = vpop.f32.mrb[0].mxu0
          %v881 = vadd.f32 %v513, %v880
          %v882 = vpop.f32.mrb[0].mxu0
          %v883 = vadd.f32 %v517, %v882
          %v884 = vpop.f32.mrb[0].mxu0
          %v885 = vadd.f32 %v513, %v884
          %v886 = vpop.f32.mrb[0].mxu0
          %v887 = vadd.f32 %v517, %v886
          %888 = vmatprep.mubr.bf16.mxu0 0
          %889 = vmatmul.mubr.bf16.gmra.mrb[0].mxu0 %v601
          %v890 = vpop.f32.mrb[0].mxu0
          %v891 = vadd.f32 %v513, %v890
          %v892 = vpop.f32.mrb[0].mxu0
          %v893 = vadd.f32 %v517, %v892
          %v894 = vpop.f32.mrb[0].mxu0
          %v895 = vadd.f32 %v513, %v894
          %v896 = vpop.f32.mrb[0].mxu0
          %v897 = vadd.f32 %v517, %v896
          %898 = vmatprep.mubr.bf16.mxu0 0
          %899 = vmatmul.mubr.bf16.gmra.mrb[0].mxu0 %v602
          %v900 = vpop.f32.mrb[0].mxu0
          %v901 = vadd.f32 %v513, %v900
          %v902 = vpop.f32.mrb[0].mxu0
          %v903 = vadd.f32 %v517, %v902
          %v904 = vpop.f32.mrb[0].mxu0
          %v905 = vadd.f32 %v513, %v904
          %v906 = vpop.f32.mrb[0].mxu0
          %v907 = vadd.f32 %v517, %v906
          %908 = vmatprep.mubr.bf16.mxu0 0
          %909 = vmatmul.mubr.bf16.gmra.mrb[0].mxu0 %v603
          %v910 = vpop.f32.mrb[0].mxu0
          %v911 = vadd.f32 %v513, %v910
          %v912 = vpop.f32.mrb[0].mxu0
          %v913 = vadd.f32 %v517, %v912
          %v914 = vpop.f32.mrb[0].mxu0
          %v915 = vadd.f32 %v513, %v914
          %v916 = vpop.f32.mrb[0].mxu0
          %v917 = vadd.f32 %v517, %v916
          %918 = vmatprep.mubr.bf16.mxu0 0
          %919 = vmatmul.mubr.bf16.gmra.mrb[0].mxu0 %v604
          %v920 = vpop.f32.mrb[0].mxu0
          %v921 = vadd.f32 %v513, %v920
          %v922 = vpop.f32.mrb[0].mxu0
          %v923 = vadd.f32 %v517, %v922
          %v924 = vpop.f32.mrb[0].mxu0
          %v925 = vadd.f32 %v513, %v924
          %v926 = vpop.f32.mrb[0].mxu0
          %v927 = vadd.f32 %v517, %v926
          %928 = vmatprep.mubr.bf16.mxu0 0
          %929 = vmatmul.mubr.bf16.gmra.mrb[0].mxu0 %v605
          %v930 = vpop.f32.mrb[0].mxu0
          %v931 = vadd.f32 %v513, %v930
          %v932 = vpop.f32.mrb[0].mxu0
          %v933 = vadd.f32 %v517, %v932
          %v934 = vpop.f32.mrb[0].mxu0
          %v935 = vadd.f32 %v513, %v934
          %v936 = vpop.f32.mrb[0].mxu0
          %v937 = vadd.f32 %v517, %v936
          %938 = vmatprep.mubr.bf16.mxu0 0
          %939 = vmatmul.mubr.bf16.gmra.mrb[0].mxu0 %v606
          %v940 = vpop.f32.mrb[0].mxu0
          %v941 = vadd.f32 %v513, %v940
          %v942 = vpop.f32.mrb[0].mxu0
          %v943 = vadd.f32 %v517, %v942
          %v944 = vpop.f32.mrb[0].mxu0
          %v945 = vadd.f32 %v513, %v944
          %v946 = vpop.f32.mrb[0].mxu0
          %v947 = vadd.f32 %v517, %v946
          %948 = vmatprep.mubr.bf16.mxu0 0
          %949 = vmatmul.mubr.bf16.gmra.mrb[0].mxu0 %v607
          %v950 = vpop.f32.mrb[0].mxu0
          %v951 = vadd.f32 %v513, %v950
          %v952 = vpop.f32.mrb[0].mxu0
          %v953 = vadd.f32 %v517, %v952
          %v954 = vpop.f32.mrb[0].mxu0
          %v955 = vadd.f32 %v513, %v954
          %v956 = vpop.f32.mrb[0].mxu0
          %v957 = vadd.f32 %v517, %v956
          %958 = vmatprep.mubr.bf16.mxu0 0
          %959 = vmatmul.mubr.bf16.gmra.mrb[0].mxu0 %v608
          %v960 = vpop.f32.mrb[0].mxu0
          %v961 = vadd.f32 %v513, %v960
          %v962 = vpop.f32.mrb[0].mxu0
          %v963 = vadd.f32 %v517, %v962
          %v964 = vpop.f32.mrb[0].mxu0
          %v965 = vadd.f32 %v513, %v964
          %v966 = vpop.f32.mrb[0].mxu0
          %v967 = vadd.f32 %v517, %v966
          %968 = vmatprep.mubr.bf16.mxu0 0
          %969 = vmatmul.mubr.bf16.gmra.mrb[0].mxu0 %v609
          %v970 = vpop.f32.mrb[0].mxu0
          %v971 = vadd.f32 %v513, %v970
          %v972 = vpop.f32.mrb[0].mxu0
          %v973 = vadd.f32 %v517, %v972
          %v974 = vpop.f32.mrb[0].mxu0
          %v975 = vadd.f32 %v513, %v974
          %v976 = vpop.f32.mrb[0].mxu0
          %v977 = vadd.f32 %v517, %v976
          %978 = vdwg.mxu0
          %979 = vmatprep.subr.bf16.mxu0 %v725
          %980 = vmatpush1.bf16.msra.mxu0 %v724
          %981 = vmatprep.subr.bf16.mxu0 %v729
          %982 = vmatpush1.bf16.msra.mxu0 %v728
          %983 = vmatprep.subr.bf16.mxu0 %v733
          %984 = vmatpush1.bf16.msra.mxu0 %v732
          %985 = vmatprep.subr.bf16.mxu0 %v737
          %986 = vmatpush1.bf16.msra.mxu0 %v736
          %987 = vmatprep.subr.bf16.mxu0 %v741
          %988 = vmatpush1.bf16.msra.mxu0 %v740
          %989 = vmatprep.subr.bf16.mxu0 %v745
          %990 = vmatpush1.bf16.msra.mxu0 %v744
          %991 = vmatprep.subr.bf16.mxu0 %v749
          %992 = vmatpush1.bf16.msra.mxu0 %v748
          %993 = vmatprep.subr.bf16.mxu0 %v753
          %994 = vmatpush1.bf16.msra.mxu0 %v752
          %995 = vmatprep.subr.bf16.mxu0 0
          %996 = vmatpush1.bf16.msra.mxu0 0
          %997 = vmatprep.subr.bf16.mxu0 0
          %998 = vmatpush1.bf16.msra.mxu0 0
          %999 = vmatprep.subr.bf16.mxu0 0
          %1000 = vmatpush1.bf16.msra.mxu0 0
          %1001 = vmatprep.subr.bf16.mxu0 0
          %1002 = vmatpush1.bf16.msra.mxu0 0
          %1003 = vmatprep.subr.bf16.mxu0 0
          %1004 = vmatpush1.bf16.msra.mxu0 0
          %1005 = vmatprep.subr.bf16.mxu0 0
          %1006 = vmatpush1.bf16.msra.mxu0 0
          %1007 = vmatprep.subr.bf16.mxu0 0
          %1008 = vmatpush1.bf16.msra.mxu0 0
          %1009 = vmatprep.subr.bf16.mxu0 0
          %1010 = vmatpush1.bf16.msra.mxu0 0
          %1011 = vmatprep.mubr.bf16.mxu0 0
          %1012 = vmatmul.mubr.bf16.gmra.mrb[0].mxu0 %v594
          %v1013 = vpop.f32.mrb[0].mxu0
          %v1014 = vadd.f32 %v521, %v1013
          %v1015 = vpop.f32.mrb[0].mxu0
          %v1016 = vadd.f32 %v525, %v1015
          %v1017 = vpop.f32.mrb[0].mxu0
          %v1018 = vadd.f32 %v521, %v1017
          %v1019 = vpop.f32.mrb[0].mxu0
          %v1020 = vadd.f32 %v525, %v1019
          %1021 = vmatprep.mubr.bf16.mxu0 0
          %1022 = vmatmul.mubr.bf16.gmra.mrb[0].mxu0 %v595
          %v1023 = vpop.f32.mrb[0].mxu0
          %v1024 = vadd.f32 %v521, %v1023
          %v1025 = vpop.f32.mrb[0].mxu0
          %v1026 = vadd.f32 %v525, %v1025
          %v1027 = vpop.f32.mrb[0].mxu0
          %v1028 = vadd.f32 %v521, %v1027
          %v1029 = vpop.f32.mrb[0].mxu0
          %v1030 = vadd.f32 %v525, %v1029
          %1031 = vmatprep.mubr.bf16.mxu0 0
          %1032 = vmatmul.mubr.bf16.gmra.mrb[0].mxu0 %v596
          %v1033 = vpop.f32.mrb[0].mxu0
          %v1034 = vadd.f32 %v521, %v1033
          %v1035 = vpop.f32.mrb[0].mxu0
          %v1036 = vadd.f32 %v525, %v1035
          %v1037 = vpop.f32.mrb[0].mxu0
          %v1038 = vadd.f32 %v521, %v1037
          %v1039 = vpop.f32.mrb[0].mxu0
          %v1040 = vadd.f32 %v525, %v1039
          %1041 = vmatprep.mubr.bf16.mxu0 0
          %1042 = vmatmul.mubr.bf16.gmra.mrb[0].mxu0 %v597
          %v1043 = vpop.f32.mrb[0].mxu0
          %v1044 = vadd.f32 %v521, %v1043
          %v1045 = vpop.f32.mrb[0].mxu0
          %v1046 = vadd.f32 %v525, %v1045
          %v1047 = vpop.f32.mrb[0].mxu0
          %v1048 = vadd.f32 %v521, %v1047
          %v1049 = vpop.f32.mrb[0].mxu0
          %v1050 = vadd.f32 %v525, %v1049
          %1051 = vmatprep.mubr.bf16.mxu0 0
          %1052 = vmatmul.mubr.bf16.gmra.mrb[0].mxu0 %v598
          %v1053 = vpop.f32.mrb[0].mxu0
          %v1054 = vadd.f32 %v521, %v1053
          %v1055 = vpop.f32.mrb[0].mxu0
          %v1056 = vadd.f32 %v525, %v1055
          %v1057 = vpop.f32.mrb[0].mxu0
          %v1058 = vadd.f32 %v521, %v1057
          %v1059 = vpop.f32.mrb[0].mxu0
          %v1060 = vadd.f32 %v525, %v1059
          %1061 = vmatprep.mubr.bf16.mxu0 0
          %1062 = vmatmul.mubr.bf16.gmra.mrb[0].mxu0 %v599
          %v1063 = vpop.f32.mrb[0].mxu0
          %v1064 = vadd.f32 %v521, %v1063
          %v1065 = vpop.f32.mrb[0].mxu0
          %v1066 = vadd.f32 %v525, %v1065
          %v1067 = vpop.f32.mrb[0].mxu0
          %v1068 = vadd.f32 %v521, %v1067
          %v1069 = vpop.f32.mrb[0].mxu0
          %v1070 = vadd.f32 %v525, %v1069
          %1071 = vmatprep.mubr.bf16.mxu0 0
          %1072 = vmatmul.mubr.bf16.gmra.mrb[0].mxu0 %v600
          %v1073 = vpop.f32.mrb[0].mxu0
          %v1074 = vadd.f32 %v521, %v1073
          %v1075 = vpop.f32.mrb[0].mxu0
          %v1076 = vadd.f32 %v525, %v1075
          %v1077 = vpop.f32.mrb[0].mxu0
          %v1078 = vadd.f32 %v521, %v1077
          %v1079 = vpop.f32.mrb[0].mxu0
          %v1080 = vadd.f32 %v525, %v1079
          %1081 = vmatprep.mubr.bf16.mxu0 0
          %1082 = vmatmul.mubr.bf16.gmra.mrb[0].mxu0 %v601
          %v1083 = vpop.f32.mrb[0].mxu0
          %v1084 = vadd.f32 %v521, %v1083
          %v1085 = vpop.f32.mrb[0].mxu0
          %v1086 = vadd.f32 %v525, %v1085
          %v1087 = vpop.f32.mrb[0].mxu0
          %v1088 = vadd.f32 %v521, %v1087
          %v1089 = vpop.f32.mrb[0].mxu0
          %v1090 = vadd.f32 %v525, %v1089
          %1091 = vmatprep.mubr.bf16.mxu0 0
          %1092 = vmatmul.mubr.bf16.gmra.mrb[0].mxu0 %v602
          %v1093 = vpop.f32.mrb[0].mxu0
          %v1094 = vadd.f32 %v521, %v1093
          %v1095 = vpop.f32.mrb[0].mxu0
          %v1096 = vadd.f32 %v525, %v1095
          %v1097 = vpop.f32.mrb[0].mxu0
          %v1098 = vadd.f32 %v521, %v1097
          %v1099 = vpop.f32.mrb[0].mxu0
          %v1100 = vadd.f32 %v525, %v1099
          %1101 = vmatprep.mubr.bf16.mxu0 0
          %1102 = vmatmul.mubr.bf16.gmra.mrb[0].mxu0 %v603
          %v1103 = vpop.f32.mrb[0].mxu0
          %v1104 = vadd.f32 %v521, %v1103
          %v1105 = vpop.f32.mrb[0].mxu0
          %v1106 = vadd.f32 %v525, %v1105
          %v1107 = vpop.f32.mrb[0].mxu0
          %v1108 = vadd.f32 %v521, %v1107
          %v1109 = vpop.f32.mrb[0].mxu0
          %v1110 = vadd.f32 %v525, %v1109
          %1111 = vmatprep.mubr.bf16.mxu0 0
          %1112 = vmatmul.mubr.bf16.gmra.mrb[0].mxu0 %v604
          %v1113 = vpop.f32.mrb[0].mxu0
          %v1114 = vadd.f32 %v521, %v1113
          %v1115 = vpop.f32.mrb[0].mxu0
          %v1116 = vadd.f32 %v525, %v1115
          %v1117 = vpop.f32.mrb[0].mxu0
          %v1118 = vadd.f32 %v521, %v1117
          %v1119 = vpop.f32.mrb[0].mxu0
          %v1120 = vadd.f32 %v525, %v1119
          %1121 = vmatprep.mubr.bf16.mxu0 0
          %1122 = vmatmul.mubr.bf16.gmra.mrb[0].mxu0 %v605
          %v1123 = vpop.f32.mrb[0].mxu0
          %v1124 = vadd.f32 %v521, %v1123
          %v1125 = vpop.f32.mrb[0].mxu0
          %v1126 = vadd.f32 %v525, %v1125
          %v1127 = vpop.f32.mrb[0].mxu0
          %v1128 = vadd.f32 %v521, %v1127
          %v1129 = vpop.f32.mrb[0].mxu0
          %v1130 = vadd.f32 %v525, %v1129
          %1131 = vmatprep.mubr.bf16.mxu0 0
          %1132 = vmatmul.mubr.bf16.gmra.mrb[0].mxu0 %v606
          %v1133 = vpop.f32.mrb[0].mxu0
          %v1134 = vadd.f32 %v521, %v1133
          %v1135 = vpop.f32.mrb[0].mxu0
          %v1136 = vadd.f32 %v525, %v1135
          %v1137 = vpop.f32.mrb[0].mxu0
          %v1138 = vadd.f32 %v521, %v1137
          %v1139 = vpop.f32.mrb[0].mxu0
          %v1140 = vadd.f32 %v525, %v1139
          %1141 = vmatprep.mubr.bf16.mxu0 0
          %1142 = vmatmul.mubr.bf16.gmra.mrb[0].mxu0 %v607
          %v1143 = vpop.f32.mrb[0].mxu0
          %v1144 = vadd.f32 %v521, %v1143
          %v1145 = vpop.f32.mrb[0].mxu0
          %v1146 = vadd.f32 %v525, %v1145
          %v1147 = vpop.f32.mrb[0].mxu0
          %v1148 = vadd.f32 %v521, %v1147
          %v1149 = vpop.f32.mrb[0].mxu0
          %v1150 = vadd.f32 %v525, %v1149
          %1151 = vmatprep.mubr.bf16.mxu0 0
          %1152 = vmatmul.mubr.bf16.gmra.mrb[0].mxu0 %v608
          %v1153 = vpop.f32.mrb[0].mxu0
          %v1154 = vadd.f32 %v521, %v1153
          %v1155 = vpop.f32.mrb[0].mxu0
          %v1156 = vadd.f32 %v525, %v1155
          %v1157 = vpop.f32.mrb[0].mxu0
          %v1158 = vadd.f32 %v521, %v1157
          %v1159 = vpop.f32.mrb[0].mxu0
          %v1160 = vadd.f32 %v525, %v1159
          %1161 = vmatprep.mubr.bf16.mxu0 0
          %1162 = vmatmul.mubr.bf16.gmra.mrb[0].mxu0 %v609
          %v1163 = vpop.f32.mrb[0].mxu0
          %v1164 = vadd.f32 %v521, %v1163
          %v1165 = vpop.f32.mrb[0].mxu0
          %v1166 = vadd.f32 %v525, %v1165
          %v1167 = vpop.f32.mrb[0].mxu0
          %v1168 = vadd.f32 %v521, %v1167
          %v1169 = vpop.f32.mrb[0].mxu0
          %v1170 = vadd.f32 %v525, %v1169
          %1171 = vdwg.mxu0
          %1172 = vst [vmem:[#allocation2] sm:$0xff] %v821
          %1173 = vst [vmem:[#allocation2 + $0x8] sm:$0xff] %v823
          %1174 = vst [vmem:[#allocation2 + $0x10] sm:$0xff] %v1014
          %1175 = vst [vmem:[#allocation2 + $0x18] sm:$0xff] %v1016
          %1176 = vst [vmem:[#allocation2 + $0x20] sm:$0xff] %v825
          %1177 = vst [vmem:[#allocation2 + $0x28] sm:$0xff] %v827
          %1178 = vst [vmem:[#allocation2 + $0x30] sm:$0xff] %v1018
          %1179 = vst [vmem:[#allocation2 + $0x38] sm:$0xff] %v1020
          %1180 = vst [vmem:[#allocation2 + $0x40] sm:$0xff] %v831
          %1181 = vst [vmem:[#allocation2 + $0x48] sm:$0xff] %v833
          %1182 = vst [vmem:[#allocation2 + $0x50] sm:$0xff] %v1024
          %1183 = vst [vmem:[#allocation2 + $0x58] sm:$0xff] %v1026
          %1184 = vst [vmem:[#allocation2 + $0x60] sm:$0xff] %v835
          %1185 = vst [vmem:[#allocation2 + $0x68] sm:$0xff] %v837
          %1186 = vst [vmem:[#allocation2 + $0x70] sm:$0xff] %v1028
          %1187 = vst [vmem:[#allocation2 + $0x78] sm:$0xff] %v1030
          %1188 = vst [vmem:[#allocation2 + $0x80] sm:$0xff] %v841
          %1189 = vst [vmem:[#allocation2 + $0x88] sm:$0xff] %v843
          %1190 = vst [vmem:[#allocation2 + $0x90] sm:$0xff] %v1034
          %1191 = vst [vmem:[#allocation2 + $0x98] sm:$0xff] %v1036
          %1192 = vst [vmem:[#allocation2 + $0xa0] sm:$0xff] %v845
          %1193 = vst [vmem:[#allocation2 + $0xa8] sm:$0xff] %v847
          %1194 = vst [vmem:[#allocation2 + $0xb0] sm:$0xff] %v1038
          %1195 = vst [vmem:[#allocation2 + $0xb8] sm:$0xff] %v1040
          %1196 = vst [vmem:[#allocation2 + $0xc0] sm:$0xff] %v851
          %1197 = vst [vmem:[#allocation2 + $0xc8] sm:$0xff] %v853
          %1198 = vst [vmem:[#allocation2 + $0xd0] sm:$0xff] %v1044
          %1199 = vst [vmem:[#allocation2 + $0xd8] sm:$0xff] %v1046
          %1200 = vst [vmem:[#allocation2 + $0xe0] sm:$0xff] %v855
          %1201 = vst [vmem:[#allocation2 + $0xe8] sm:$0xff] %v857
          %1202 = vst [vmem:[#allocation2 + $0xf0] sm:$0xff] %v1048
          %1203 = vst [vmem:[#allocation2 + $0xf8] sm:$0xff] %v1050
          %1204 = vst [vmem:[#allocation2 + $0x100] sm:$0xff] %v861
          %1205 = vst [vmem:[#allocation2 + $0x108] sm:$0xff] %v863
          %1206 = vst [vmem:[#allocation2 + $0x110] sm:$0xff] %v1054
          %1207 = vst [vmem:[#allocation2 + $0x118] sm:$0xff] %v1056
          %1208 = vst [vmem:[#allocation2 + $0x120] sm:$0xff] %v865
          %1209 = vst [vmem:[#allocation2 + $0x128] sm:$0xff] %v867
          %1210 = vst [vmem:[#allocation2 + $0x130] sm:$0xff] %v1058
          %1211 = vst [vmem:[#allocation2 + $0x138] sm:$0xff] %v1060
          %1212 = vst [vmem:[#allocation2 + $0x140] sm:$0xff] %v871
          %1213 = vst [vmem:[#allocation2 + $0x148] sm:$0xff] %v873
          %1214 = vst [vmem:[#allocation2 + $0x150] sm:$0xff] %v1064
          %1215 = vst [vmem:[#allocation2 + $0x158] sm:$0xff] %v1066
          %1216 = vst [vmem:[#allocation2 + $0x160] sm:$0xff] %v875
          %1217 = vst [vmem:[#allocation2 + $0x168] sm:$0xff] %v877
          %1218 = vst [vmem:[#allocation2 + $0x170] sm:$0xff] %v1068
          %1219 = vst [vmem:[#allocation2 + $0x178] sm:$0xff] %v1070
          %1220 = vst [vmem:[#allocation2 + $0x180] sm:$0xff] %v881
          %1221 = vst [vmem:[#allocation2 + $0x188] sm:$0xff] %v883
          %1222 = vst [vmem:[#allocation2 + $0x190] sm:$0xff] %v1074
          %1223 = vst [vmem:[#allocation2 + $0x198] sm:$0xff] %v1076
          %1224 = vst [vmem:[#allocation2 + $0x1a0] sm:$0xff] %v885
          %1225 = vst [vmem:[#allocation2 + $0x1a8] sm:$0xff] %v887
          %1226 = vst [vmem:[#allocation2 + $0x1b0] sm:$0xff] %v1078
          %1227 = vst [vmem:[#allocation2 + $0x1b8] sm:$0xff] %v1080
          %1228 = vst [vmem:[#allocation2 + $0x1c0] sm:$0xff] %v891
          %1229 = vst [vmem:[#allocation2 + $0x1c8] sm:$0xff] %v893
          %1230 = vst [vmem:[#allocation2 + $0x1d0] sm:$0xff] %v1084
          %1231 = vst [vmem:[#allocation2 + $0x1d8] sm:$0xff] %v1086
          %1232 = vst [vmem:[#allocation2 + $0x1e0] sm:$0xff] %v895
          %1233 = vst [vmem:[#allocation2 + $0x1e8] sm:$0xff] %v897
          %1234 = vst [vmem:[#allocation2 + $0x1f0] sm:$0xff] %v1088
          %1235 = vst [vmem:[#allocation2 + $0x1f8] sm:$0xff] %v1090
          %1236 = vst [vmem:[#allocation2 + $0x200] sm:$0xff] %v901
          %1237 = vst [vmem:[#allocation2 + $0x208] sm:$0xff] %v903
          %1238 = vst [vmem:[#allocation2 + $0x210] sm:$0xff] %v1094
          %1239 = vst [vmem:[#allocation2 + $0x218] sm:$0xff] %v1096
          %1240 = vst [vmem:[#allocation2 + $0x220] sm:$0xff] %v905
          %1241 = vst [vmem:[#allocation2 + $0x228] sm:$0xff] %v907
          %1242 = vst [vmem:[#allocation2 + $0x230] sm:$0xff] %v1098
          %1243 = vst [vmem:[#allocation2 + $0x238] sm:$0xff] %v1100
          %1244 = vst [vmem:[#allocation2 + $0x240] sm:$0xff] %v911
          %1245 = vst [vmem:[#allocation2 + $0x248] sm:$0xff] %v913
          %1246 = vst [vmem:[#allocation2 + $0x250] sm:$0xff] %v1104
          %1247 = vst [vmem:[#allocation2 + $0x258] sm:$0xff] %v1106
          %1248 = vst [vmem:[#allocation2 + $0x260] sm:$0xff] %v915
          %1249 = vst [vmem:[#allocation2 + $0x268] sm:$0xff] %v917
          %1250 = vst [vmem:[#allocation2 + $0x270] sm:$0xff] %v1108
          %1251 = vst [vmem:[#allocation2 + $0x278] sm:$0xff] %v1110
          %1252 = vst [vmem:[#allocation2 + $0x280] sm:$0xff] %v921
          %1253 = vst [vmem:[#allocation2 + $0x288] sm:$0xff] %v923
          %1254 = vst [vmem:[#allocation2 + $0x290] sm:$0xff] %v1114
          %1255 = vst [vmem:[#allocation2 + $0x298] sm:$0xff] %v1116
          %1256 = vst [vmem:[#allocation2 + $0x2a0] sm:$0xff] %v925
          %1257 = vst [vmem:[#allocation2 + $0x2a8] sm:$0xff] %v927
          %1258 = vst [vmem:[#allocation2 + $0x2b0] sm:$0xff] %v1118
          %1259 = vst [vmem:[#allocation2 + $0x2b8] sm:$0xff] %v1120
          %1260 = vst [vmem:[#allocation2 + $0x2c0] sm:$0xff] %v931
          %1261 = vst [vmem:[#allocation2 + $0x2c8] sm:$0xff] %v933
          %1262 = vst [vmem:[#allocation2 + $0x2d0] sm:$0xff] %v1124
          %1263 = vst [vmem:[#allocation2 + $0x2d8] sm:$0xff] %v1126
          %1264 = vst [vmem:[#allocation2 + $0x2e0] sm:$0xff] %v935
          %1265 = vst [vmem:[#allocation2 + $0x2e8] sm:$0xff] %v937
          %1266 = vst [vmem:[#allocation2 + $0x2f0] sm:$0xff] %v1128
          %1267 = vst [vmem:[#allocation2 + $0x2f8] sm:$0xff] %v1130
          %1268 = vst [vmem:[#allocation2 + $0x300] sm:$0xff] %v941
          %1269 = vst [vmem:[#allocation2 + $0x308] sm:$0xff] %v943
          %1270 = vst [vmem:[#allocation2 + $0x310] sm:$0xff] %v1134
          %1271 = vst [vmem:[#allocation2 + $0x318] sm:$0xff] %v1136
          %1272 = vst [vmem:[#allocation2 + $0x320] sm:$0xff] %v945
          %1273 = vst [vmem:[#allocation2 + $0x328] sm:$0xff] %v947
          %1274 = vst [vmem:[#allocation2 + $0x330] sm:$0xff] %v1138
          %1275 = vst [vmem:[#allocation2 + $0x338] sm:$0xff] %v1140
          %1276 = vst [vmem:[#allocation2 + $0x340] sm:$0xff] %v951
          %1277 = vst [vmem:[#allocation2 + $0x348] sm:$0xff] %v953
          %1278 = vst [vmem:[#allocation2 + $0x350] sm:$0xff] %v1144
          %1279 = vst [vmem:[#allocation2 + $0x358] sm:$0xff] %v1146
          %1280 = vst [vmem:[#allocation2 + $0x360] sm:$0xff] %v955
          %1281 = vst [vmem:[#allocation2 + $0x368] sm:$0xff] %v957
          %1282 = vst [vmem:[#allocation2 + $0x370] sm:$0xff] %v1148
          %1283 = vst [vmem:[#allocation2 + $0x378] sm:$0xff] %v1150
          %1284 = vst [vmem:[#allocation2 + $0x380] sm:$0xff] %v961
          %1285 = vst [vmem:[#allocation2 + $0x388] sm:$0xff] %v963
          %1286 = vst [vmem:[#allocation2 + $0x390] sm:$0xff] %v1154
          %1287 = vst [vmem:[#allocation2 + $0x398] sm:$0xff] %v1156
          %1288 = vst [vmem:[#allocation2 + $0x3a0] sm:$0xff] %v965
          %1289 = vst [vmem:[#allocation2 + $0x3a8] sm:$0xff] %v967
          %1290 = vst [vmem:[#allocation2 + $0x3b0] sm:$0xff] %v1158
          %1291 = vst [vmem:[#allocation2 + $0x3b8] sm:$0xff] %v1160
          %1292 = vst [vmem:[#allocation2 + $0x3c0] sm:$0xff] %v971
          %1293 = vst [vmem:[#allocation2 + $0x3c8] sm:$0xff] %v973
          %1294 = vst [vmem:[#allocation2 + $0x3d0] sm:$0xff] %v1164
          %1295 = vst [vmem:[#allocation2 + $0x3d8] sm:$0xff] %v1166
          %1296 = vst [vmem:[#allocation2 + $0x3e0] sm:$0xff] %v975
          %1297 = vst [vmem:[#allocation2 + $0x3e8] sm:$0xff] %v977
          %1298 = vst [vmem:[#allocation2 + $0x3f0] sm:$0xff] %v1168
          %1299 = vst [vmem:[#allocation2 + $0x3f8] sm:$0xff] %v1170
        $region84: #{cnnmlp_forward.1} parent=51 // pred_fallthru
          _
        %s1300 = smul.u32 %s28, 2
        %s1301 = sld [smem:[#allocation3 + %s1300]]
        %s1302 = sadd.s32 %s1300, 1
        %s1303 = sld [smem:[#allocation3 + %s1302]]
        %s1304 = smul.u32 %s28, 4
        %s1305 = smul.addr %s1304, 2
        %s1306 = scalar_lea.vmem [#allocation10], %s1305
        %v1307 = vld [vmem:[%s1306] sm:$0xff]
        %v1308 = vld [vmem:[#allocation2] sm:$0xff]
        %v1309 = vld [vmem:[#allocation2 + $0x8] sm:$0xff]
        %v1310 = vld [vmem:[#allocation2 + $0x10] sm:$0xff]
        %v1311 = vld [vmem:[#allocation2 + $0x18] sm:$0xff]
        %v1312 = vld [vmem:[#allocation2 + $0x20] sm:$0xff]
        %v1313 = vld [vmem:[#allocation2 + $0x28] sm:$0xff]
        %v1314 = vld [vmem:[#allocation2 + $0x30] sm:$0xff]
        %v1315 = vld [vmem:[#allocation2 + $0x38] sm:$0xff]
        %v1316 = vld [vmem:[#allocation2 + $0x40] sm:$0xff]
        %v1317 = vld [vmem:[#allocation2 + $0x48] sm:$0xff]
        %v1318 = vld [vmem:[#allocation2 + $0x50] sm:$0xff]
        %v1319 = vld [vmem:[#allocation2 + $0x58] sm:$0xff]
        %v1320 = vld [vmem:[#allocation2 + $0x60] sm:$0xff]
        %v1321 = vld [vmem:[#allocation2 + $0x68] sm:$0xff]
        %v1322 = vld [vmem:[#allocation2 + $0x70] sm:$0xff]
        %v1323 = vld [vmem:[#allocation2 + $0x78] sm:$0xff]
        %v1324 = vld [vmem:[#allocation2 + $0x80] sm:$0xff]
        %v1325 = vld [vmem:[#allocation2 + $0x88] sm:$0xff]
        %v1326 = vld [vmem:[#allocation2 + $0x90] sm:$0xff]
        %v1327 = vld [vmem:[#allocation2 + $0x98] sm:$0xff]
        %v1328 = vld [vmem:[#allocation2 + $0xa0] sm:$0xff]
        %v1329 = vld [vmem:[#allocation2 + $0xa8] sm:$0xff]
        %v1330 = vld [vmem:[#allocation2 + $0xb0] sm:$0xff]
        %v1331 = vld [vmem:[#allocation2 + $0xb8] sm:$0xff]
        %v1332 = vld [vmem:[#allocation2 + $0xc0] sm:$0xff]
        %v1333 = vld [vmem:[#allocation2 + $0xc8] sm:$0xff]
        %v1334 = vld [vmem:[#allocation2 + $0xd0] sm:$0xff]
        %v1335 = vld [vmem:[#allocation2 + $0xd8] sm:$0xff]
        %v1336 = vld [vmem:[#allocation2 + $0xe0] sm:$0xff]
        %v1337 = vld [vmem:[#allocation2 + $0xe8] sm:$0xff]
        %v1338 = vld [vmem:[#allocation2 + $0xf0] sm:$0xff]
        %v1339 = vld [vmem:[#allocation2 + $0xf8] sm:$0xff]
        %v1340 = vld [vmem:[#allocation2 + $0x100] sm:$0xff]
        %v1341 = vld [vmem:[#allocation2 + $0x108] sm:$0xff]
        %v1342 = vld [vmem:[#allocation2 + $0x110] sm:$0xff]
        %v1343 = vld [vmem:[#allocation2 + $0x118] sm:$0xff]
        %v1344 = vld [vmem:[#allocation2 + $0x120] sm:$0xff]
        %v1345 = vld [vmem:[#allocation2 + $0x128] sm:$0xff]
        %v1346 = vld [vmem:[#allocation2 + $0x130] sm:$0xff]
        %v1347 = vld [vmem:[#allocation2 + $0x138] sm:$0xff]
        %v1348 = vld [vmem:[#allocation2 + $0x140] sm:$0xff]
        %v1349 = vld [vmem:[#allocation2 + $0x148] sm:$0xff]
        %v1350 = vld [vmem:[#allocation2 + $0x150] sm:$0xff]
        %v1351 = vld [vmem:[#allocation2 + $0x158] sm:$0xff]
        %v1352 = vld [vmem:[#allocation2 + $0x160] sm:$0xff]
        %v1353 = vld [vmem:[#allocation2 + $0x168] sm:$0xff]
        %v1354 = vld [vmem:[#allocation2 + $0x170] sm:$0xff]
        %v1355 = vld [vmem:[#allocation2 + $0x178] sm:$0xff]
        %v1356 = vld [vmem:[#allocation2 + $0x180] sm:$0xff]
        %v1357 = vld [vmem:[#allocation2 + $0x188] sm:$0xff]
        %v1358 = vld [vmem:[#allocation2 + $0x190] sm:$0xff]
        %v1359 = vld [vmem:[#allocation2 + $0x198] sm:$0xff]
        %v1360 = vld [vmem:[#allocation2 + $0x1a0] sm:$0xff]
        %v1361 = vld [vmem:[#allocation2 + $0x1a8] sm:$0xff]
        %v1362 = vld [vmem:[#allocation2 + $0x1b0] sm:$0xff]
        %v1363 = vld [vmem:[#allocation2 + $0x1b8] sm:$0xff]
        %v1364 = vld [vmem:[#allocation2 + $0x1c0] sm:$0xff]
        %v1365 = vld [vmem:[#allocation2 + $0x1c8] sm:$0xff]
        %v1366 = vld [vmem:[#allocation2 + $0x1d0] sm:$0xff]
        %v1367 = vld [vmem:[#allocation2 + $0x1d8] sm:$0xff]
        %v1368 = vld [vmem:[#allocation2 + $0x1e0] sm:$0xff]
        %v1369 = vld [vmem:[#allocation2 + $0x1e8] sm:$0xff]
        %v1370 = vld [vmem:[#allocation2 + $0x1f0] sm:$0xff]
        %v1371 = vld [vmem:[#allocation2 + $0x1f8] sm:$0xff]
        %v1372 = vld [vmem:[#allocation2 + $0x200] sm:$0xff]
        %v1373 = vld [vmem:[#allocation2 + $0x208] sm:$0xff]
        %v1374 = vld [vmem:[#allocation2 + $0x210] sm:$0xff]
        %v1375 = vld [vmem:[#allocation2 + $0x218] sm:$0xff]
        %v1376 = vld [vmem:[#allocation2 + $0x220] sm:$0xff]
        %v1377 = vld [vmem:[#allocation2 + $0x228] sm:$0xff]
        %v1378 = vld [vmem:[#allocation2 + $0x230] sm:$0xff]
        %v1379 = vld [vmem:[#allocation2 + $0x238] sm:$0xff]
        %v1380 = vld [vmem:[#allocation2 + $0x240] sm:$0xff]
        %v1381 = vld [vmem:[#allocation2 + $0x248] sm:$0xff]
        %v1382 = vld [vmem:[#allocation2 + $0x250] sm:$0xff]
        %v1383 = vld [vmem:[#allocation2 + $0x258] sm:$0xff]
        %v1384 = vld [vmem:[#allocation2 + $0x260] sm:$0xff]
        %v1385 = vld [vmem:[#allocation2 + $0x268] sm:$0xff]
        %v1386 = vld [vmem:[#allocation2 + $0x270] sm:$0xff]
        %v1387 = vld [vmem:[#allocation2 + $0x278] sm:$0xff]
        %v1388 = vld [vmem:[#allocation2 + $0x280] sm:$0xff]
        %v1389 = vld [vmem:[#allocation2 + $0x288] sm:$0xff]
        %v1390 = vld [vmem:[#allocation2 + $0x290] sm:$0xff]
        %v1391 = vld [vmem:[#allocation2 + $0x298] sm:$0xff]
        %v1392 = vld [vmem:[#allocation2 + $0x2a0] sm:$0xff]
        %v1393 = vld [vmem:[#allocation2 + $0x2a8] sm:$0xff]
        %v1394 = vld [vmem:[#allocation2 + $0x2b0] sm:$0xff]
        %v1395 = vld [vmem:[#allocation2 + $0x2b8] sm:$0xff]
        %v1396 = vld [vmem:[#allocation2 + $0x2c0] sm:$0xff]
        %v1397 = vld [vmem:[#allocation2 + $0x2c8] sm:$0xff]
        %v1398 = vld [vmem:[#allocation2 + $0x2d0] sm:$0xff]
        %v1399 = vld [vmem:[#allocation2 + $0x2d8] sm:$0xff]
        %v1400 = vld [vmem:[#allocation2 + $0x2e0] sm:$0xff]
        %v1401 = vld [vmem:[#allocation2 + $0x2e8] sm:$0xff]
        %v1402 = vld [vmem:[#allocation2 + $0x2f0] sm:$0xff]
        %v1403 = vld [vmem:[#allocation2 + $0x2f8] sm:$0xff]
        %v1404 = vld [vmem:[#allocation2 + $0x300] sm:$0xff]
        %v1405 = vld [vmem:[#allocation2 + $0x308] sm:$0xff]
        %v1406 = vld [vmem:[#allocation2 + $0x310] sm:$0xff]
        %v1407 = vld [vmem:[#allocation2 + $0x318] sm:$0xff]
        %v1408 = vld [vmem:[#allocation2 + $0x320] sm:$0xff]
        %v1409 = vld [vmem:[#allocation2 + $0x328] sm:$0xff]
        %v1410 = vld [vmem:[#allocation2 + $0x330] sm:$0xff]
        %v1411 = vld [vmem:[#allocation2 + $0x338] sm:$0xff]
        %v1412 = vld [vmem:[#allocation2 + $0x340] sm:$0xff]
        %v1413 = vld [vmem:[#allocation2 + $0x348] sm:$0xff]
        %v1414 = vld [vmem:[#allocation2 + $0x350] sm:$0xff]
        %v1415 = vld [vmem:[#allocation2 + $0x358] sm:$0xff]
        %v1416 = vld [vmem:[#allocation2 + $0x360] sm:$0xff]
        %v1417 = vld [vmem:[#allocation2 + $0x368] sm:$0xff]
        %v1418 = vld [vmem:[#allocation2 + $0x370] sm:$0xff]
        %v1419 = vld [vmem:[#allocation2 + $0x378] sm:$0xff]
        %v1420 = vld [vmem:[#allocation2 + $0x380] sm:$0xff]
        %v1421 = vld [vmem:[#allocation2 + $0x388] sm:$0xff]
        %v1422 = vld [vmem:[#allocation2 + $0x390] sm:$0xff]
        %v1423 = vld [vmem:[#allocation2 + $0x398] sm:$0xff]
        %v1424 = vld [vmem:[#allocation2 + $0x3a0] sm:$0xff]
        %v1425 = vld [vmem:[#allocation2 + $0x3a8] sm:$0xff]
        %v1426 = vld [vmem:[#allocation2 + $0x3b0] sm:$0xff]
        %v1427 = vld [vmem:[#allocation2 + $0x3b8] sm:$0xff]
        %v1428 = vld [vmem:[#allocation2 + $0x3c0] sm:$0xff]
        %v1429 = vld [vmem:[#allocation2 + $0x3c8] sm:$0xff]
        %v1430 = vld [vmem:[#allocation2 + $0x3d0] sm:$0xff]
        %v1431 = vld [vmem:[#allocation2 + $0x3d8] sm:$0xff]
        %v1432 = vld [vmem:[#allocation2 + $0x3e0] sm:$0xff]
        %v1433 = vld [vmem:[#allocation2 + $0x3e8] sm:$0xff]
        %v1434 = vld [vmem:[#allocation2 + $0x3f0] sm:$0xff]
        %v1435 = vld [vmem:[#allocation2 + $0x3f8] sm:$0xff]
        %v1436 = vstv %s1301
        %v1437 = vmul.f32 %v1308, %v1436
        %v1438 = vmul.f32 %v1309, %v1436
        %v1439 = vmul.f32 %v1310, %v1436
        %v1440 = vmul.f32 %v1311, %v1436
        %v1441 = vmul.f32 %v1312, %v1436
        %v1442 = vmul.f32 %v1313, %v1436
        %v1443 = vmul.f32 %v1314, %v1436
        %v1444 = vmul.f32 %v1315, %v1436
        %v1445 = vmul.f32 %v1316, %v1436
        %v1446 = vmul.f32 %v1317, %v1436
        %v1447 = vmul.f32 %v1318, %v1436
        %v1448 = vmul.f32 %v1319, %v1436
        %v1449 = vmul.f32 %v1320, %v1436
        %v1450 = vmul.f32 %v1321, %v1436
        %v1451 = vmul.f32 %v1322, %v1436
        %v1452 = vmul.f32 %v1323, %v1436
        %v1453 = vmul.f32 %v1324, %v1436
        %v1454 = vmul.f32 %v1325, %v1436
        %v1455 = vmul.f32 %v1326, %v1436
        %v1456 = vmul.f32 %v1327, %v1436
        %v1457 = vmul.f32 %v1328, %v1436
        %v1458 = vmul.f32 %v1329, %v1436
        %v1459 = vmul.f32 %v1330, %v1436
        %v1460 = vmul.f32 %v1331, %v1436
        %v1461 = vmul.f32 %v1332, %v1436
        %v1462 = vmul.f32 %v1333, %v1436
        %v1463 = vmul.f32 %v1334, %v1436
        %v1464 = vmul.f32 %v1335, %v1436
        %v1465 = vmul.f32 %v1336, %v1436
        %v1466 = vmul.f32 %v1337, %v1436
        %v1467 = vmul.f32 %v1338, %v1436
        %v1468 = vmul.f32 %v1339, %v1436
        %v1469 = vmul.f32 %v1340, %v1436
        %v1470 = vmul.f32 %v1341, %v1436
        %v1471 = vmul.f32 %v1342, %v1436
        %v1472 = vmul.f32 %v1343, %v1436
        %v1473 = vmul.f32 %v1344, %v1436
        %v1474 = vmul.f32 %v1345, %v1436
        %v1475 = vmul.f32 %v1346, %v1436
        %v1476 = vmul.f32 %v1347, %v1436
        %v1477 = vmul.f32 %v1348, %v1436
        %v1478 = vmul.f32 %v1349, %v1436
        %v1479 = vmul.f32 %v1350, %v1436
        %v1480 = vmul.f32 %v1351, %v1436
        %v1481 = vmul.f32 %v1352, %v1436
        %v1482 = vmul.f32 %v1353, %v1436
        %v1483 = vmul.f32 %v1354, %v1436
        %v1484 = vmul.f32 %v1355, %v1436
        %v1485 = vmul.f32 %v1356, %v1436
        %v1486 = vmul.f32 %v1357, %v1436
        %v1487 = vmul.f32 %v1358, %v1436
        %v1488 = vmul.f32 %v1359, %v1436
        %v1489 = vmul.f32 %v1360, %v1436
        %v1490 = vmul.f32 %v1361, %v1436
        %v1491 = vmul.f32 %v1362, %v1436
        %v1492 = vmul.f32 %v1363, %v1436
        %v1493 = vmul.f32 %v1364, %v1436
        %v1494 = vmul.f32 %v1365, %v1436
        %v1495 = vmul.f32 %v1366, %v1436
        %v1496 = vmul.f32 %v1367, %v1436
        %v1497 = vmul.f32 %v1368, %v1436
        %v1498 = vmul.f32 %v1369, %v1436
        %v1499 = vmul.f32 %v1370, %v1436
        %v1500 = vmul.f32 %v1371, %v1436
        %v1501 = vmul.f32 %v1372, %v1436
        %v1502 = vmul.f32 %v1373, %v1436
        %v1503 = vmul.f32 %v1374, %v1436
        %v1504 = vmul.f32 %v1375, %v1436
        %v1505 = vmul.f32 %v1376, %v1436
        %v1506 = vmul.f32 %v1377, %v1436
        %v1507 = vmul.f32 %v1378, %v1436
        %v1508 = vmul.f32 %v1379, %v1436
        %v1509 = vmul.f32 %v1380, %v1436
        %v1510 = vmul.f32 %v1381, %v1436
        %v1511 = vmul.f32 %v1382, %v1436
        %v1512 = vmul.f32 %v1383, %v1436
        %v1513 = vmul.f32 %v1384, %v1436
        %v1514 = vmul.f32 %v1385, %v1436
        %v1515 = vmul.f32 %v1386, %v1436
        %v1516 = vmul.f32 %v1387, %v1436
        %v1517 = vmul.f32 %v1388, %v1436
        %v1518 = vmul.f32 %v1389, %v1436
        %v1519 = vmul.f32 %v1390, %v1436
        %v1520 = vmul.f32 %v1391, %v1436
        %v1521 = vmul.f32 %v1392, %v1436
        %v1522 = vmul.f32 %v1393, %v1436
        %v1523 = vmul.f32 %v1394, %v1436
        %v1524 = vmul.f32 %v1395, %v1436
        %v1525 = vmul.f32 %v1396, %v1436
        %v1526 = vmul.f32 %v1397, %v1436
        %v1527 = vmul.f32 %v1398, %v1436
        %v1528 = vmul.f32 %v1399, %v1436
        %v1529 = vmul.f32 %v1400, %v1436
        %v1530 = vmul.f32 %v1401, %v1436
        %v1531 = vmul.f32 %v1402, %v1436
        %v1532 = vmul.f32 %v1403, %v1436
        %v1533 = vmul.f32 %v1404, %v1436
        %v1534 = vmul.f32 %v1405, %v1436
        %v1535 = vmul.f32 %v1406, %v1436
        %v1536 = vmul.f32 %v1407, %v1436
        %v1537 = vmul.f32 %v1408, %v1436
        %v1538 = vmul.f32 %v1409, %v1436
        %v1539 = vmul.f32 %v1410, %v1436
        %v1540 = vmul.f32 %v1411, %v1436
        %v1541 = vmul.f32 %v1412, %v1436
        %v1542 = vmul.f32 %v1413, %v1436
        %v1543 = vmul.f32 %v1414, %v1436
        %v1544 = vmul.f32 %v1415, %v1436
        %v1545 = vmul.f32 %v1416, %v1436
        %v1546 = vmul.f32 %v1417, %v1436
        %v1547 = vmul.f32 %v1418, %v1436
        %v1548 = vmul.f32 %v1419, %v1436
        %v1549 = vmul.f32 %v1420, %v1436
        %v1550 = vmul.f32 %v1421, %v1436
        %v1551 = vmul.f32 %v1422, %v1436
        %v1552 = vmul.f32 %v1423, %v1436
        %v1553 = vmul.f32 %v1424, %v1436
        %v1554 = vmul.f32 %v1425, %v1436
        %v1555 = vmul.f32 %v1426, %v1436
        %v1556 = vmul.f32 %v1427, %v1436
        %v1557 = vmul.f32 %v1428, %v1436
        %v1558 = vmul.f32 %v1429, %v1436
        %v1559 = vmul.f32 %v1430, %v1436
        %v1560 = vmul.f32 %v1431, %v1436
        %v1561 = vmul.f32 %v1432, %v1436
        %v1562 = vmul.f32 %v1433, %v1436
        %v1563 = vmul.f32 %v1434, %v1436
        %v1564 = vmul.f32 %v1435, %v1436
        %v1565 = vstv %s1303
        %v1566 = vadd.f32 %v1437, %v1565
        %v1567 = vadd.f32 %v1438, %v1565
        %v1568 = vadd.f32 %v1439, %v1565
        %v1569 = vadd.f32 %v1440, %v1565
        %v1570 = vadd.f32 %v1441, %v1565
        %v1571 = vadd.f32 %v1442, %v1565
        %v1572 = vadd.f32 %v1443, %v1565
        %v1573 = vadd.f32 %v1444, %v1565
        %v1574 = vadd.f32 %v1445, %v1565
        %v1575 = vadd.f32 %v1446, %v1565
        %v1576 = vadd.f32 %v1447, %v1565
        %v1577 = vadd.f32 %v1448, %v1565
        %v1578 = vadd.f32 %v1449, %v1565
        %v1579 = vadd.f32 %v1450, %v1565
        %v1580 = vadd.f32 %v1451, %v1565
        %v1581 = vadd.f32 %v1452, %v1565
        %v1582 = vadd.f32 %v1453, %v1565
        %v1583 = vadd.f32 %v1454, %v1565
        %v1584 = vadd.f32 %v1455, %v1565
        %v1585 = vadd.f32 %v1456, %v1565
        %v1586 = vadd.f32 %v1457, %v1565
        %v1587 = vadd.f32 %v1458, %v1565
        %v1588 = vadd.f32 %v1459, %v1565
        %v1589 = vadd.f32 %v1460, %v1565
        %v1590 = vadd.f32 %v1461, %v1565
        %v1591 = vadd.f32 %v1462, %v1565
        %v1592 = vadd.f32 %v1463, %v1565
        %v1593 = vadd.f32 %v1464, %v1565
        %v1594 = vadd.f32 %v1465, %v1565
        %v1595 = vadd.f32 %v1466, %v1565
        %v1596 = vadd.f32 %v1467, %v1565
        %v1597 = vadd.f32 %v1468, %v1565
        %v1598 = vadd.f32 %v1469, %v1565
        %v1599 = vadd.f32 %v1470, %v1565
        %v1600 = vadd.f32 %v1471, %v1565
        %v1601 = vadd.f32 %v1472, %v1565
        %v1602 = vadd.f32 %v1473, %v1565
        %v1603 = vadd.f32 %v1474, %v1565
        %v1604 = vadd.f32 %v1475, %v1565
        %v1605 = vadd.f32 %v1476, %v1565
        %v1606 = vadd.f32 %v1477, %v1565
        %v1607 = vadd.f32 %v1478, %v1565
        %v1608 = vadd.f32 %v1479, %v1565
        %v1609 = vadd.f32 %v1480, %v1565
        %v1610 = vadd.f32 %v1481, %v1565
        %v1611 = vadd.f32 %v1482, %v1565
        %v1612 = vadd.f32 %v1483, %v1565
        %v1613 = vadd.f32 %v1484, %v1565
        %v1614 = vadd.f32 %v1485, %v1565
        %v1615 = vadd.f32 %v1486, %v1565
        %v1616 = vadd.f32 %v1487, %v1565
        %v1617 = vadd.f32 %v1488, %v1565
        %v1618 = vadd.f32 %v1489, %v1565
        %v1619 = vadd.f32 %v1490, %v1565
        %v1620 = vadd.f32 %v1491, %v1565
        %v1621 = vadd.f32 %v1492, %v1565
        %v1622 = vadd.f32 %v1493, %v1565
        %v1623 = vadd.f32 %v1494, %v1565
        %v1624 = vadd.f32 %v1495, %v1565
        %v1625 = vadd.f32 %v1496, %v1565
        %v1626 = vadd.f32 %v1497, %v1565
        %v1627 = vadd.f32 %v1498, %v1565
        %v1628 = vadd.f32 %v1499, %v1565
        %v1629 = vadd.f32 %v1500, %v1565
        %v1630 = vadd.f32 %v1501, %v1565
        %v1631 = vadd.f32 %v1502, %v1565
        %v1632 = vadd.f32 %v1503, %v1565
        %v1633 = vadd.f32 %v1504, %v1565
        %v1634 = vadd.f32 %v1505, %v1565
        %v1635 = vadd.f32 %v1506, %v1565
        %v1636 = vadd.f32 %v1507, %v1565
        %v1637 = vadd.f32 %v1508, %v1565
        %v1638 = vadd.f32 %v1509, %v1565
        %v1639 = vadd.f32 %v1510, %v1565
        %v1640 = vadd.f32 %v1511, %v1565
        %v1641 = vadd.f32 %v1512, %v1565
        %v1642 = vadd.f32 %v1513, %v1565
        %v1643 = vadd.f32 %v1514, %v1565
        %v1644 = vadd.f32 %v1515, %v1565
        %v1645 = vadd.f32 %v1516, %v1565
        %v1646 = vadd.f32 %v1517, %v1565
        %v1647 = vadd.f32 %v1518, %v1565
        %v1648 = vadd.f32 %v1519, %v1565
        %v1649 = vadd.f32 %v1520, %v1565
        %v1650 = vadd.f32 %v1521, %v1565
        %v1651 = vadd.f32 %v1522, %v1565
        %v1652 = vadd.f32 %v1523, %v1565
        %v1653 = vadd.f32 %v1524, %v1565
        %v1654 = vadd.f32 %v1525, %v1565
        %v1655 = vadd.f32 %v1526, %v1565
        %v1656 = vadd.f32 %v1527, %v1565
        %v1657 = vadd.f32 %v1528, %v1565
        %v1658 = vadd.f32 %v1529, %v1565
        %v1659 = vadd.f32 %v1530, %v1565
        %v1660 = vadd.f32 %v1531, %v1565
        %v1661 = vadd.f32 %v1532, %v1565
        %v1662 = vadd.f32 %v1533, %v1565
        %v1663 = vadd.f32 %v1534, %v1565
        %v1664 = vadd.f32 %v1535, %v1565
        %v1665 = vadd.f32 %v1536, %v1565
        %v1666 = vadd.f32 %v1537, %v1565
        %v1667 = vadd.f32 %v1538, %v1565
        %v1668 = vadd.f32 %v1539, %v1565
        %v1669 = vadd.f32 %v1540, %v1565
        %v1670 = vadd.f32 %v1541, %v1565
        %v1671 = vadd.f32 %v1542, %v1565
        %v1672 = vadd.f32 %v1543, %v1565
        %v1673 = vadd.f32 %v1544, %v1565
        %v1674 = vadd.f32 %v1545, %v1565
        %v1675 = vadd.f32 %v1546, %v1565
        %v1676 = vadd.f32 %v1547, %v1565
        %v1677 = vadd.f32 %v1548, %v1565
        %v1678 = vadd.f32 %v1549, %v1565
        %v1679 = vadd.f32 %v1550, %v1565
        %v1680 = vadd.f32 %v1551, %v1565
        %v1681 = vadd.f32 %v1552, %v1565
        %v1682 = vadd.f32 %v1553, %v1565
        %v1683 = vadd.f32 %v1554, %v1565
        %v1684 = vadd.f32 %v1555, %v1565
        %v1685 = vadd.f32 %v1556, %v1565
        %v1686 = vadd.f32 %v1557, %v1565
        %v1687 = vadd.f32 %v1558, %v1565
        %v1688 = vadd.f32 %v1559, %v1565
        %v1689 = vadd.f32 %v1560, %v1565
        %v1690 = vadd.f32 %v1561, %v1565
        %v1691 = vadd.f32 %v1562, %v1565
        %v1692 = vadd.f32 %v1563, %v1565
        %v1693 = vadd.f32 %v1564, %v1565
        %v1694 = vpack.c.bf16 %v1570, %v1566
        %v1695 = vpack.c.bf16 %v1571, %v1567
        %v1696 = vpack.c.bf16 %v1572, %v1568
        %v1697 = vpack.c.bf16 %v1573, %v1569
        %v1698 = vpack.c.bf16 %v1578, %v1574
        %v1699 = vpack.c.bf16 %v1579, %v1575
        %v1700 = vpack.c.bf16 %v1580, %v1576
        %v1701 = vpack.c.bf16 %v1581, %v1577
        %v1702 = vpack.c.bf16 %v1586, %v1582
        %v1703 = vpack.c.bf16 %v1587, %v1583
        %v1704 = vpack.c.bf16 %v1588, %v1584
        %v1705 = vpack.c.bf16 %v1589, %v1585
        %v1706 = vpack.c.bf16 %v1594, %v1590
        %v1707 = vpack.c.bf16 %v1595, %v1591
        %v1708 = vpack.c.bf16 %v1596, %v1592
        %v1709 = vpack.c.bf16 %v1597, %v1593
        %v1710 = vpack.c.bf16 %v1602, %v1598
        %v1711 = vpack.c.bf16 %v1603, %v1599
        %v1712 = vpack.c.bf16 %v1604, %v1600
        %v1713 = vpack.c.bf16 %v1605, %v1601
        %v1714 = vpack.c.bf16 %v1610, %v1606
        %v1715 = vpack.c.bf16 %v1611, %v1607
        %v1716 = vpack.c.bf16 %v1612, %v1608
        %v1717 = vpack.c.bf16 %v1613, %v1609
        %v1718 = vpack.c.bf16 %v1618, %v1614
        %v1719 = vpack.c.bf16 %v1619, %v1615
        %v1720 = vpack.c.bf16 %v1620, %v1616
        %v1721 = vpack.c.bf16 %v1621, %v1617
        %v1722 = vpack.c.bf16 %v1626, %v1622
        %v1723 = vpack.c.bf16 %v1627, %v1623
        %v1724 = vpack.c.bf16 %v1628, %v1624
        %v1725 = vpack.c.bf16 %v1629, %v1625
        %v1726 = vpack.c.bf16 %v1634, %v1630
        %v1727 = vpack.c.bf16 %v1635, %v1631
        %v1728 = vpack.c.bf16 %v1636, %v1632
        %v1729 = vpack.c.bf16 %v1637, %v1633
        %v1730 = vpack.c.bf16 %v1642, %v1638
        %v1731 = vpack.c.bf16 %v1643, %v1639
        %v1732 = vpack.c.bf16 %v1644, %v1640
        %v1733 = vpack.c.bf16 %v1645, %v1641
        %v1734 = vpack.c.bf16 %v1650, %v1646
        %v1735 = vpack.c.bf16 %v1651, %v1647
        %v1736 = vpack.c.bf16 %v1652, %v1648
        %v1737 = vpack.c.bf16 %v1653, %v1649
        %v1738 = vpack.c.bf16 %v1658, %v1654
        %v1739 = vpack.c.bf16 %v1659, %v1655
        %v1740 = vpack.c.bf16 %v1660, %v1656
        %v1741 = vpack.c.bf16 %v1661, %v1657
        %v1742 = vpack.c.bf16 %v1666, %v1662
        %v1743 = vpack.c.bf16 %v1667, %v1663
        %v1744 = vpack.c.bf16 %v1668, %v1664
        %v1745 = vpack.c.bf16 %v1669, %v1665
        %v1746 = vpack.c.bf16 %v1674, %v1670
        %v1747 = vpack.c.bf16 %v1675, %v1671
        %v1748 = vpack.c.bf16 %v1676, %v1672
        %v1749 = vpack.c.bf16 %v1677, %v1673
        %v1750 = vpack.c.bf16 %v1682, %v1678
        %v1751 = vpack.c.bf16 %v1683, %v1679
        %v1752 = vpack.c.bf16 %v1684, %v1680
        %v1753 = vpack.c.bf16 %v1685, %v1681
        %v1754 = vpack.c.bf16 %v1690, %v1686
        %v1755 = vpack.c.bf16 %v1691, %v1687
        %v1756 = vpack.c.bf16 %v1692, %v1688
        %v1757 = vpack.c.bf16 %v1693, %v1689
        %v1758 = vtanh.bf16.pop %v1694
        %v1759 = vtanh.bf16.pop %v1695
        %v1760 = vtanh.bf16.pop %v1696
        %v1761 = vtanh.bf16.pop %v1697
        %v1762 = vtanh.bf16.pop %v1698
        %v1763 = vtanh.bf16.pop %v1699
        %v1764 = vtanh.bf16.pop %v1700
        %v1765 = vtanh.bf16.pop %v1701
        %v1766 = vtanh.bf16.pop %v1702
        %v1767 = vtanh.bf16.pop %v1703
        %v1768 = vtanh.bf16.pop %v1704
        %v1769 = vtanh.bf16.pop %v1705
        %v1770 = vtanh.bf16.pop %v1706
        %v1771 = vtanh.bf16.pop %v1707
        %v1772 = vtanh.bf16.pop %v1708
        %v1773 = vtanh.bf16.pop %v1709
        %v1774 = vtanh.bf16.pop %v1710
        %v1775 = vtanh.bf16.pop %v1711
        %v1776 = vtanh.bf16.pop %v1712
        %v1777 = vtanh.bf16.pop %v1713
        %v1778 = vtanh.bf16.pop %v1714
        %v1779 = vtanh.bf16.pop %v1715
        %v1780 = vtanh.bf16.pop %v1716
        %v1781 = vtanh.bf16.pop %v1717
        %v1782 = vtanh.bf16.pop %v1718
        %v1783 = vtanh.bf16.pop %v1719
        %v1784 = vtanh.bf16.pop %v1720
        %v1785 = vtanh.bf16.pop %v1721
        %v1786 = vtanh.bf16.pop %v1722
        %v1787 = vtanh.bf16.pop %v1723
        %v1788 = vtanh.bf16.pop %v1724
        %v1789 = vtanh.bf16.pop %v1725
        %v1790 = vtanh.bf16.pop %v1726
        %v1791 = vtanh.bf16.pop %v1727
        %v1792 = vtanh.bf16.pop %v1728
        %v1793 = vtanh.bf16.pop %v1729
        %v1794 = vtanh.bf16.pop %v1730
        %v1795 = vtanh.bf16.pop %v1731
        %v1796 = vtanh.bf16.pop %v1732
        %v1797 = vtanh.bf16.pop %v1733
        %v1798 = vtanh.bf16.pop %v1734
        %v1799 = vtanh.bf16.pop %v1735
        %v1800 = vtanh.bf16.pop %v1736
        %v1801 = vtanh.bf16.pop %v1737
        %v1802 = vtanh.bf16.pop %v1738
        %v1803 = vtanh.bf16.pop %v1739
        %v1804 = vtanh.bf16.pop %v1740
        %v1805 = vtanh.bf16.pop %v1741
        %v1806 = vtanh.bf16.pop %v1742
        %v1807 = vtanh.bf16.pop %v1743
        %v1808 = vtanh.bf16.pop %v1744
        %v1809 = vtanh.bf16.pop %v1745
        %v1810 = vtanh.bf16.pop %v1746
        %v1811 = vtanh.bf16.pop %v1747
        %v1812 = vtanh.bf16.pop %v1748
        %v1813 = vtanh.bf16.pop %v1749
        %v1814 = vtanh.bf16.pop %v1750
        %v1815 = vtanh.bf16.pop %v1751
        %v1816 = vtanh.bf16.pop %v1752
        %v1817 = vtanh.bf16.pop %v1753
        %v1818 = vtanh.bf16.pop %v1754
        %v1819 = vtanh.bf16.pop %v1755
        %v1820 = vtanh.bf16.pop %v1756
        %v1821 = vtanh.bf16.pop %v1757
        %v1822 = vld [vmem:[%s376] sm:$0xff]
        %v1823 = vld [vmem:[%s376 + $0x8] sm:$0xff]
        %v1824 = vld [vmem:[%s376 + $0x10] sm:$0xff]
        %v1825 = vld [vmem:[%s376 + $0x18] sm:$0xff]
        %v1826 = vld [vmem:[%s376 + $0x20] sm:$0xff]
        %v1827 = vld [vmem:[%s376 + $0x28] sm:$0xff]
        %v1828 = vld [vmem:[%s376 + $0x30] sm:$0xff]
        %v1829 = vld [vmem:[%s376 + $0x38] sm:$0xff]
        %v1830 = vld [vmem:[%s376 + $0x40] sm:$0xff]
        %v1831 = vld [vmem:[%s376 + $0x48] sm:$0xff]
        %v1832 = vld [vmem:[%s376 + $0x50] sm:$0xff]
        %v1833 = vld [vmem:[%s376 + $0x58] sm:$0xff]
        %v1834 = vld [vmem:[%s376 + $0x60] sm:$0xff]
        %v1835 = vld [vmem:[%s376 + $0x68] sm:$0xff]
        %v1836 = vld [vmem:[%s376 + $0x70] sm:$0xff]
        %v1837 = vld [vmem:[%s376 + $0x78] sm:$0xff]
        %v1838 = vld [vmem:[%s376 + $0x80] sm:$0xff]
        %v1839 = vld [vmem:[%s376 + $0x88] sm:$0xff]
        %v1840 = vld [vmem:[%s376 + $0x90] sm:$0xff]
        %v1841 = vld [vmem:[%s376 + $0x98] sm:$0xff]
        %v1842 = vld [vmem:[%s376 + $0xa0] sm:$0xff]
        %v1843 = vld [vmem:[%s376 + $0xa8] sm:$0xff]
        %v1844 = vld [vmem:[%s376 + $0xb0] sm:$0xff]
        %v1845 = vld [vmem:[%s376 + $0xb8] sm:$0xff]
        %v1846 = vld [vmem:[%s376 + $0xc0] sm:$0xff]
        %v1847 = vld [vmem:[%s376 + $0xc8] sm:$0xff]
        %v1848 = vld [vmem:[%s376 + $0xd0] sm:$0xff]
        %v1849 = vld [vmem:[%s376 + $0xd8] sm:$0xff]
        %v1850 = vld [vmem:[%s376 + $0xe0] sm:$0xff]
        %v1851 = vld [vmem:[%s376 + $0xe8] sm:$0xff]
        %v1852 = vld [vmem:[%s376 + $0xf0] sm:$0xff]
        %v1853 = vld [vmem:[%s376 + $0xf8] sm:$0xff]
        %v1854 = vld [vmem:[%s376 + $0x100] sm:$0xff]
        %v1855 = vld [vmem:[%s376 + $0x108] sm:$0xff]
        %v1856 = vld [vmem:[%s376 + $0x110] sm:$0xff]
        %v1857 = vld [vmem:[%s376 + $0x118] sm:$0xff]
        %v1858 = vld [vmem:[%s376 + $0x120] sm:$0xff]
        %v1859 = vld [vmem:[%s376 + $0x128] sm:$0xff]
        %v1860 = vld [vmem:[%s376 + $0x130] sm:$0xff]
        %v1861 = vld [vmem:[%s376 + $0x138] sm:$0xff]
        %v1862 = vld [vmem:[%s376 + $0x140] sm:$0xff]
        %v1863 = vld [vmem:[%s376 + $0x148] sm:$0xff]
        %v1864 = vld [vmem:[%s376 + $0x150] sm:$0xff]
        %v1865 = vld [vmem:[%s376 + $0x158] sm:$0xff]
        %v1866 = vld [vmem:[%s376 + $0x160] sm:$0xff]
        %v1867 = vld [vmem:[%s376 + $0x168] sm:$0xff]
        %v1868 = vld [vmem:[%s376 + $0x170] sm:$0xff]
        %v1869 = vld [vmem:[%s376 + $0x178] sm:$0xff]
        %v1870 = vld [vmem:[%s376 + $0x180] sm:$0xff]
        %v1871 = vld [vmem:[%s376 + $0x188] sm:$0xff]
        %v1872 = vld [vmem:[%s376 + $0x190] sm:$0xff]
        %v1873 = vld [vmem:[%s376 + $0x198] sm:$0xff]
        %v1874 = vld [vmem:[%s376 + $0x1a0] sm:$0xff]
        %v1875 = vld [vmem:[%s376 + $0x1a8] sm:$0xff]
        %v1876 = vld [vmem:[%s376 + $0x1b0] sm:$0xff]
        %v1877 = vld [vmem:[%s376 + $0x1b8] sm:$0xff]
        %v1878 = vld [vmem:[%s376 + $0x1c0] sm:$0xff]
        %v1879 = vld [vmem:[%s376 + $0x1c8] sm:$0xff]
        %v1880 = vld [vmem:[%s376 + $0x1d0] sm:$0xff]
        %v1881 = vld [vmem:[%s376 + $0x1d8] sm:$0xff]
        %v1882 = vld [vmem:[%s376 + $0x1e0] sm:$0xff]
        %v1883 = vld [vmem:[%s376 + $0x1e8] sm:$0xff]
        %v1884 = vld [vmem:[%s376 + $0x1f0] sm:$0xff]
        %v1885 = vld [vmem:[%s376 + $0x1f8] sm:$0xff]
        %v1886 = vld [vmem:[%s376 + $0x200] sm:$0xff]
        %v1887 = vld [vmem:[%s376 + $0x208] sm:$0xff]
        %v1888 = vld [vmem:[%s376 + $0x210] sm:$0xff]
        %v1889 = vld [vmem:[%s376 + $0x218] sm:$0xff]
        %v1890 = vld [vmem:[%s376 + $0x220] sm:$0xff]
        %v1891 = vld [vmem:[%s376 + $0x228] sm:$0xff]
        %v1892 = vld [vmem:[%s376 + $0x230] sm:$0xff]
        %v1893 = vld [vmem:[%s376 + $0x238] sm:$0xff]
        %v1894 = vld [vmem:[%s376 + $0x240] sm:$0xff]
        %v1895 = vld [vmem:[%s376 + $0x248] sm:$0xff]
        %v1896 = vld [vmem:[%s376 + $0x250] sm:$0xff]
        %v1897 = vld [vmem:[%s376 + $0x258] sm:$0xff]
        %v1898 = vld [vmem:[%s376 + $0x260] sm:$0xff]
        %v1899 = vld [vmem:[%s376 + $0x268] sm:$0xff]
        %v1900 = vld [vmem:[%s376 + $0x270] sm:$0xff]
        %v1901 = vld [vmem:[%s376 + $0x278] sm:$0xff]
        %v1902 = vld [vmem:[%s376 + $0x280] sm:$0xff]
        %v1903 = vld [vmem:[%s376 + $0x288] sm:$0xff]
        %v1904 = vld [vmem:[%s376 + $0x290] sm:$0xff]
        %v1905 = vld [vmem:[%s376 + $0x298] sm:$0xff]
        %v1906 = vld [vmem:[%s376 + $0x2a0] sm:$0xff]
        %v1907 = vld [vmem:[%s376 + $0x2a8] sm:$0xff]
        %v1908 = vld [vmem:[%s376 + $0x2b0] sm:$0xff]
        %v1909 = vld [vmem:[%s376 + $0x2b8] sm:$0xff]
        %v1910 = vld [vmem:[%s376 + $0x2c0] sm:$0xff]
        %v1911 = vld [vmem:[%s376 + $0x2c8] sm:$0xff]
        %v1912 = vld [vmem:[%s376 + $0x2d0] sm:$0xff]
        %v1913 = vld [vmem:[%s376 + $0x2d8] sm:$0xff]
        %v1914 = vld [vmem:[%s376 + $0x2e0] sm:$0xff]
        %v1915 = vld [vmem:[%s376 + $0x2e8] sm:$0xff]
        %v1916 = vld [vmem:[%s376 + $0x2f0] sm:$0xff]
        %v1917 = vld [vmem:[%s376 + $0x2f8] sm:$0xff]
        %v1918 = vld [vmem:[%s376 + $0x300] sm:$0xff]
        %v1919 = vld [vmem:[%s376 + $0x308] sm:$0xff]
        %v1920 = vld [vmem:[%s376 + $0x310] sm:$0xff]
        %v1921 = vld [vmem:[%s376 + $0x318] sm:$0xff]
        %v1922 = vld [vmem:[%s376 + $0x320] sm:$0xff]
        %v1923 = vld [vmem:[%s376 + $0x328] sm:$0xff]
        %v1924 = vld [vmem:[%s376 + $0x330] sm:$0xff]
        %v1925 = vld [vmem:[%s376 + $0x338] sm:$0xff]
        %v1926 = vld [vmem:[%s376 + $0x340] sm:$0xff]
        %v1927 = vld [vmem:[%s376 + $0x348] sm:$0xff]
        %v1928 = vld [vmem:[%s376 + $0x350] sm:$0xff]
        %v1929 = vld [vmem:[%s376 + $0x358] sm:$0xff]
        %v1930 = vld [vmem:[%s376 + $0x360] sm:$0xff]
        %v1931 = vld [vmem:[%s376 + $0x368] sm:$0xff]
        %v1932 = vld [vmem:[%s376 + $0x370] sm:$0xff]
        %v1933 = vld [vmem:[%s376 + $0x378] sm:$0xff]
        %v1934 = vld [vmem:[%s376 + $0x380] sm:$0xff]
        %v1935 = vld [vmem:[%s376 + $0x388] sm:$0xff]
        %v1936 = vld [vmem:[%s376 + $0x390] sm:$0xff]
        %v1937 = vld [vmem:[%s376 + $0x398] sm:$0xff]
        %v1938 = vld [vmem:[%s376 + $0x3a0] sm:$0xff]
        %v1939 = vld [vmem:[%s376 + $0x3a8] sm:$0xff]
        %v1940 = vld [vmem:[%s376 + $0x3b0] sm:$0xff]
        %v1941 = vld [vmem:[%s376 + $0x3b8] sm:$0xff]
        %v1942 = vld [vmem:[%s376 + $0x3c0] sm:$0xff]
        %v1943 = vld [vmem:[%s376 + $0x3c8] sm:$0xff]
        %v1944 = vld [vmem:[%s376 + $0x3d0] sm:$0xff]
        %v1945 = vld [vmem:[%s376 + $0x3d8] sm:$0xff]
        %v1946 = vld [vmem:[%s376 + $0x3e0] sm:$0xff]
        %v1947 = vld [vmem:[%s376 + $0x3e8] sm:$0xff]
        %v1948 = vld [vmem:[%s376 + $0x3f0] sm:$0xff]
        %v1949 = vld [vmem:[%s376 + $0x3f8] sm:$0xff]
        %v1951 = vlaneseq
        %v1952 = vshrl.u32 %v1951, 7
        %v1953 = vsub.s32 0, %v1952
        %v1954 = vrot.slane %v1307, %v1953
        %v1955 = vlaneseq
        %v1956 = vshrl.u32 %v1955, 7
        %v1957 = vsub.s32 2, %v1956
        %v1958 = vrot.slane %v1307, %v1957
        %v1959 = vlaneseq
        %v1960 = vshrl.u32 %v1959, 7
        %v1961 = vsub.s32 4, %v1960
        %v1962 = vrot.slane %v1307, %v1961
        %v1963 = vlaneseq
        %v1964 = vshrl.u32 %v1963, 7
        %v1965 = vsub.s32 6, %v1964
        %v1966 = vrot.slane %v1307, %v1965
        %v1971 = vlaneseq
        %v1972 = vshrl.u32 %v1971, 7
        %v1973 = vsub.s32 0, %v1972
        %v1974 = vrot.slane %v1954, %v1973
        %v1975 = vlaneseq
        %v1976 = vshrl.u32 %v1975, 7
        %v1977 = vsub.s32 0, %v1976
        %v1978 = vrot.slane %v1958, %v1977
        %v1979 = vlaneseq
        %v1980 = vshrl.u32 %v1979, 7
        %v1981 = vsub.s32 0, %v1980
        %v1982 = vrot.slane %v1962, %v1981
        %v1983 = vlaneseq
        %v1984 = vshrl.u32 %v1983, 7
        %v1985 = vsub.s32 0, %v1984
        %v1986 = vrot.slane %v1966, %v1985
        %v2115 = vunpack.c.l.b16 %v1822
        %v2116 = vunpack.c.h.b16 %v1822
        %v2117 = vunpack.c.l.b16 %v1823
        %v2118 = vunpack.c.h.b16 %v1823
        %v2119 = vunpack.c.l.b16 %v1824
        %v2120 = vunpack.c.h.b16 %v1824
        %v2121 = vunpack.c.l.b16 %v1825
        %v2122 = vunpack.c.h.b16 %v1825
        %v2123 = vunpack.c.l.b16 %v1826
        %v2124 = vunpack.c.h.b16 %v1826
        %v2125 = vunpack.c.l.b16 %v1827
        %v2126 = vunpack.c.h.b16 %v1827
        %v2127 = vunpack.c.l.b16 %v1828
        %v2128 = vunpack.c.h.b16 %v1828
        %v2129 = vunpack.c.l.b16 %v1829
        %v2130 = vunpack.c.h.b16 %v1829
        %v2131 = vunpack.c.l.b16 %v1830
        %v2132 = vunpack.c.h.b16 %v1830
        %v2133 = vunpack.c.l.b16 %v1831
        %v2134 = vunpack.c.h.b16 %v1831
        %v2135 = vunpack.c.l.b16 %v1832
        %v2136 = vunpack.c.h.b16 %v1832
        %v2137 = vunpack.c.l.b16 %v1833
        %v2138 = vunpack.c.h.b16 %v1833
        %v2139 = vunpack.c.l.b16 %v1834
        %v2140 = vunpack.c.h.b16 %v1834
        %v2141 = vunpack.c.l.b16 %v1835
        %v2142 = vunpack.c.h.b16 %v1835
        %v2143 = vunpack.c.l.b16 %v1836
        %v2144 = vunpack.c.h.b16 %v1836
        %v2145 = vunpack.c.l.b16 %v1837
        %v2146 = vunpack.c.h.b16 %v1837
        %v2147 = vunpack.c.l.b16 %v1838
        %v2148 = vunpack.c.h.b16 %v1838
        %v2149 = vunpack.c.l.b16 %v1839
        %v2150 = vunpack.c.h.b16 %v1839
        %v2151 = vunpack.c.l.b16 %v1840
        %v2152 = vunpack.c.h.b16 %v1840
        %v2153 = vunpack.c.l.b16 %v1841
        %v2154 = vunpack.c.h.b16 %v1841
        %v2155 = vunpack.c.l.b16 %v1842
        %v2156 = vunpack.c.h.b16 %v1842
        %v2157 = vunpack.c.l.b16 %v1843
        %v2158 = vunpack.c.h.b16 %v1843
        %v2159 = vunpack.c.l.b16 %v1844
        %v2160 = vunpack.c.h.b16 %v1844
        %v2161 = vunpack.c.l.b16 %v1845
        %v2162 = vunpack.c.h.b16 %v1845
        %v2163 = vunpack.c.l.b16 %v1846
        %v2164 = vunpack.c.h.b16 %v1846
        %v2165 = vunpack.c.l.b16 %v1847
        %v2166 = vunpack.c.h.b16 %v1847
        %v2167 = vunpack.c.l.b16 %v1848
        %v2168 = vunpack.c.h.b16 %v1848
        %v2169 = vunpack.c.l.b16 %v1849
        %v2170 = vunpack.c.h.b16 %v1849
        %v2171 = vunpack.c.l.b16 %v1850
        %v2172 = vunpack.c.h.b16 %v1850
        %v2173 = vunpack.c.l.b16 %v1851
        %v2174 = vunpack.c.h.b16 %v1851
        %v2175 = vunpack.c.l.b16 %v1852
        %v2176 = vunpack.c.h.b16 %v1852
        %v2177 = vunpack.c.l.b16 %v1853
        %v2178 = vunpack.c.h.b16 %v1853
        %v2179 = vunpack.c.l.b16 %v1854
        %v2180 = vunpack.c.h.b16 %v1854
        %v2181 = vunpack.c.l.b16 %v1855
        %v2182 = vunpack.c.h.b16 %v1855
        %v2183 = vunpack.c.l.b16 %v1856
        %v2184 = vunpack.c.h.b16 %v1856
        %v2185 = vunpack.c.l.b16 %v1857
        %v2186 = vunpack.c.h.b16 %v1857
        %v2187 = vunpack.c.l.b16 %v1858
        %v2188 = vunpack.c.h.b16 %v1858
        %v2189 = vunpack.c.l.b16 %v1859
        %v2190 = vunpack.c.h.b16 %v1859
        %v2191 = vunpack.c.l.b16 %v1860
        %v2192 = vunpack.c.h.b16 %v1860
        %v2193 = vunpack.c.l.b16 %v1861
        %v2194 = vunpack.c.h.b16 %v1861
        %v2195 = vunpack.c.l.b16 %v1862
        %v2196 = vunpack.c.h.b16 %v1862
        %v2197 = vunpack.c.l.b16 %v1863
        %v2198 = vunpack.c.h.b16 %v1863
        %v2199 = vunpack.c.l.b16 %v1864
        %v2200 = vunpack.c.h.b16 %v1864
        %v2201 = vunpack.c.l.b16 %v1865
        %v2202 = vunpack.c.h.b16 %v1865
        %v2203 = vunpack.c.l.b16 %v1866
        %v2204 = vunpack.c.h.b16 %v1866
        %v2205 = vunpack.c.l.b16 %v1867
        %v2206 = vunpack.c.h.b16 %v1867
        %v2207 = vunpack.c.l.b16 %v1868
        %v2208 = vunpack.c.h.b16 %v1868
        %v2209 = vunpack.c.l.b16 %v1869
        %v2210 = vunpack.c.h.b16 %v1869
        %v2211 = vunpack.c.l.b16 %v1870
        %v2212 = vunpack.c.h.b16 %v1870
        %v2213 = vunpack.c.l.b16 %v1871
        %v2214 = vunpack.c.h.b16 %v1871
        %v2215 = vunpack.c.l.b16 %v1872
        %v2216 = vunpack.c.h.b16 %v1872
        %v2217 = vunpack.c.l.b16 %v1873
        %v2218 = vunpack.c.h.b16 %v1873
        %v2219 = vunpack.c.l.b16 %v1874
        %v2220 = vunpack.c.h.b16 %v1874
        %v2221 = vunpack.c.l.b16 %v1875
        %v2222 = vunpack.c.h.b16 %v1875
        %v2223 = vunpack.c.l.b16 %v1876
        %v2224 = vunpack.c.h.b16 %v1876
        %v2225 = vunpack.c.l.b16 %v1877
        %v2226 = vunpack.c.h.b16 %v1877
        %v2227 = vunpack.c.l.b16 %v1878
        %v2228 = vunpack.c.h.b16 %v1878
        %v2229 = vunpack.c.l.b16 %v1879
        %v2230 = vunpack.c.h.b16 %v1879
        %v2231 = vunpack.c.l.b16 %v1880
        %v2232 = vunpack.c.h.b16 %v1880
        %v2233 = vunpack.c.l.b16 %v1881
        %v2234 = vunpack.c.h.b16 %v1881
        %v2235 = vunpack.c.l.b16 %v1882
        %v2236 = vunpack.c.h.b16 %v1882
        %v2237 = vunpack.c.l.b16 %v1883
        %v2238 = vunpack.c.h.b16 %v1883
        %v2239 = vunpack.c.l.b16 %v1884
        %v2240 = vunpack.c.h.b16 %v1884
        %v2241 = vunpack.c.l.b16 %v1885
        %v2242 = vunpack.c.h.b16 %v1885
        %v2243 = vunpack.c.l.b16 %v1886
        %v2244 = vunpack.c.h.b16 %v1886
        %v2245 = vunpack.c.l.b16 %v1887
        %v2246 = vunpack.c.h.b16 %v1887
        %v2247 = vunpack.c.l.b16 %v1888
        %v2248 = vunpack.c.h.b16 %v1888
        %v2249 = vunpack.c.l.b16 %v1889
        %v2250 = vunpack.c.h.b16 %v1889
        %v2251 = vunpack.c.l.b16 %v1890
        %v2252 = vunpack.c.h.b16 %v1890
        %v2253 = vunpack.c.l.b16 %v1891
        %v2254 = vunpack.c.h.b16 %v1891
        %v2255 = vunpack.c.l.b16 %v1892
        %v2256 = vunpack.c.h.b16 %v1892
        %v2257 = vunpack.c.l.b16 %v1893
        %v2258 = vunpack.c.h.b16 %v1893
        %v2259 = vunpack.c.l.b16 %v1894
        %v2260 = vunpack.c.h.b16 %v1894
        %v2261 = vunpack.c.l.b16 %v1895
        %v2262 = vunpack.c.h.b16 %v1895
        %v2263 = vunpack.c.l.b16 %v1896
        %v2264 = vunpack.c.h.b16 %v1896
        %v2265 = vunpack.c.l.b16 %v1897
        %v2266 = vunpack.c.h.b16 %v1897
        %v2267 = vunpack.c.l.b16 %v1898
        %v2268 = vunpack.c.h.b16 %v1898
        %v2269 = vunpack.c.l.b16 %v1899
        %v2270 = vunpack.c.h.b16 %v1899
        %v2271 = vunpack.c.l.b16 %v1900
        %v2272 = vunpack.c.h.b16 %v1900
        %v2273 = vunpack.c.l.b16 %v1901
        %v2274 = vunpack.c.h.b16 %v1901
        %v2275 = vunpack.c.l.b16 %v1902
        %v2276 = vunpack.c.h.b16 %v1902
        %v2277 = vunpack.c.l.b16 %v1903
        %v2278 = vunpack.c.h.b16 %v1903
        %v2279 = vunpack.c.l.b16 %v1904
        %v2280 = vunpack.c.h.b16 %v1904
        %v2281 = vunpack.c.l.b16 %v1905
        %v2282 = vunpack.c.h.b16 %v1905
        %v2283 = vunpack.c.l.b16 %v1906
        %v2284 = vunpack.c.h.b16 %v1906
        %v2285 = vunpack.c.l.b16 %v1907
        %v2286 = vunpack.c.h.b16 %v1907
        %v2287 = vunpack.c.l.b16 %v1908
        %v2288 = vunpack.c.h.b16 %v1908
        %v2289 = vunpack.c.l.b16 %v1909
        %v2290 = vunpack.c.h.b16 %v1909
        %v2291 = vunpack.c.l.b16 %v1910
        %v2292 = vunpack.c.h.b16 %v1910
        %v2293 = vunpack.c.l.b16 %v1911
        %v2294 = vunpack.c.h.b16 %v1911
        %v2295 = vunpack.c.l.b16 %v1912
        %v2296 = vunpack.c.h.b16 %v1912
        %v2297 = vunpack.c.l.b16 %v1913
        %v2298 = vunpack.c.h.b16 %v1913
        %v2299 = vunpack.c.l.b16 %v1914
        %v2300 = vunpack.c.h.b16 %v1914
        %v2301 = vunpack.c.l.b16 %v1915
        %v2302 = vunpack.c.h.b16 %v1915
        %v2303 = vunpack.c.l.b16 %v1916
        %v2304 = vunpack.c.h.b16 %v1916
        %v2305 = vunpack.c.l.b16 %v1917
        %v2306 = vunpack.c.h.b16 %v1917
        %v2307 = vunpack.c.l.b16 %v1918
        %v2308 = vunpack.c.h.b16 %v1918
        %v2309 = vunpack.c.l.b16 %v1919
        %v2310 = vunpack.c.h.b16 %v1919
        %v2311 = vunpack.c.l.b16 %v1920
        %v2312 = vunpack.c.h.b16 %v1920
        %v2313 = vunpack.c.l.b16 %v1921
        %v2314 = vunpack.c.h.b16 %v1921
        %v2315 = vunpack.c.l.b16 %v1922
        %v2316 = vunpack.c.h.b16 %v1922
        %v2317 = vunpack.c.l.b16 %v1923
        %v2318 = vunpack.c.h.b16 %v1923
        %v2319 = vunpack.c.l.b16 %v1924
        %v2320 = vunpack.c.h.b16 %v1924
        %v2321 = vunpack.c.l.b16 %v1925
        %v2322 = vunpack.c.h.b16 %v1925
        %v2323 = vunpack.c.l.b16 %v1926
        %v2324 = vunpack.c.h.b16 %v1926
        %v2325 = vunpack.c.l.b16 %v1927
        %v2326 = vunpack.c.h.b16 %v1927
        %v2327 = vunpack.c.l.b16 %v1928
        %v2328 = vunpack.c.h.b16 %v1928
        %v2329 = vunpack.c.l.b16 %v1929
        %v2330 = vunpack.c.h.b16 %v1929
        %v2331 = vunpack.c.l.b16 %v1930
        %v2332 = vunpack.c.h.b16 %v1930
        %v2333 = vunpack.c.l.b16 %v1931
        %v2334 = vunpack.c.h.b16 %v1931
        %v2335 = vunpack.c.l.b16 %v1932
        %v2336 = vunpack.c.h.b16 %v1932
        %v2337 = vunpack.c.l.b16 %v1933
        %v2338 = vunpack.c.h.b16 %v1933
        %v2339 = vunpack.c.l.b16 %v1934
        %v2340 = vunpack.c.h.b16 %v1934
        %v2341 = vunpack.c.l.b16 %v1935
        %v2342 = vunpack.c.h.b16 %v1935
        %v2343 = vunpack.c.l.b16 %v1936
        %v2344 = vunpack.c.h.b16 %v1936
        %v2345 = vunpack.c.l.b16 %v1937
        %v2346 = vunpack.c.h.b16 %v1937
        %v2347 = vunpack.c.l.b16 %v1938
        %v2348 = vunpack.c.h.b16 %v1938
        %v2349 = vunpack.c.l.b16 %v1939
        %v2350 = vunpack.c.h.b16 %v1939
        %v2351 = vunpack.c.l.b16 %v1940
        %v2352 = vunpack.c.h.b16 %v1940
        %v2353 = vunpack.c.l.b16 %v1941
        %v2354 = vunpack.c.h.b16 %v1941
        %v2355 = vunpack.c.l.b16 %v1942
        %v2356 = vunpack.c.h.b16 %v1942
        %v2357 = vunpack.c.l.b16 %v1943
        %v2358 = vunpack.c.h.b16 %v1943
        %v2359 = vunpack.c.l.b16 %v1944
        %v2360 = vunpack.c.h.b16 %v1944
        %v2361 = vunpack.c.l.b16 %v1945
        %v2362 = vunpack.c.h.b16 %v1945
        %v2363 = vunpack.c.l.b16 %v1946
        %v2364 = vunpack.c.h.b16 %v1946
        %v2365 = vunpack.c.l.b16 %v1947
        %v2366 = vunpack.c.h.b16 %v1947
        %v2367 = vunpack.c.l.b16 %v1948
        %v2368 = vunpack.c.h.b16 %v1948
        %v2369 = vunpack.c.l.b16 %v1949
        %v2370 = vunpack.c.h.b16 %v1949
        %v2371 = vpack.c.b16 %v2119, %v2115
        %v2372 = vpack.c.b16 %v2120, %v2116
        %v2373 = vpack.c.b16 %v2121, %v2117
        %v2374 = vpack.c.b16 %v2122, %v2118
        %v2375 = vpack.c.b16 %v2127, %v2123
        %v2376 = vpack.c.b16 %v2128, %v2124
        %v2377 = vpack.c.b16 %v2129, %v2125
        %v2378 = vpack.c.b16 %v2130, %v2126
        %v2379 = vpack.c.b16 %v2135, %v2131
        %v2380 = vpack.c.b16 %v2136, %v2132
        %v2381 = vpack.c.b16 %v2137, %v2133
        %v2382 = vpack.c.b16 %v2138, %v2134
        %v2383 = vpack.c.b16 %v2143, %v2139
        %v2384 = vpack.c.b16 %v2144, %v2140
        %v2385 = vpack.c.b16 %v2145, %v2141
        %v2386 = vpack.c.b16 %v2146, %v2142
        %v2387 = vpack.c.b16 %v2151, %v2147
        %v2388 = vpack.c.b16 %v2152, %v2148
        %v2389 = vpack.c.b16 %v2153, %v2149
        %v2390 = vpack.c.b16 %v2154, %v2150
        %v2391 = vpack.c.b16 %v2159, %v2155
        %v2392 = vpack.c.b16 %v2160, %v2156
        %v2393 = vpack.c.b16 %v2161, %v2157
        %v2394 = vpack.c.b16 %v2162, %v2158
        %v2395 = vpack.c.b16 %v2167, %v2163
        %v2396 = vpack.c.b16 %v2168, %v2164
        %v2397 = vpack.c.b16 %v2169, %v2165
        %v2398 = vpack.c.b16 %v2170, %v2166
        %v2399 = vpack.c.b16 %v2175, %v2171
        %v2400 = vpack.c.b16 %v2176, %v2172
        %v2401 = vpack.c.b16 %v2177, %v2173
        %v2402 = vpack.c.b16 %v2178, %v2174
        %v2403 = vpack.c.b16 %v2183, %v2179
        %v2404 = vpack.c.b16 %v2184, %v2180
        %v2405 = vpack.c.b16 %v2185, %v2181
        %v2406 = vpack.c.b16 %v2186, %v2182
        %v2407 = vpack.c.b16 %v2191, %v2187
        %v2408 = vpack.c.b16 %v2192, %v2188
        %v2409 = vpack.c.b16 %v2193, %v2189
        %v2410 = vpack.c.b16 %v2194, %v2190
        %v2411 = vpack.c.b16 %v2199, %v2195
        %v2412 = vpack.c.b16 %v2200, %v2196
        %v2413 = vpack.c.b16 %v2201, %v2197
        %v2414 = vpack.c.b16 %v2202, %v2198
        %v2415 = vpack.c.b16 %v2207, %v2203
        %v2416 = vpack.c.b16 %v2208, %v2204
        %v2417 = vpack.c.b16 %v2209, %v2205
        %v2418 = vpack.c.b16 %v2210, %v2206
        %v2419 = vpack.c.b16 %v2215, %v2211
        %v2420 = vpack.c.b16 %v2216, %v2212
        %v2421 = vpack.c.b16 %v2217, %v2213
        %v2422 = vpack.c.b16 %v2218, %v2214
        %v2423 = vpack.c.b16 %v2223, %v2219
        %v2424 = vpack.c.b16 %v2224, %v2220
        %v2425 = vpack.c.b16 %v2225, %v2221
        %v2426 = vpack.c.b16 %v2226, %v2222
        %v2427 = vpack.c.b16 %v2231, %v2227
        %v2428 = vpack.c.b16 %v2232, %v2228
        %v2429 = vpack.c.b16 %v2233, %v2229
        %v2430 = vpack.c.b16 %v2234, %v2230
        %v2431 = vpack.c.b16 %v2239, %v2235
        %v2432 = vpack.c.b16 %v2240, %v2236
        %v2433 = vpack.c.b16 %v2241, %v2237
        %v2434 = vpack.c.b16 %v2242, %v2238
        %v2435 = vpack.c.b16 %v2247, %v2243
        %v2436 = vpack.c.b16 %v2248, %v2244
        %v2437 = vpack.c.b16 %v2249, %v2245
        %v2438 = vpack.c.b16 %v2250, %v2246
        %v2439 = vpack.c.b16 %v2255, %v2251
        %v2440 = vpack.c.b16 %v2256, %v2252
        %v2441 = vpack.c.b16 %v2257, %v2253
        %v2442 = vpack.c.b16 %v2258, %v2254
        %v2443 = vpack.c.b16 %v2263, %v2259
        %v2444 = vpack.c.b16 %v2264, %v2260
        %v2445 = vpack.c.b16 %v2265, %v2261
        %v2446 = vpack.c.b16 %v2266, %v2262
        %v2447 = vpack.c.b16 %v2271, %v2267
        %v2448 = vpack.c.b16 %v2272, %v2268
        %v2449 = vpack.c.b16 %v2273, %v2269
        %v2450 = vpack.c.b16 %v2274, %v2270
        %v2451 = vpack.c.b16 %v2279, %v2275
        %v2452 = vpack.c.b16 %v2280, %v2276
        %v2453 = vpack.c.b16 %v2281, %v2277
        %v2454 = vpack.c.b16 %v2282, %v2278
        %v2455 = vpack.c.b16 %v2287, %v2283
        %v2456 = vpack.c.b16 %v2288, %v2284
        %v2457 = vpack.c.b16 %v2289, %v2285
        %v2458 = vpack.c.b16 %v2290, %v2286
        %v2459 = vpack.c.b16 %v2295, %v2291
        %v2460 = vpack.c.b16 %v2296, %v2292
        %v2461 = vpack.c.b16 %v2297, %v2293
        %v2462 = vpack.c.b16 %v2298, %v2294
        %v2463 = vpack.c.b16 %v2303, %v2299
        %v2464 = vpack.c.b16 %v2304, %v2300
        %v2465 = vpack.c.b16 %v2305, %v2301
        %v2466 = vpack.c.b16 %v2306, %v2302
        %v2467 = vpack.c.b16 %v2311, %v2307
        %v2468 = vpack.c.b16 %v2312, %v2308
        %v2469 = vpack.c.b16 %v2313, %v2309
        %v2470 = vpack.c.b16 %v2314, %v2310
        %v2471 = vpack.c.b16 %v2319, %v2315
        %v2472 = vpack.c.b16 %v2320, %v2316
        %v2473 = vpack.c.b16 %v2321, %v2317
        %v2474 = vpack.c.b16 %v2322, %v2318
        %v2475 = vpack.c.b16 %v2327, %v2323
        %v2476 = vpack.c.b16 %v2328, %v2324
        %v2477 = vpack.c.b16 %v2329, %v2325
        %v2478 = vpack.c.b16 %v2330, %v2326
        %v2479 = vpack.c.b16 %v2335, %v2331
        %v2480 = vpack.c.b16 %v2336, %v2332
        %v2481 = vpack.c.b16 %v2337, %v2333
        %v2482 = vpack.c.b16 %v2338, %v2334
        %v2483 = vpack.c.b16 %v2343, %v2339
        %v2484 = vpack.c.b16 %v2344, %v2340
        %v2485 = vpack.c.b16 %v2345, %v2341
        %v2486 = vpack.c.b16 %v2346, %v2342
        %v2487 = vpack.c.b16 %v2351, %v2347
        %v2488 = vpack.c.b16 %v2352, %v2348
        %v2489 = vpack.c.b16 %v2353, %v2349
        %v2490 = vpack.c.b16 %v2354, %v2350
        %v2491 = vpack.c.b16 %v2359, %v2355
        %v2492 = vpack.c.b16 %v2360, %v2356
        %v2493 = vpack.c.b16 %v2361, %v2357
        %v2494 = vpack.c.b16 %v2362, %v2358
        %v2495 = vpack.c.b16 %v2367, %v2363
        %v2496 = vpack.c.b16 %v2368, %v2364
        %v2497 = vpack.c.b16 %v2369, %v2365
        %v2498 = vpack.c.b16 %v2370, %v2366
        %2627 = vmatprep.subr.bf16.mxu0 %v2372
        %2628 = vmatpush1.bf16.msra.mxu0 %v2371
        %2629 = vmatprep.subr.bf16.mxu0 %v2376
        %2630 = vmatpush1.bf16.msra.mxu0 %v2375
        %2631 = vmatprep.subr.bf16.mxu0 %v2380
        %2632 = vmatpush1.bf16.msra.mxu0 %v2379
        %2633 = vmatprep.subr.bf16.mxu0 %v2384
        %2634 = vmatpush1.bf16.msra.mxu0 %v2383
        %2635 = vmatprep.subr.bf16.mxu0 %v2388
        %2636 = vmatpush1.bf16.msra.mxu0 %v2387
        %2637 = vmatprep.subr.bf16.mxu0 %v2392
        %2638 = vmatpush1.bf16.msra.mxu0 %v2391
        %2639 = vmatprep.subr.bf16.mxu0 %v2396
        %2640 = vmatpush1.bf16.msra.mxu0 %v2395
        %2641 = vmatprep.subr.bf16.mxu0 %v2400
        %2642 = vmatpush1.bf16.msra.mxu0 %v2399
        %2643 = vmatprep.subr.bf16.mxu0 %v2404
        %2644 = vmatpush1.bf16.msra.mxu0 %v2403
        %2645 = vmatprep.subr.bf16.mxu0 %v2408
        %2646 = vmatpush1.bf16.msra.mxu0 %v2407
        %2647 = vmatprep.subr.bf16.mxu0 %v2412
        %2648 = vmatpush1.bf16.msra.mxu0 %v2411
        %2649 = vmatprep.subr.bf16.mxu0 %v2416
        %2650 = vmatpush1.bf16.msra.mxu0 %v2415
        %2651 = vmatprep.subr.bf16.mxu0 %v2420
        %2652 = vmatpush1.bf16.msra.mxu0 %v2419
        %2653 = vmatprep.subr.bf16.mxu0 %v2424
        %2654 = vmatpush1.bf16.msra.mxu0 %v2423
        %2655 = vmatprep.subr.bf16.mxu0 %v2428
        %2656 = vmatpush1.bf16.msra.mxu0 %v2427
        %2657 = vmatprep.subr.bf16.mxu0 %v2432
        %2658 = vmatpush1.bf16.msra.mxu0 %v2431
        %2659 = vmatprep.mubr.bf16.mxu0 %v1759
        %2660 = vmatmul.mubr.bf16.gmra.mrb[0].mxu0 %v1758
        %v2661 = vpop.f32.mrb[0].mxu0
        %v2662 = vadd.f32 %v1974, %v2661
        %v2663 = vpop.f32.mrb[0].mxu0
        %v2664 = vadd.f32 %v1978, %v2663
        %v2665 = vpop.f32.mrb[0].mxu0
        %v2666 = vadd.f32 %v1974, %v2665
        %v2667 = vpop.f32.mrb[0].mxu0
        %v2668 = vadd.f32 %v1978, %v2667
        %2669 = vmatprep.mubr.bf16.mxu0 %v1763
        %2670 = vmatmul.mubr.bf16.gmra.mrb[0].mxu0 %v1762
        %v2671 = vpop.f32.mrb[0].mxu0
        %v2672 = vadd.f32 %v1974, %v2671
        %v2673 = vpop.f32.mrb[0].mxu0
        %v2674 = vadd.f32 %v1978, %v2673
        %v2675 = vpop.f32.mrb[0].mxu0
        %v2676 = vadd.f32 %v1974, %v2675
        %v2677 = vpop.f32.mrb[0].mxu0
        %v2678 = vadd.f32 %v1978, %v2677
        %2679 = vmatprep.mubr.bf16.mxu0 %v1767
        %2680 = vmatmul.mubr.bf16.gmra.mrb[0].mxu0 %v1766
        %v2681 = vpop.f32.mrb[0].mxu0
        %v2682 = vadd.f32 %v1974, %v2681
        %v2683 = vpop.f32.mrb[0].mxu0
        %v2684 = vadd.f32 %v1978, %v2683
        %v2685 = vpop.f32.mrb[0].mxu0
        %v2686 = vadd.f32 %v1974, %v2685
        %v2687 = vpop.f32.mrb[0].mxu0
        %v2688 = vadd.f32 %v1978, %v2687
        %2689 = vmatprep.mubr.bf16.mxu0 %v1771
        %2690 = vmatmul.mubr.bf16.gmra.mrb[0].mxu0 %v1770
        %v2691 = vpop.f32.mrb[0].mxu0
        %v2692 = vadd.f32 %v1974, %v2691
        %v2693 = vpop.f32.mrb[0].mxu0
        %v2694 = vadd.f32 %v1978, %v2693
        %v2695 = vpop.f32.mrb[0].mxu0
        %v2696 = vadd.f32 %v1974, %v2695
        %v2697 = vpop.f32.mrb[0].mxu0
        %v2698 = vadd.f32 %v1978, %v2697
        %2699 = vmatprep.mubr.bf16.mxu0 %v1775
        %2700 = vmatmul.mubr.bf16.gmra.mrb[0].mxu0 %v1774
        %v2701 = vpop.f32.mrb[0].mxu0
        %v2702 = vadd.f32 %v1974, %v2701
        %v2703 = vpop.f32.mrb[0].mxu0
        %v2704 = vadd.f32 %v1978, %v2703
        %v2705 = vpop.f32.mrb[0].mxu0
        %v2706 = vadd.f32 %v1974, %v2705
        %v2707 = vpop.f32.mrb[0].mxu0
        %v2708 = vadd.f32 %v1978, %v2707
        %2709 = vmatprep.mubr.bf16.mxu0 %v1779
        %2710 = vmatmul.mubr.bf16.gmra.mrb[0].mxu0 %v1778
        %v2711 = vpop.f32.mrb[0].mxu0
        %v2712 = vadd.f32 %v1974, %v2711
        %v2713 = vpop.f32.mrb[0].mxu0
        %v2714 = vadd.f32 %v1978, %v2713
        %v2715 = vpop.f32.mrb[0].mxu0
        %v2716 = vadd.f32 %v1974, %v2715
        %v2717 = vpop.f32.mrb[0].mxu0
        %v2718 = vadd.f32 %v1978, %v2717
        %2719 = vmatprep.mubr.bf16.mxu0 %v1783
        %2720 = vmatmul.mubr.bf16.gmra.mrb[0].mxu0 %v1782
        %v2721 = vpop.f32.mrb[0].mxu0
        %v2722 = vadd.f32 %v1974, %v2721
        %v2723 = vpop.f32.mrb[0].mxu0
        %v2724 = vadd.f32 %v1978, %v2723
        %v2725 = vpop.f32.mrb[0].mxu0
        %v2726 = vadd.f32 %v1974, %v2725
        %v2727 = vpop.f32.mrb[0].mxu0
        %v2728 = vadd.f32 %v1978, %v2727
        %2729 = vmatprep.mubr.bf16.mxu0 %v1787
        %2730 = vmatmul.mubr.bf16.gmra.mrb[0].mxu0 %v1786
        %v2731 = vpop.f32.mrb[0].mxu0
        %v2732 = vadd.f32 %v1974, %v2731
        %v2733 = vpop.f32.mrb[0].mxu0
        %v2734 = vadd.f32 %v1978, %v2733
        %v2735 = vpop.f32.mrb[0].mxu0
        %v2736 = vadd.f32 %v1974, %v2735
        %v2737 = vpop.f32.mrb[0].mxu0
        %v2738 = vadd.f32 %v1978, %v2737
        %2739 = vmatprep.mubr.bf16.mxu0 %v1791
        %2740 = vmatmul.mubr.bf16.gmra.mrb[0].mxu0 %v1790
        %v2741 = vpop.f32.mrb[0].mxu0
        %v2742 = vadd.f32 %v1974, %v2741
        %v2743 = vpop.f32.mrb[0].mxu0
        %v2744 = vadd.f32 %v1978, %v2743
        %v2745 = vpop.f32.mrb[0].mxu0
        %v2746 = vadd.f32 %v1974, %v2745
        %v2747 = vpop.f32.mrb[0].mxu0
        %v2748 = vadd.f32 %v1978, %v2747
        %2749 = vmatprep.mubr.bf16.mxu0 %v1795
        %2750 = vmatmul.mubr.bf16.gmra.mrb[0].mxu0 %v1794
        %v2751 = vpop.f32.mrb[0].mxu0
        %v2752 = vadd.f32 %v1974, %v2751
        %v2753 = vpop.f32.mrb[0].mxu0
        %v2754 = vadd.f32 %v1978, %v2753
        %v2755 = vpop.f32.mrb[0].mxu0
        %v2756 = vadd.f32 %v1974, %v2755
        %v2757 = vpop.f32.mrb[0].mxu0
        %v2758 = vadd.f32 %v1978, %v2757
        %2759 = vmatprep.mubr.bf16.mxu0 %v1799
        %2760 = vmatmul.mubr.bf16.gmra.mrb[0].mxu0 %v1798
        %v2761 = vpop.f32.mrb[0].mxu0
        %v2762 = vadd.f32 %v1974, %v2761
        %v2763 = vpop.f32.mrb[0].mxu0
        %v2764 = vadd.f32 %v1978, %v2763
        %v2765 = vpop.f32.mrb[0].mxu0
        %v2766 = vadd.f32 %v1974, %v2765
        %v2767 = vpop.f32.mrb[0].mxu0
        %v2768 = vadd.f32 %v1978, %v2767
        %2769 = vmatprep.mubr.bf16.mxu0 %v1803
        %2770 = vmatmul.mubr.bf16.gmra.mrb[0].mxu0 %v1802
        %v2771 = vpop.f32.mrb[0].mxu0
        %v2772 = vadd.f32 %v1974, %v2771
        %v2773 = vpop.f32.mrb[0].mxu0
        %v2774 = vadd.f32 %v1978, %v2773
        %v2775 = vpop.f32.mrb[0].mxu0
        %v2776 = vadd.f32 %v1974, %v2775
        %v2777 = vpop.f32.mrb[0].mxu0
        %v2778 = vadd.f32 %v1978, %v2777
        %2779 = vmatprep.mubr.bf16.mxu0 %v1807
        %2780 = vmatmul.mubr.bf16.gmra.mrb[0].mxu0 %v1806
        %v2781 = vpop.f32.mrb[0].mxu0
        %v2782 = vadd.f32 %v1974, %v2781
        %v2783 = vpop.f32.mrb[0].mxu0
        %v2784 = vadd.f32 %v1978, %v2783
        %v2785 = vpop.f32.mrb[0].mxu0
        %v2786 = vadd.f32 %v1974, %v2785
        %v2787 = vpop.f32.mrb[0].mxu0
        %v2788 = vadd.f32 %v1978, %v2787
        %2789 = vmatprep.mubr.bf16.mxu0 %v1811
        %2790 = vmatmul.mubr.bf16.gmra.mrb[0].mxu0 %v1810
        %v2791 = vpop.f32.mrb[0].mxu0
        %v2792 = vadd.f32 %v1974, %v2791
        %v2793 = vpop.f32.mrb[0].mxu0
        %v2794 = vadd.f32 %v1978, %v2793
        %v2795 = vpop.f32.mrb[0].mxu0
        %v2796 = vadd.f32 %v1974, %v2795
        %v2797 = vpop.f32.mrb[0].mxu0
        %v2798 = vadd.f32 %v1978, %v2797
        %2799 = vmatprep.mubr.bf16.mxu0 %v1815
        %2800 = vmatmul.mubr.bf16.gmra.mrb[0].mxu0 %v1814
        %v2801 = vpop.f32.mrb[0].mxu0
        %v2802 = vadd.f32 %v1974, %v2801
        %v2803 = vpop.f32.mrb[0].mxu0
        %v2804 = vadd.f32 %v1978, %v2803
        %v2805 = vpop.f32.mrb[0].mxu0
        %v2806 = vadd.f32 %v1974, %v2805
        %v2807 = vpop.f32.mrb[0].mxu0
        %v2808 = vadd.f32 %v1978, %v2807
        %2809 = vmatprep.mubr.bf16.mxu0 %v1819
        %2810 = vmatmul.mubr.bf16.gmra.mrb[0].mxu0 %v1818
        %v2811 = vpop.f32.mrb[0].mxu0
        %v2812 = vadd.f32 %v1974, %v2811
        %v2813 = vpop.f32.mrb[0].mxu0
        %v2814 = vadd.f32 %v1978, %v2813
        %v2815 = vpop.f32.mrb[0].mxu0
        %v2816 = vadd.f32 %v1974, %v2815
        %v2817 = vpop.f32.mrb[0].mxu0
        %v2818 = vadd.f32 %v1978, %v2817
        %2819 = vdwg.mxu0
        %2820 = vmatprep.subr.bf16.mxu0 %v2436
        %2821 = vmatpush1.bf16.msra.mxu0 %v2435
        %2822 = vmatprep.subr.bf16.mxu0 %v2440
        %2823 = vmatpush1.bf16.msra.mxu0 %v2439
        %2824 = vmatprep.subr.bf16.mxu0 %v2444
        %2825 = vmatpush1.bf16.msra.mxu0 %v2443
        %2826 = vmatprep.subr.bf16.mxu0 %v2448
        %2827 = vmatpush1.bf16.msra.mxu0 %v2447
        %2828 = vmatprep.subr.bf16.mxu0 %v2452
        %2829 = vmatpush1.bf16.msra.mxu0 %v2451
        %2830 = vmatprep.subr.bf16.mxu0 %v2456
        %2831 = vmatpush1.bf16.msra.mxu0 %v2455
        %2832 = vmatprep.subr.bf16.mxu0 %v2460
        %2833 = vmatpush1.bf16.msra.mxu0 %v2459
        %2834 = vmatprep.subr.bf16.mxu0 %v2464
        %2835 = vmatpush1.bf16.msra.mxu0 %v2463
        %2836 = vmatprep.subr.bf16.mxu0 %v2468
        %2837 = vmatpush1.bf16.msra.mxu0 %v2467
        %2838 = vmatprep.subr.bf16.mxu0 %v2472
        %2839 = vmatpush1.bf16.msra.mxu0 %v2471
        %2840 = vmatprep.subr.bf16.mxu0 %v2476
        %2841 = vmatpush1.bf16.msra.mxu0 %v2475
        %2842 = vmatprep.subr.bf16.mxu0 %v2480
        %2843 = vmatpush1.bf16.msra.mxu0 %v2479
        %2844 = vmatprep.subr.bf16.mxu0 %v2484
        %2845 = vmatpush1.bf16.msra.mxu0 %v2483
        %2846 = vmatprep.subr.bf16.mxu0 %v2488
        %2847 = vmatpush1.bf16.msra.mxu0 %v2487
        %2848 = vmatprep.subr.bf16.mxu0 %v2492
        %2849 = vmatpush1.bf16.msra.mxu0 %v2491
        %2850 = vmatprep.subr.bf16.mxu0 %v2496
        %2851 = vmatpush1.bf16.msra.mxu0 %v2495
        %2852 = vmatprep.mubr.bf16.mxu0 %v1761
        %2853 = vmatmul.mubr.bf16.gmra.mrb[0].mxu0 %v1760
        %v2854 = vpop.f32.mrb[0].mxu0
        %v2855 = vadd.f32 %v2662, %v2854
        %v2856 = vpop.f32.mrb[0].mxu0
        %v2857 = vadd.f32 %v2664, %v2856
        %v2858 = vpop.f32.mrb[0].mxu0
        %v2859 = vadd.f32 %v2666, %v2858
        %v2860 = vpop.f32.mrb[0].mxu0
        %v2861 = vadd.f32 %v2668, %v2860
        %2862 = vmatprep.mubr.bf16.mxu0 %v1765
        %2863 = vmatmul.mubr.bf16.gmra.mrb[0].mxu0 %v1764
        %v2864 = vpop.f32.mrb[0].mxu0
        %v2865 = vadd.f32 %v2672, %v2864
        %v2866 = vpop.f32.mrb[0].mxu0
        %v2867 = vadd.f32 %v2674, %v2866
        %v2868 = vpop.f32.mrb[0].mxu0
        %v2869 = vadd.f32 %v2676, %v2868
        %v2870 = vpop.f32.mrb[0].mxu0
        %v2871 = vadd.f32 %v2678, %v2870
        %2872 = vmatprep.mubr.bf16.mxu0 %v1769
        %2873 = vmatmul.mubr.bf16.gmra.mrb[0].mxu0 %v1768
        %v2874 = vpop.f32.mrb[0].mxu0
        %v2875 = vadd.f32 %v2682, %v2874
        %v2876 = vpop.f32.mrb[0].mxu0
        %v2877 = vadd.f32 %v2684, %v2876
        %v2878 = vpop.f32.mrb[0].mxu0
        %v2879 = vadd.f32 %v2686, %v2878
        %v2880 = vpop.f32.mrb[0].mxu0
        %v2881 = vadd.f32 %v2688, %v2880
        %2882 = vmatprep.mubr.bf16.mxu0 %v1773
        %2883 = vmatmul.mubr.bf16.gmra.mrb[0].mxu0 %v1772
        %v2884 = vpop.f32.mrb[0].mxu0
        %v2885 = vadd.f32 %v2692, %v2884
        %v2886 = vpop.f32.mrb[0].mxu0
        %v2887 = vadd.f32 %v2694, %v2886
        %v2888 = vpop.f32.mrb[0].mxu0
        %v2889 = vadd.f32 %v2696, %v2888
        %v2890 = vpop.f32.mrb[0].mxu0
        %v2891 = vadd.f32 %v2698, %v2890
        %2892 = vmatprep.mubr.bf16.mxu0 %v1777
        %2893 = vmatmul.mubr.bf16.gmra.mrb[0].mxu0 %v1776
        %v2894 = vpop.f32.mrb[0].mxu0
        %v2895 = vadd.f32 %v2702, %v2894
        %v2896 = vpop.f32.mrb[0].mxu0
        %v2897 = vadd.f32 %v2704, %v2896
        %v2898 = vpop.f32.mrb[0].mxu0
        %v2899 = vadd.f32 %v2706, %v2898
        %v2900 = vpop.f32.mrb[0].mxu0
        %v2901 = vadd.f32 %v2708, %v2900
        %2902 = vmatprep.mubr.bf16.mxu0 %v1781
        %2903 = vmatmul.mubr.bf16.gmra.mrb[0].mxu0 %v1780
        %v2904 = vpop.f32.mrb[0].mxu0
        %v2905 = vadd.f32 %v2712, %v2904
        %v2906 = vpop.f32.mrb[0].mxu0
        %v2907 = vadd.f32 %v2714, %v2906
        %v2908 = vpop.f32.mrb[0].mxu0
        %v2909 = vadd.f32 %v2716, %v2908
        %v2910 = vpop.f32.mrb[0].mxu0
        %v2911 = vadd.f32 %v2718, %v2910
        %2912 = vmatprep.mubr.bf16.mxu0 %v1785
        %2913 = vmatmul.mubr.bf16.gmra.mrb[0].mxu0 %v1784
        %v2914 = vpop.f32.mrb[0].mxu0
        %v2915 = vadd.f32 %v2722, %v2914
        %v2916 = vpop.f32.mrb[0].mxu0
        %v2917 = vadd.f32 %v2724, %v2916
        %v2918 = vpop.f32.mrb[0].mxu0
        %v2919 = vadd.f32 %v2726, %v2918
        %v2920 = vpop.f32.mrb[0].mxu0
        %v2921 = vadd.f32 %v2728, %v2920
        %2922 = vmatprep.mubr.bf16.mxu0 %v1789
        %2923 = vmatmul.mubr.bf16.gmra.mrb[0].mxu0 %v1788
        %v2924 = vpop.f32.mrb[0].mxu0
        %v2925 = vadd.f32 %v2732, %v2924
        %v2926 = vpop.f32.mrb[0].mxu0
        %v2927 = vadd.f32 %v2734, %v2926
        %v2928 = vpop.f32.mrb[0].mxu0
        %v2929 = vadd.f32 %v2736, %v2928
        %v2930 = vpop.f32.mrb[0].mxu0
        %v2931 = vadd.f32 %v2738, %v2930
        %2932 = vmatprep.mubr.bf16.mxu0 %v1793
        %2933 = vmatmul.mubr.bf16.gmra.mrb[0].mxu0 %v1792
        %v2934 = vpop.f32.mrb[0].mxu0
        %v2935 = vadd.f32 %v2742, %v2934
        %v2936 = vpop.f32.mrb[0].mxu0
        %v2937 = vadd.f32 %v2744, %v2936
        %v2938 = vpop.f32.mrb[0].mxu0
        %v2939 = vadd.f32 %v2746, %v2938
        %v2940 = vpop.f32.mrb[0].mxu0
        %v2941 = vadd.f32 %v2748, %v2940
        %2942 = vmatprep.mubr.bf16.mxu0 %v1797
        %2943 = vmatmul.mubr.bf16.gmra.mrb[0].mxu0 %v1796
        %v2944 = vpop.f32.mrb[0].mxu0
        %v2945 = vadd.f32 %v2752, %v2944
        %v2946 = vpop.f32.mrb[0].mxu0
        %v2947 = vadd.f32 %v2754, %v2946
        %v2948 = vpop.f32.mrb[0].mxu0
        %v2949 = vadd.f32 %v2756, %v2948
        %v2950 = vpop.f32.mrb[0].mxu0
        %v2951 = vadd.f32 %v2758, %v2950
        %2952 = vmatprep.mubr.bf16.mxu0 %v1801
        %2953 = vmatmul.mubr.bf16.gmra.mrb[0].mxu0 %v1800
        %v2954 = vpop.f32.mrb[0].mxu0
        %v2955 = vadd.f32 %v2762, %v2954
        %v2956 = vpop.f32.mrb[0].mxu0
        %v2957 = vadd.f32 %v2764, %v2956
        %v2958 = vpop.f32.mrb[0].mxu0
        %v2959 = vadd.f32 %v2766, %v2958
        %v2960 = vpop.f32.mrb[0].mxu0
        %v2961 = vadd.f32 %v2768, %v2960
        %2962 = vmatprep.mubr.bf16.mxu0 %v1805
        %2963 = vmatmul.mubr.bf16.gmra.mrb[0].mxu0 %v1804
        %v2964 = vpop.f32.mrb[0].mxu0
        %v2965 = vadd.f32 %v2772, %v2964
        %v2966 = vpop.f32.mrb[0].mxu0
        %v2967 = vadd.f32 %v2774, %v2966
        %v2968 = vpop.f32.mrb[0].mxu0
        %v2969 = vadd.f32 %v2776, %v2968
        %v2970 = vpop.f32.mrb[0].mxu0
        %v2971 = vadd.f32 %v2778, %v2970
        %2972 = vmatprep.mubr.bf16.mxu0 %v1809
        %2973 = vmatmul.mubr.bf16.gmra.mrb[0].mxu0 %v1808
        %v2974 = vpop.f32.mrb[0].mxu0
        %v2975 = vadd.f32 %v2782, %v2974
        %v2976 = vpop.f32.mrb[0].mxu0
        %v2977 = vadd.f32 %v2784, %v2976
        %v2978 = vpop.f32.mrb[0].mxu0
        %v2979 = vadd.f32 %v2786, %v2978
        %v2980 = vpop.f32.mrb[0].mxu0
        %v2981 = vadd.f32 %v2788, %v2980
        %2982 = vmatprep.mubr.bf16.mxu0 %v1813
        %2983 = vmatmul.mubr.bf16.gmra.mrb[0].mxu0 %v1812
        %v2984 = vpop.f32.mrb[0].mxu0
        %v2985 = vadd.f32 %v2792, %v2984
        %v2986 = vpop.f32.mrb[0].mxu0
        %v2987 = vadd.f32 %v2794, %v2986
        %v2988 = vpop.f32.mrb[0].mxu0
        %v2989 = vadd.f32 %v2796, %v2988
        %v2990 = vpop.f32.mrb[0].mxu0
        %v2991 = vadd.f32 %v2798, %v2990
        %2992 = vmatprep.mubr.bf16.mxu0 %v1817
        %2993 = vmatmul.mubr.bf16.gmra.mrb[0].mxu0 %v1816
        %v2994 = vpop.f32.mrb[0].mxu0
        %v2995 = vadd.f32 %v2802, %v2994
        %v2996 = vpop.f32.mrb[0].mxu0
        %v2997 = vadd.f32 %v2804, %v2996
        %v2998 = vpop.f32.mrb[0].mxu0
        %v2999 = vadd.f32 %v2806, %v2998
        %v3000 = vpop.f32.mrb[0].mxu0
        %v3001 = vadd.f32 %v2808, %v3000
        %3002 = vmatprep.mubr.bf16.mxu0 %v1821
        %3003 = vmatmul.mubr.bf16.gmra.mrb[0].mxu0 %v1820
        %v3004 = vpop.f32.mrb[0].mxu0
        %v3005 = vadd.f32 %v2812, %v3004
        %v3006 = vpop.f32.mrb[0].mxu0
        %v3007 = vadd.f32 %v2814, %v3006
        %v3008 = vpop.f32.mrb[0].mxu0
        %v3009 = vadd.f32 %v2816, %v3008
        %v3010 = vpop.f32.mrb[0].mxu0
        %v3011 = vadd.f32 %v2818, %v3010
        %3012 = vdwg.mxu0
        %3013 = vmatprep.subr.bf16.mxu0 %v2374
        %3014 = vmatpush1.bf16.msra.mxu0 %v2373
        %3015 = vmatprep.subr.bf16.mxu0 %v2378
        %3016 = vmatpush1.bf16.msra.mxu0 %v2377
        %3017 = vmatprep.subr.bf16.mxu0 %v2382
        %3018 = vmatpush1.bf16.msra.mxu0 %v2381
        %3019 = vmatprep.subr.bf16.mxu0 %v2386
        %3020 = vmatpush1.bf16.msra.mxu0 %v2385
        %3021 = vmatprep.subr.bf16.mxu0 %v2390
        %3022 = vmatpush1.bf16.msra.mxu0 %v2389
        %3023 = vmatprep.subr.bf16.mxu0 %v2394
        %3024 = vmatpush1.bf16.msra.mxu0 %v2393
        %3025 = vmatprep.subr.bf16.mxu0 %v2398
        %3026 = vmatpush1.bf16.msra.mxu0 %v2397
        %3027 = vmatprep.subr.bf16.mxu0 %v2402
        %3028 = vmatpush1.bf16.msra.mxu0 %v2401
        %3029 = vmatprep.subr.bf16.mxu0 %v2406
        %3030 = vmatpush1.bf16.msra.mxu0 %v2405
        %3031 = vmatprep.subr.bf16.mxu0 %v2410
        %3032 = vmatpush1.bf16.msra.mxu0 %v2409
        %3033 = vmatprep.subr.bf16.mxu0 %v2414
        %3034 = vmatpush1.bf16.msra.mxu0 %v2413
        %3035 = vmatprep.subr.bf16.mxu0 %v2418
        %3036 = vmatpush1.bf16.msra.mxu0 %v2417
        %3037 = vmatprep.subr.bf16.mxu0 %v2422
        %3038 = vmatpush1.bf16.msra.mxu0 %v2421
        %3039 = vmatprep.subr.bf16.mxu0 %v2426
        %3040 = vmatpush1.bf16.msra.mxu0 %v2425
        %3041 = vmatprep.subr.bf16.mxu0 %v2430
        %3042 = vmatpush1.bf16.msra.mxu0 %v2429
        %3043 = vmatprep.subr.bf16.mxu0 %v2434
        %3044 = vmatpush1.bf16.msra.mxu0 %v2433
        %3045 = vmatprep.mubr.bf16.mxu0 %v1759
        %3046 = vmatmul.mubr.bf16.gmra.mrb[0].mxu0 %v1758
        %v3047 = vpop.f32.mrb[0].mxu0
        %v3048 = vadd.f32 %v1982, %v3047
        %v3049 = vpop.f32.mrb[0].mxu0
        %v3050 = vadd.f32 %v1986, %v3049
        %v3051 = vpop.f32.mrb[0].mxu0
        %v3052 = vadd.f32 %v1982, %v3051
        %v3053 = vpop.f32.mrb[0].mxu0
        %v3054 = vadd.f32 %v1986, %v3053
        %3055 = vmatprep.mubr.bf16.mxu0 %v1763
        %3056 = vmatmul.mubr.bf16.gmra.mrb[0].mxu0 %v1762
        %v3057 = vpop.f32.mrb[0].mxu0
        %v3058 = vadd.f32 %v1982, %v3057
        %v3059 = vpop.f32.mrb[0].mxu0
        %v3060 = vadd.f32 %v1986, %v3059
        %v3061 = vpop.f32.mrb[0].mxu0
        %v3062 = vadd.f32 %v1982, %v3061
        %v3063 = vpop.f32.mrb[0].mxu0
        %v3064 = vadd.f32 %v1986, %v3063
        %3065 = vmatprep.mubr.bf16.mxu0 %v1767
        %3066 = vmatmul.mubr.bf16.gmra.mrb[0].mxu0 %v1766
        %v3067 = vpop.f32.mrb[0].mxu0
        %v3068 = vadd.f32 %v1982, %v3067
        %v3069 = vpop.f32.mrb[0].mxu0
        %v3070 = vadd.f32 %v1986, %v3069
        %v3071 = vpop.f32.mrb[0].mxu0
        %v3072 = vadd.f32 %v1982, %v3071
        %v3073 = vpop.f32.mrb[0].mxu0
        %v3074 = vadd.f32 %v1986, %v3073
        %3075 = vmatprep.mubr.bf16.mxu0 %v1771
        %3076 = vmatmul.mubr.bf16.gmra.mrb[0].mxu0 %v1770
        %v3077 = vpop.f32.mrb[0].mxu0
        %v3078 = vadd.f32 %v1982, %v3077
        %v3079 = vpop.f32.mrb[0].mxu0
        %v3080 = vadd.f32 %v1986, %v3079
        %v3081 = vpop.f32.mrb[0].mxu0
        %v3082 = vadd.f32 %v1982, %v3081
        %v3083 = vpop.f32.mrb[0].mxu0
        %v3084 = vadd.f32 %v1986, %v3083
        %3085 = vmatprep.mubr.bf16.mxu0 %v1775
        %3086 = vmatmul.mubr.bf16.gmra.mrb[0].mxu0 %v1774
        %v3087 = vpop.f32.mrb[0].mxu0
        %v3088 = vadd.f32 %v1982, %v3087
        %v3089 = vpop.f32.mrb[0].mxu0
        %v3090 = vadd.f32 %v1986, %v3089
        %v3091 = vpop.f32.mrb[0].mxu0
        %v3092 = vadd.f32 %v1982, %v3091
        %v3093 = vpop.f32.mrb[0].mxu0
        %v3094 = vadd.f32 %v1986, %v3093
        %3095 = vmatprep.mubr.bf16.mxu0 %v1779
        %3096 = vmatmul.mubr.bf16.gmra.mrb[0].mxu0 %v1778
        %v3097 = vpop.f32.mrb[0].mxu0
        %v3098 = vadd.f32 %v1982, %v3097
        %v3099 = vpop.f32.mrb[0].mxu0
        %v3100 = vadd.f32 %v1986, %v3099
        %v3101 = vpop.f32.mrb[0].mxu0
        %v3102 = vadd.f32 %v1982, %v3101
        %v3103 = vpop.f32.mrb[0].mxu0
        %v3104 = vadd.f32 %v1986, %v3103
        %3105 = vmatprep.mubr.bf16.mxu0 %v1783
        %3106 = vmatmul.mubr.bf16.gmra.mrb[0].mxu0 %v1782
        %v3107 = vpop.f32.mrb[0].mxu0
        %v3108 = vadd.f32 %v1982, %v3107
        %v3109 = vpop.f32.mrb[0].mxu0
        %v3110 = vadd.f32 %v1986, %v3109
        %v3111 = vpop.f32.mrb[0].mxu0
        %v3112 = vadd.f32 %v1982, %v3111
        %v3113 = vpop.f32.mrb[0].mxu0
        %v3114 = vadd.f32 %v1986, %v3113
        %3115 = vmatprep.mubr.bf16.mxu0 %v1787
        %3116 = vmatmul.mubr.bf16.gmra.mrb[0].mxu0 %v1786
        %v3117 = vpop.f32.mrb[0].mxu0
        %v3118 = vadd.f32 %v1982, %v3117
        %v3119 = vpop.f32.mrb[0].mxu0
        %v3120 = vadd.f32 %v1986, %v3119
        %v3121 = vpop.f32.mrb[0].mxu0
        %v3122 = vadd.f32 %v1982, %v3121
        %v3123 = vpop.f32.mrb[0].mxu0
        %v3124 = vadd.f32 %v1986, %v3123
        %3125 = vmatprep.mubr.bf16.mxu0 %v1791
        %3126 = vmatmul.mubr.bf16.gmra.mrb[0].mxu0 %v1790
        %v3127 = vpop.f32.mrb[0].mxu0
        %v3128 = vadd.f32 %v1982, %v3127
        %v3129 = vpop.f32.mrb[0].mxu0
        %v3130 = vadd.f32 %v1986, %v3129
        %v3131 = vpop.f32.mrb[0].mxu0
        %v3132 = vadd.f32 %v1982, %v3131
        %v3133 = vpop.f32.mrb[0].mxu0
        %v3134 = vadd.f32 %v1986, %v3133
        %3135 = vmatprep.mubr.bf16.mxu0 %v1795
        %3136 = vmatmul.mubr.bf16.gmra.mrb[0].mxu0 %v1794
        %v3137 = vpop.f32.mrb[0].mxu0
        %v3138 = vadd.f32 %v1982, %v3137
        %v3139 = vpop.f32.mrb[0].mxu0
        %v3140 = vadd.f32 %v1986, %v3139
        %v3141 = vpop.f32.mrb[0].mxu0
        %v3142 = vadd.f32 %v1982, %v3141
        %v3143 = vpop.f32.mrb[0].mxu0
        %v3144 = vadd.f32 %v1986, %v3143
        %3145 = vmatprep.mubr.bf16.mxu0 %v1799
        %3146 = vmatmul.mubr.bf16.gmra.mrb[0].mxu0 %v1798
        %v3147 = vpop.f32.mrb[0].mxu0
        %v3148 = vadd.f32 %v1982, %v3147
        %v3149 = vpop.f32.mrb[0].mxu0
        %v3150 = vadd.f32 %v1986, %v3149
        %v3151 = vpop.f32.mrb[0].mxu0
        %v3152 = vadd.f32 %v1982, %v3151
        %v3153 = vpop.f32.mrb[0].mxu0
        %v3154 = vadd.f32 %v1986, %v3153
        %3155 = vmatprep.mubr.bf16.mxu0 %v1803
        %3156 = vmatmul.mubr.bf16.gmra.mrb[0].mxu0 %v1802
        %v3157 = vpop.f32.mrb[0].mxu0
        %v3158 = vadd.f32 %v1982, %v3157
        %v3159 = vpop.f32.mrb[0].mxu0
        %v3160 = vadd.f32 %v1986, %v3159
        %v3161 = vpop.f32.mrb[0].mxu0
        %v3162 = vadd.f32 %v1982, %v3161
        %v3163 = vpop.f32.mrb[0].mxu0
        %v3164 = vadd.f32 %v1986, %v3163
        %3165 = vmatprep.mubr.bf16.mxu0 %v1807
        %3166 = vmatmul.mubr.bf16.gmra.mrb[0].mxu0 %v1806
        %v3167 = vpop.f32.mrb[0].mxu0
        %v3168 = vadd.f32 %v1982, %v3167
        %v3169 = vpop.f32.mrb[0].mxu0
        %v3170 = vadd.f32 %v1986, %v3169
        %v3171 = vpop.f32.mrb[0].mxu0
        %v3172 = vadd.f32 %v1982, %v3171
        %v3173 = vpop.f32.mrb[0].mxu0
        %v3174 = vadd.f32 %v1986, %v3173
        %3175 = vmatprep.mubr.bf16.mxu0 %v1811
        %3176 = vmatmul.mubr.bf16.gmra.mrb[0].mxu0 %v1810
        %v3177 = vpop.f32.mrb[0].mxu0
        %v3178 = vadd.f32 %v1982, %v3177
        %v3179 = vpop.f32.mrb[0].mxu0
        %v3180 = vadd.f32 %v1986, %v3179
        %v3181 = vpop.f32.mrb[0].mxu0
        %v3182 = vadd.f32 %v1982, %v3181
        %v3183 = vpop.f32.mrb[0].mxu0
        %v3184 = vadd.f32 %v1986, %v3183
        %3185 = vmatprep.mubr.bf16.mxu0 %v1815
        %3186 = vmatmul.mubr.bf16.gmra.mrb[0].mxu0 %v1814
        %v3187 = vpop.f32.mrb[0].mxu0
        %v3188 = vadd.f32 %v1982, %v3187
        %v3189 = vpop.f32.mrb[0].mxu0
        %v3190 = vadd.f32 %v1986, %v3189
        %v3191 = vpop.f32.mrb[0].mxu0
        %v3192 = vadd.f32 %v1982, %v3191
        %v3193 = vpop.f32.mrb[0].mxu0
        %v3194 = vadd.f32 %v1986, %v3193
        %3195 = vmatprep.mubr.bf16.mxu0 %v1819
        %3196 = vmatmul.mubr.bf16.gmra.mrb[0].mxu0 %v1818
        %v3197 = vpop.f32.mrb[0].mxu0
        %v3198 = vadd.f32 %v1982, %v3197
        %v3199 = vpop.f32.mrb[0].mxu0
        %v3200 = vadd.f32 %v1986, %v3199
        %v3201 = vpop.f32.mrb[0].mxu0
        %v3202 = vadd.f32 %v1982, %v3201
        %v3203 = vpop.f32.mrb[0].mxu0
        %v3204 = vadd.f32 %v1986, %v3203
        %3205 = vdwg.mxu0
        %3206 = vmatprep.subr.bf16.mxu0 %v2438
        %3207 = vmatpush1.bf16.msra.mxu0 %v2437
        %3208 = vmatprep.subr.bf16.mxu0 %v2442
        %3209 = vmatpush1.bf16.msra.mxu0 %v2441
        %3210 = vmatprep.subr.bf16.mxu0 %v2446
        %3211 = vmatpush1.bf16.msra.mxu0 %v2445
        %3212 = vmatprep.subr.bf16.mxu0 %v2450
        %3213 = vmatpush1.bf16.msra.mxu0 %v2449
        %3214 = vmatprep.subr.bf16.mxu0 %v2454
        %3215 = vmatpush1.bf16.msra.mxu0 %v2453
        %3216 = vmatprep.subr.bf16.mxu0 %v2458
        %3217 = vmatpush1.bf16.msra.mxu0 %v2457
        %3218 = vmatprep.subr.bf16.mxu0 %v2462
        %3219 = vmatpush1.bf16.msra.mxu0 %v2461
        %3220 = vmatprep.subr.bf16.mxu0 %v2466
        %3221 = vmatpush1.bf16.msra.mxu0 %v2465
        %3222 = vmatprep.subr.bf16.mxu0 %v2470
        %3223 = vmatpush1.bf16.msra.mxu0 %v2469
        %3224 = vmatprep.subr.bf16.mxu0 %v2474
        %3225 = vmatpush1.bf16.msra.mxu0 %v2473
        %3226 = vmatprep.subr.bf16.mxu0 %v2478
        %3227 = vmatpush1.bf16.msra.mxu0 %v2477
        %3228 = vmatprep.subr.bf16.mxu0 %v2482
        %3229 = vmatpush1.bf16.msra.mxu0 %v2481
        %3230 = vmatprep.subr.bf16.mxu0 %v2486
        %3231 = vmatpush1.bf16.msra.mxu0 %v2485
        %3232 = vmatprep.subr.bf16.mxu0 %v2490
        %3233 = vmatpush1.bf16.msra.mxu0 %v2489
        %3234 = vmatprep.subr.bf16.mxu0 %v2494
        %3235 = vmatpush1.bf16.msra.mxu0 %v2493
        %3236 = vmatprep.subr.bf16.mxu0 %v2498
        %3237 = vmatpush1.bf16.msra.mxu0 %v2497
        %3238 = vmatprep.mubr.bf16.mxu0 %v1761
        %3239 = vmatmul.mubr.bf16.gmra.mrb[0].mxu0 %v1760
        %v3240 = vpop.f32.mrb[0].mxu0
        %v3241 = vadd.f32 %v3048, %v3240
        %v3242 = vpop.f32.mrb[0].mxu0
        %v3243 = vadd.f32 %v3050, %v3242
        %v3244 = vpop.f32.mrb[0].mxu0
        %v3245 = vadd.f32 %v3052, %v3244
        %v3246 = vpop.f32.mrb[0].mxu0
        %v3247 = vadd.f32 %v3054, %v3246
        %3248 = vmatprep.mubr.bf16.mxu0 %v1765
        %3249 = vmatmul.mubr.bf16.gmra.mrb[0].mxu0 %v1764
        %v3250 = vpop.f32.mrb[0].mxu0
        %v3251 = vadd.f32 %v3058, %v3250
        %v3252 = vpop.f32.mrb[0].mxu0
        %v3253 = vadd.f32 %v3060, %v3252
        %v3254 = vpop.f32.mrb[0].mxu0
        %v3255 = vadd.f32 %v3062, %v3254
        %v3256 = vpop.f32.mrb[0].mxu0
        %v3257 = vadd.f32 %v3064, %v3256
        %3258 = vmatprep.mubr.bf16.mxu0 %v1769
        %3259 = vmatmul.mubr.bf16.gmra.mrb[0].mxu0 %v1768
        %v3260 = vpop.f32.mrb[0].mxu0
        %v3261 = vadd.f32 %v3068, %v3260
        %v3262 = vpop.f32.mrb[0].mxu0
        %v3263 = vadd.f32 %v3070, %v3262
        %v3264 = vpop.f32.mrb[0].mxu0
        %v3265 = vadd.f32 %v3072, %v3264
        %v3266 = vpop.f32.mrb[0].mxu0
        %v3267 = vadd.f32 %v3074, %v3266
        %3268 = vmatprep.mubr.bf16.mxu0 %v1773
        %3269 = vmatmul.mubr.bf16.gmra.mrb[0].mxu0 %v1772
        %v3270 = vpop.f32.mrb[0].mxu0
        %v3271 = vadd.f32 %v3078, %v3270
        %v3272 = vpop.f32.mrb[0].mxu0
        %v3273 = vadd.f32 %v3080, %v3272
        %v3274 = vpop.f32.mrb[0].mxu0
        %v3275 = vadd.f32 %v3082, %v3274
        %v3276 = vpop.f32.mrb[0].mxu0
        %v3277 = vadd.f32 %v3084, %v3276
        %3278 = vmatprep.mubr.bf16.mxu0 %v1777
        %3279 = vmatmul.mubr.bf16.gmra.mrb[0].mxu0 %v1776
        %v3280 = vpop.f32.mrb[0].mxu0
        %v3281 = vadd.f32 %v3088, %v3280
        %v3282 = vpop.f32.mrb[0].mxu0
        %v3283 = vadd.f32 %v3090, %v3282
        %v3284 = vpop.f32.mrb[0].mxu0
        %v3285 = vadd.f32 %v3092, %v3284
        %v3286 = vpop.f32.mrb[0].mxu0
        %v3287 = vadd.f32 %v3094, %v3286
        %3288 = vmatprep.mubr.bf16.mxu0 %v1781
        %3289 = vmatmul.mubr.bf16.gmra.mrb[0].mxu0 %v1780
        %v3290 = vpop.f32.mrb[0].mxu0
        %v3291 = vadd.f32 %v3098, %v3290
        %v3292 = vpop.f32.mrb[0].mxu0
        %v3293 = vadd.f32 %v3100, %v3292
        %v3294 = vpop.f32.mrb[0].mxu0
        %v3295 = vadd.f32 %v3102, %v3294
        %v3296 = vpop.f32.mrb[0].mxu0
        %v3297 = vadd.f32 %v3104, %v3296
        %3298 = vmatprep.mubr.bf16.mxu0 %v1785
        %3299 = vmatmul.mubr.bf16.gmra.mrb[0].mxu0 %v1784
        %v3300 = vpop.f32.mrb[0].mxu0
        %v3301 = vadd.f32 %v3108, %v3300
        %v3302 = vpop.f32.mrb[0].mxu0
        %v3303 = vadd.f32 %v3110, %v3302
        %v3304 = vpop.f32.mrb[0].mxu0
        %v3305 = vadd.f32 %v3112, %v3304
        %v3306 = vpop.f32.mrb[0].mxu0
        %v3307 = vadd.f32 %v3114, %v3306
        %3308 = vmatprep.mubr.bf16.mxu0 %v1789
        %3309 = vmatmul.mubr.bf16.gmra.mrb[0].mxu0 %v1788
        %v3310 = vpop.f32.mrb[0].mxu0
        %v3311 = vadd.f32 %v3118, %v3310
        %v3312 = vpop.f32.mrb[0].mxu0
        %v3313 = vadd.f32 %v3120, %v3312
        %v3314 = vpop.f32.mrb[0].mxu0
        %v3315 = vadd.f32 %v3122, %v3314
        %v3316 = vpop.f32.mrb[0].mxu0
        %v3317 = vadd.f32 %v3124, %v3316
        %3318 = vmatprep.mubr.bf16.mxu0 %v1793
        %3319 = vmatmul.mubr.bf16.gmra.mrb[0].mxu0 %v1792
        %v3320 = vpop.f32.mrb[0].mxu0
        %v3321 = vadd.f32 %v3128, %v3320
        %v3322 = vpop.f32.mrb[0].mxu0
        %v3323 = vadd.f32 %v3130, %v3322
        %v3324 = vpop.f32.mrb[0].mxu0
        %v3325 = vadd.f32 %v3132, %v3324
        %v3326 = vpop.f32.mrb[0].mxu0
        %v3327 = vadd.f32 %v3134, %v3326
        %3328 = vmatprep.mubr.bf16.mxu0 %v1797
        %3329 = vmatmul.mubr.bf16.gmra.mrb[0].mxu0 %v1796
        %v3330 = vpop.f32.mrb[0].mxu0
        %v3331 = vadd.f32 %v3138, %v3330
        %v3332 = vpop.f32.mrb[0].mxu0
        %v3333 = vadd.f32 %v3140, %v3332
        %v3334 = vpop.f32.mrb[0].mxu0
        %v3335 = vadd.f32 %v3142, %v3334
        %v3336 = vpop.f32.mrb[0].mxu0
        %v3337 = vadd.f32 %v3144, %v3336
        %3338 = vmatprep.mubr.bf16.mxu0 %v1801
        %3339 = vmatmul.mubr.bf16.gmra.mrb[0].mxu0 %v1800
        %v3340 = vpop.f32.mrb[0].mxu0
        %v3341 = vadd.f32 %v3148, %v3340
        %v3342 = vpop.f32.mrb[0].mxu0
        %v3343 = vadd.f32 %v3150, %v3342
        %v3344 = vpop.f32.mrb[0].mxu0
        %v3345 = vadd.f32 %v3152, %v3344
        %v3346 = vpop.f32.mrb[0].mxu0
        %v3347 = vadd.f32 %v3154, %v3346
        %3348 = vmatprep.mubr.bf16.mxu0 %v1805
        %3349 = vmatmul.mubr.bf16.gmra.mrb[0].mxu0 %v1804
        %v3350 = vpop.f32.mrb[0].mxu0
        %v3351 = vadd.f32 %v3158, %v3350
        %v3352 = vpop.f32.mrb[0].mxu0
        %v3353 = vadd.f32 %v3160, %v3352
        %v3354 = vpop.f32.mrb[0].mxu0
        %v3355 = vadd.f32 %v3162, %v3354
        %v3356 = vpop.f32.mrb[0].mxu0
        %v3357 = vadd.f32 %v3164, %v3356
        %3358 = vmatprep.mubr.bf16.mxu0 %v1809
        %3359 = vmatmul.mubr.bf16.gmra.mrb[0].mxu0 %v1808
        %v3360 = vpop.f32.mrb[0].mxu0
        %v3361 = vadd.f32 %v3168, %v3360
        %v3362 = vpop.f32.mrb[0].mxu0
        %v3363 = vadd.f32 %v3170, %v3362
        %v3364 = vpop.f32.mrb[0].mxu0
        %v3365 = vadd.f32 %v3172, %v3364
        %v3366 = vpop.f32.mrb[0].mxu0
        %v3367 = vadd.f32 %v3174, %v3366
        %3368 = vmatprep.mubr.bf16.mxu0 %v1813
        %3369 = vmatmul.mubr.bf16.gmra.mrb[0].mxu0 %v1812
        %v3370 = vpop.f32.mrb[0].mxu0
        %v3371 = vadd.f32 %v3178, %v3370
        %v3372 = vpop.f32.mrb[0].mxu0
        %v3373 = vadd.f32 %v3180, %v3372
        %v3374 = vpop.f32.mrb[0].mxu0
        %v3375 = vadd.f32 %v3182, %v3374
        %v3376 = vpop.f32.mrb[0].mxu0
        %v3377 = vadd.f32 %v3184, %v3376
        %3378 = vmatprep.mubr.bf16.mxu0 %v1817
        %3379 = vmatmul.mubr.bf16.gmra.mrb[0].mxu0 %v1816
        %v3380 = vpop.f32.mrb[0].mxu0
        %v3381 = vadd.f32 %v3188, %v3380
        %v3382 = vpop.f32.mrb[0].mxu0
        %v3383 = vadd.f32 %v3190, %v3382
        %v3384 = vpop.f32.mrb[0].mxu0
        %v3385 = vadd.f32 %v3192, %v3384
        %v3386 = vpop.f32.mrb[0].mxu0
        %v3387 = vadd.f32 %v3194, %v3386
        %3388 = vmatprep.mubr.bf16.mxu0 %v1821
        %3389 = vmatmul.mubr.bf16.gmra.mrb[0].mxu0 %v1820
        %v3390 = vpop.f32.mrb[0].mxu0
        %v3391 = vadd.f32 %v3198, %v3390
        %v3392 = vpop.f32.mrb[0].mxu0
        %v3393 = vadd.f32 %v3200, %v3392
        %v3394 = vpop.f32.mrb[0].mxu0
        %v3395 = vadd.f32 %v3202, %v3394
        %v3396 = vpop.f32.mrb[0].mxu0
        %v3397 = vadd.f32 %v3204, %v3396
        %3398 = vdwg.mxu0
        %v3399 = vpack.c.bf16 %v2859, %v2855
        %v3400 = vpack.c.bf16 %v2861, %v2857
        %v3401 = vpack.c.bf16 %v3245, %v3241
        %v3402 = vpack.c.bf16 %v3247, %v3243
        %v3403 = vpack.c.bf16 %v2869, %v2865
        %v3404 = vpack.c.bf16 %v2871, %v2867
        %v3405 = vpack.c.bf16 %v3255, %v3251
        %v3406 = vpack.c.bf16 %v3257, %v3253
        %v3407 = vpack.c.bf16 %v2879, %v2875
        %v3408 = vpack.c.bf16 %v2881, %v2877
        %v3409 = vpack.c.bf16 %v3265, %v3261
        %v3410 = vpack.c.bf16 %v3267, %v3263
        %v3411 = vpack.c.bf16 %v2889, %v2885
        %v3412 = vpack.c.bf16 %v2891, %v2887
        %v3413 = vpack.c.bf16 %v3275, %v3271
        %v3414 = vpack.c.bf16 %v3277, %v3273
        %v3415 = vpack.c.bf16 %v2899, %v2895
        %v3416 = vpack.c.bf16 %v2901, %v2897
        %v3417 = vpack.c.bf16 %v3285, %v3281
        %v3418 = vpack.c.bf16 %v3287, %v3283
        %v3419 = vpack.c.bf16 %v2909, %v2905
        %v3420 = vpack.c.bf16 %v2911, %v2907
        %v3421 = vpack.c.bf16 %v3295, %v3291
        %v3422 = vpack.c.bf16 %v3297, %v3293
        %v3423 = vpack.c.bf16 %v2919, %v2915
        %v3424 = vpack.c.bf16 %v2921, %v2917
        %v3425 = vpack.c.bf16 %v3305, %v3301
        %v3426 = vpack.c.bf16 %v3307, %v3303
        %v3427 = vpack.c.bf16 %v2929, %v2925
        %v3428 = vpack.c.bf16 %v2931, %v2927
        %v3429 = vpack.c.bf16 %v3315, %v3311
        %v3430 = vpack.c.bf16 %v3317, %v3313
        %v3431 = vpack.c.bf16 %v2939, %v2935
        %v3432 = vpack.c.bf16 %v2941, %v2937
        %v3433 = vpack.c.bf16 %v3325, %v3321
        %v3434 = vpack.c.bf16 %v3327, %v3323
        %v3435 = vpack.c.bf16 %v2949, %v2945
        %v3436 = vpack.c.bf16 %v2951, %v2947
        %v3437 = vpack.c.bf16 %v3335, %v3331
        %v3438 = vpack.c.bf16 %v3337, %v3333
        %v3439 = vpack.c.bf16 %v2959, %v2955
        %v3440 = vpack.c.bf16 %v2961, %v2957
        %v3441 = vpack.c.bf16 %v3345, %v3341
        %v3442 = vpack.c.bf16 %v3347, %v3343
        %v3443 = vpack.c.bf16 %v2969, %v2965
        %v3444 = vpack.c.bf16 %v2971, %v2967
        %v3445 = vpack.c.bf16 %v3355, %v3351
        %v3446 = vpack.c.bf16 %v3357, %v3353
        %v3447 = vpack.c.bf16 %v2979, %v2975
        %v3448 = vpack.c.bf16 %v2981, %v2977
        %v3449 = vpack.c.bf16 %v3365, %v3361
        %v3450 = vpack.c.bf16 %v3367, %v3363
        %v3451 = vpack.c.bf16 %v2989, %v2985
        %v3452 = vpack.c.bf16 %v2991, %v2987
        %v3453 = vpack.c.bf16 %v3375, %v3371
        %v3454 = vpack.c.bf16 %v3377, %v3373
        %v3455 = vpack.c.bf16 %v2999, %v2995
        %v3456 = vpack.c.bf16 %v3001, %v2997
        %v3457 = vpack.c.bf16 %v3385, %v3381
        %v3458 = vpack.c.bf16 %v3387, %v3383
        %v3459 = vpack.c.bf16 %v3009, %v3005
        %v3460 = vpack.c.bf16 %v3011, %v3007
        %v3461 = vpack.c.bf16 %v3395, %v3391
        %v3462 = vpack.c.bf16 %v3397, %v3393
        %v3463 = vtanh.bf16.pop %v3399
        %v3464 = vtanh.bf16.pop %v3400
        %v3465 = vtanh.bf16.pop %v3401
        %v3466 = vtanh.bf16.pop %v3402
        %v3467 = vtanh.bf16.pop %v3403
        %v3468 = vtanh.bf16.pop %v3404
        %v3469 = vtanh.bf16.pop %v3405
        %v3470 = vtanh.bf16.pop %v3406
        %v3471 = vtanh.bf16.pop %v3407
        %v3472 = vtanh.bf16.pop %v3408
        %v3473 = vtanh.bf16.pop %v3409
        %v3474 = vtanh.bf16.pop %v3410
        %v3475 = vtanh.bf16.pop %v3411
        %v3476 = vtanh.bf16.pop %v3412
        %v3477 = vtanh.bf16.pop %v3413
        %v3478 = vtanh.bf16.pop %v3414
        %v3479 = vtanh.bf16.pop %v3415
        %v3480 = vtanh.bf16.pop %v3416
        %v3481 = vtanh.bf16.pop %v3417
        %v3482 = vtanh.bf16.pop %v3418
        %v3483 = vtanh.bf16.pop %v3419
        %v3484 = vtanh.bf16.pop %v3420
        %v3485 = vtanh.bf16.pop %v3421
        %v3486 = vtanh.bf16.pop %v3422
        %v3487 = vtanh.bf16.pop %v3423
        %v3488 = vtanh.bf16.pop %v3424
        %v3489 = vtanh.bf16.pop %v3425
        %v3490 = vtanh.bf16.pop %v3426
        %v3491 = vtanh.bf16.pop %v3427
        %v3492 = vtanh.bf16.pop %v3428
        %v3493 = vtanh.bf16.pop %v3429
        %v3494 = vtanh.bf16.pop %v3430
        %v3495 = vtanh.bf16.pop %v3431
        %v3496 = vtanh.bf16.pop %v3432
        %v3497 = vtanh.bf16.pop %v3433
        %v3498 = vtanh.bf16.pop %v3434
        %v3499 = vtanh.bf16.pop %v3435
        %v3500 = vtanh.bf16.pop %v3436
        %v3501 = vtanh.bf16.pop %v3437
        %v3502 = vtanh.bf16.pop %v3438
        %v3503 = vtanh.bf16.pop %v3439
        %v3504 = vtanh.bf16.pop %v3440
        %v3505 = vtanh.bf16.pop %v3441
        %v3506 = vtanh.bf16.pop %v3442
        %v3507 = vtanh.bf16.pop %v3443
        %v3508 = vtanh.bf16.pop %v3444
        %v3509 = vtanh.bf16.pop %v3445
        %v3510 = vtanh.bf16.pop %v3446
        %v3511 = vtanh.bf16.pop %v3447
        %v3512 = vtanh.bf16.pop %v3448
        %v3513 = vtanh.bf16.pop %v3449
        %v3514 = vtanh.bf16.pop %v3450
        %v3515 = vtanh.bf16.pop %v3451
        %v3516 = vtanh.bf16.pop %v3452
        %v3517 = vtanh.bf16.pop %v3453
        %v3518 = vtanh.bf16.pop %v3454
        %v3519 = vtanh.bf16.pop %v3455
        %v3520 = vtanh.bf16.pop %v3456
        %v3521 = vtanh.bf16.pop %v3457
        %v3522 = vtanh.bf16.pop %v3458
        %v3523 = vtanh.bf16.pop %v3459
        %v3524 = vtanh.bf16.pop %v3460
        %v3525 = vtanh.bf16.pop %v3461
        %v3526 = vtanh.bf16.pop %v3462
        %s3527 = scalar_lea.vmem %s376, 1024 [#allocation9]
        %v3528 = vld [vmem:[%s3527] sm:$0xff]
        %v3529 = vld [vmem:[%s3527 + $0x8] sm:$0xff]
        %v3530 = vld [vmem:[%s3527 + $0x10] sm:$0xff]
        %v3531 = vld [vmem:[%s3527 + $0x18] sm:$0xff]
        %v3532 = vld [vmem:[%s3527 + $0x20] sm:$0xff]
        %v3533 = vld [vmem:[%s3527 + $0x28] sm:$0xff]
        %v3534 = vld [vmem:[%s3527 + $0x30] sm:$0xff]
        %v3535 = vld [vmem:[%s3527 + $0x38] sm:$0xff]
        %v3536 = vld [vmem:[%s3527 + $0x40] sm:$0xff]
        %v3537 = vld [vmem:[%s3527 + $0x48] sm:$0xff]
        %v3538 = vld [vmem:[%s3527 + $0x50] sm:$0xff]
        %v3539 = vld [vmem:[%s3527 + $0x58] sm:$0xff]
        %v3540 = vld [vmem:[%s3527 + $0x60] sm:$0xff]
        %v3541 = vld [vmem:[%s3527 + $0x68] sm:$0xff]
        %v3542 = vld [vmem:[%s3527 + $0x70] sm:$0xff]
        %v3543 = vld [vmem:[%s3527 + $0x78] sm:$0xff]
        %v3544 = vld [vmem:[%s3527 + $0x80] sm:$0xff]
        %v3545 = vld [vmem:[%s3527 + $0x88] sm:$0xff]
        %v3546 = vld [vmem:[%s3527 + $0x90] sm:$0xff]
        %v3547 = vld [vmem:[%s3527 + $0x98] sm:$0xff]
        %v3548 = vld [vmem:[%s3527 + $0xa0] sm:$0xff]
        %v3549 = vld [vmem:[%s3527 + $0xa8] sm:$0xff]
        %v3550 = vld [vmem:[%s3527 + $0xb0] sm:$0xff]
        %v3551 = vld [vmem:[%s3527 + $0xb8] sm:$0xff]
        %v3552 = vld [vmem:[%s3527 + $0xc0] sm:$0xff]
        %v3553 = vld [vmem:[%s3527 + $0xc8] sm:$0xff]
        %v3554 = vld [vmem:[%s3527 + $0xd0] sm:$0xff]
        %v3555 = vld [vmem:[%s3527 + $0xd8] sm:$0xff]
        %v3556 = vld [vmem:[%s3527 + $0xe0] sm:$0xff]
        %v3557 = vld [vmem:[%s3527 + $0xe8] sm:$0xff]
        %v3558 = vld [vmem:[%s3527 + $0xf0] sm:$0xff]
        %v3559 = vld [vmem:[%s3527 + $0xf8] sm:$0xff]
        %v3560 = vld [vmem:[%s3527 + $0x100] sm:$0xff]
        %v3561 = vld [vmem:[%s3527 + $0x108] sm:$0xff]
        %v3562 = vld [vmem:[%s3527 + $0x110] sm:$0xff]
        %v3563 = vld [vmem:[%s3527 + $0x118] sm:$0xff]
        %v3564 = vld [vmem:[%s3527 + $0x120] sm:$0xff]
        %v3565 = vld [vmem:[%s3527 + $0x128] sm:$0xff]
        %v3566 = vld [vmem:[%s3527 + $0x130] sm:$0xff]
        %v3567 = vld [vmem:[%s3527 + $0x138] sm:$0xff]
        %v3568 = vld [vmem:[%s3527 + $0x140] sm:$0xff]
        %v3569 = vld [vmem:[%s3527 + $0x148] sm:$0xff]
        %v3570 = vld [vmem:[%s3527 + $0x150] sm:$0xff]
        %v3571 = vld [vmem:[%s3527 + $0x158] sm:$0xff]
        %v3572 = vld [vmem:[%s3527 + $0x160] sm:$0xff]
        %v3573 = vld [vmem:[%s3527 + $0x168] sm:$0xff]
        %v3574 = vld [vmem:[%s3527 + $0x170] sm:$0xff]
        %v3575 = vld [vmem:[%s3527 + $0x178] sm:$0xff]
        %v3576 = vld [vmem:[%s3527 + $0x180] sm:$0xff]
        %v3577 = vld [vmem:[%s3527 + $0x188] sm:$0xff]
        %v3578 = vld [vmem:[%s3527 + $0x190] sm:$0xff]
        %v3579 = vld [vmem:[%s3527 + $0x198] sm:$0xff]
        %v3580 = vld [vmem:[%s3527 + $0x1a0] sm:$0xff]
        %v3581 = vld [vmem:[%s3527 + $0x1a8] sm:$0xff]
        %v3582 = vld [vmem:[%s3527 + $0x1b0] sm:$0xff]
        %v3583 = vld [vmem:[%s3527 + $0x1b8] sm:$0xff]
        %v3584 = vld [vmem:[%s3527 + $0x1c0] sm:$0xff]
        %v3585 = vld [vmem:[%s3527 + $0x1c8] sm:$0xff]
        %v3586 = vld [vmem:[%s3527 + $0x1d0] sm:$0xff]
        %v3587 = vld [vmem:[%s3527 + $0x1d8] sm:$0xff]
        %v3588 = vld [vmem:[%s3527 + $0x1e0] sm:$0xff]
        %v3589 = vld [vmem:[%s3527 + $0x1e8] sm:$0xff]
        %v3590 = vld [vmem:[%s3527 + $0x1f0] sm:$0xff]
        %v3591 = vld [vmem:[%s3527 + $0x1f8] sm:$0xff]
        %v3592 = vld [vmem:[%s3527 + $0x200] sm:$0xff]
        %v3593 = vld [vmem:[%s3527 + $0x208] sm:$0xff]
        %v3594 = vld [vmem:[%s3527 + $0x210] sm:$0xff]
        %v3595 = vld [vmem:[%s3527 + $0x218] sm:$0xff]
        %v3596 = vld [vmem:[%s3527 + $0x220] sm:$0xff]
        %v3597 = vld [vmem:[%s3527 + $0x228] sm:$0xff]
        %v3598 = vld [vmem:[%s3527 + $0x230] sm:$0xff]
        %v3599 = vld [vmem:[%s3527 + $0x238] sm:$0xff]
        %v3600 = vld [vmem:[%s3527 + $0x240] sm:$0xff]
        %v3601 = vld [vmem:[%s3527 + $0x248] sm:$0xff]
        %v3602 = vld [vmem:[%s3527 + $0x250] sm:$0xff]
        %v3603 = vld [vmem:[%s3527 + $0x258] sm:$0xff]
        %v3604 = vld [vmem:[%s3527 + $0x260] sm:$0xff]
        %v3605 = vld [vmem:[%s3527 + $0x268] sm:$0xff]
        %v3606 = vld [vmem:[%s3527 + $0x270] sm:$0xff]
        %v3607 = vld [vmem:[%s3527 + $0x278] sm:$0xff]
        %v3608 = vld [vmem:[%s3527 + $0x280] sm:$0xff]
        %v3609 = vld [vmem:[%s3527 + $0x288] sm:$0xff]
        %v3610 = vld [vmem:[%s3527 + $0x290] sm:$0xff]
        %v3611 = vld [vmem:[%s3527 + $0x298] sm:$0xff]
        %v3612 = vld [vmem:[%s3527 + $0x2a0] sm:$0xff]
        %v3613 = vld [vmem:[%s3527 + $0x2a8] sm:$0xff]
        %v3614 = vld [vmem:[%s3527 + $0x2b0] sm:$0xff]
        %v3615 = vld [vmem:[%s3527 + $0x2b8] sm:$0xff]
        %v3616 = vld [vmem:[%s3527 + $0x2c0] sm:$0xff]
        %v3617 = vld [vmem:[%s3527 + $0x2c8] sm:$0xff]
        %v3618 = vld [vmem:[%s3527 + $0x2d0] sm:$0xff]
        %v3619 = vld [vmem:[%s3527 + $0x2d8] sm:$0xff]
        %v3620 = vld [vmem:[%s3527 + $0x2e0] sm:$0xff]
        %v3621 = vld [vmem:[%s3527 + $0x2e8] sm:$0xff]
        %v3622 = vld [vmem:[%s3527 + $0x2f0] sm:$0xff]
        %v3623 = vld [vmem:[%s3527 + $0x2f8] sm:$0xff]
        %v3624 = vld [vmem:[%s3527 + $0x300] sm:$0xff]
        %v3625 = vld [vmem:[%s3527 + $0x308] sm:$0xff]
        %v3626 = vld [vmem:[%s3527 + $0x310] sm:$0xff]
        %v3627 = vld [vmem:[%s3527 + $0x318] sm:$0xff]
        %v3628 = vld [vmem:[%s3527 + $0x320] sm:$0xff]
        %v3629 = vld [vmem:[%s3527 + $0x328] sm:$0xff]
        %v3630 = vld [vmem:[%s3527 + $0x330] sm:$0xff]
        %v3631 = vld [vmem:[%s3527 + $0x338] sm:$0xff]
        %v3632 = vld [vmem:[%s3527 + $0x340] sm:$0xff]
        %v3633 = vld [vmem:[%s3527 + $0x348] sm:$0xff]
        %v3634 = vld [vmem:[%s3527 + $0x350] sm:$0xff]
        %v3635 = vld [vmem:[%s3527 + $0x358] sm:$0xff]
        %v3636 = vld [vmem:[%s3527 + $0x360] sm:$0xff]
        %v3637 = vld [vmem:[%s3527 + $0x368] sm:$0xff]
        %v3638 = vld [vmem:[%s3527 + $0x370] sm:$0xff]
        %v3639 = vld [vmem:[%s3527 + $0x378] sm:$0xff]
        %v3640 = vld [vmem:[%s3527 + $0x380] sm:$0xff]
        %v3641 = vld [vmem:[%s3527 + $0x388] sm:$0xff]
        %v3642 = vld [vmem:[%s3527 + $0x390] sm:$0xff]
        %v3643 = vld [vmem:[%s3527 + $0x398] sm:$0xff]
        %v3644 = vld [vmem:[%s3527 + $0x3a0] sm:$0xff]
        %v3645 = vld [vmem:[%s3527 + $0x3a8] sm:$0xff]
        %v3646 = vld [vmem:[%s3527 + $0x3b0] sm:$0xff]
        %v3647 = vld [vmem:[%s3527 + $0x3b8] sm:$0xff]
        %v3648 = vld [vmem:[%s3527 + $0x3c0] sm:$0xff]
        %v3649 = vld [vmem:[%s3527 + $0x3c8] sm:$0xff]
        %v3650 = vld [vmem:[%s3527 + $0x3d0] sm:$0xff]
        %v3651 = vld [vmem:[%s3527 + $0x3d8] sm:$0xff]
        %v3652 = vld [vmem:[%s3527 + $0x3e0] sm:$0xff]
        %v3653 = vld [vmem:[%s3527 + $0x3e8] sm:$0xff]
        %v3654 = vld [vmem:[%s3527 + $0x3f0] sm:$0xff]
        %v3655 = vld [vmem:[%s3527 + $0x3f8] sm:$0xff]
        %v3656 = vlaneseq
        %v3657 = vshrl.u32 %v3656, 7
        %v3658 = vsub.s32 1, %v3657
        %v3659 = vrot.slane %v1307, %v3658
        %v3660 = vlaneseq
        %v3661 = vshrl.u32 %v3660, 7
        %v3662 = vsub.s32 3, %v3661
        %v3663 = vrot.slane %v1307, %v3662
        %v3664 = vlaneseq
        %v3665 = vshrl.u32 %v3664, 7
        %v3666 = vsub.s32 5, %v3665
        %v3667 = vrot.slane %v1307, %v3666
        %v3668 = vlaneseq
        %v3669 = vshrl.u32 %v3668, 7
        %v3670 = vsub.s32 7, %v3669
        %v3671 = vrot.slane %v1307, %v3670
        %v3676 = vlaneseq
        %v3677 = vshrl.u32 %v3676, 7
        %v3678 = vsub.s32 1, %v3677
        %v3679 = vrot.slane %v3659, %v3678
        %v3680 = vlaneseq
        %v3681 = vshrl.u32 %v3680, 7
        %v3682 = vsub.s32 1, %v3681
        %v3683 = vrot.slane %v3663, %v3682
        %v3684 = vlaneseq
        %v3685 = vshrl.u32 %v3684, 7
        %v3686 = vsub.s32 1, %v3685
        %v3687 = vrot.slane %v3667, %v3686
        %v3688 = vlaneseq
        %v3689 = vshrl.u32 %v3688, 7
        %v3690 = vsub.s32 1, %v3689
        %v3691 = vrot.slane %v3671, %v3690
        %v3820 = vunpack.c.l.b16 %v3528
        %v3821 = vunpack.c.h.b16 %v3528
        %v3822 = vunpack.c.l.b16 %v3529
        %v3823 = vunpack.c.h.b16 %v3529
        %v3824 = vunpack.c.l.b16 %v3530
        %v3825 = vunpack.c.h.b16 %v3530
        %v3826 = vunpack.c.l.b16 %v3531
        %v3827 = vunpack.c.h.b16 %v3531
        %v3828 = vunpack.c.l.b16 %v3532
        %v3829 = vunpack.c.h.b16 %v3532
        %v3830 = vunpack.c.l.b16 %v3533
        %v3831 = vunpack.c.h.b16 %v3533
        %v3832 = vunpack.c.l.b16 %v3534
        %v3833 = vunpack.c.h.b16 %v3534
        %v3834 = vunpack.c.l.b16 %v3535
        %v3835 = vunpack.c.h.b16 %v3535
        %v3836 = vunpack.c.l.b16 %v3536
        %v3837 = vunpack.c.h.b16 %v3536
        %v3838 = vunpack.c.l.b16 %v3537
        %v3839 = vunpack.c.h.b16 %v3537
        %v3840 = vunpack.c.l.b16 %v3538
        %v3841 = vunpack.c.h.b16 %v3538
        %v3842 = vunpack.c.l.b16 %v3539
        %v3843 = vunpack.c.h.b16 %v3539
        %v3844 = vunpack.c.l.b16 %v3540
        %v3845 = vunpack.c.h.b16 %v3540
        %v3846 = vunpack.c.l.b16 %v3541
        %v3847 = vunpack.c.h.b16 %v3541
        %v3848 = vunpack.c.l.b16 %v3542
        %v3849 = vunpack.c.h.b16 %v3542
        %v3850 = vunpack.c.l.b16 %v3543
        %v3851 = vunpack.c.h.b16 %v3543
        %v3852 = vunpack.c.l.b16 %v3544
        %v3853 = vunpack.c.h.b16 %v3544
        %v3854 = vunpack.c.l.b16 %v3545
        %v3855 = vunpack.c.h.b16 %v3545
        %v3856 = vunpack.c.l.b16 %v3546
        %v3857 = vunpack.c.h.b16 %v3546
        %v3858 = vunpack.c.l.b16 %v3547
        %v3859 = vunpack.c.h.b16 %v3547
        %v3860 = vunpack.c.l.b16 %v3548
        %v3861 = vunpack.c.h.b16 %v3548
        %v3862 = vunpack.c.l.b16 %v3549
        %v3863 = vunpack.c.h.b16 %v3549
        %v3864 = vunpack.c.l.b16 %v3550
        %v3865 = vunpack.c.h.b16 %v3550
        %v3866 = vunpack.c.l.b16 %v3551
        %v3867 = vunpack.c.h.b16 %v3551
        %v3868 = vunpack.c.l.b16 %v3552
        %v3869 = vunpack.c.h.b16 %v3552
        %v3870 = vunpack.c.l.b16 %v3553
        %v3871 = vunpack.c.h.b16 %v3553
        %v3872 = vunpack.c.l.b16 %v3554
        %v3873 = vunpack.c.h.b16 %v3554
        %v3874 = vunpack.c.l.b16 %v3555
        %v3875 = vunpack.c.h.b16 %v3555
        %v3876 = vunpack.c.l.b16 %v3556
        %v3877 = vunpack.c.h.b16 %v3556
        %v3878 = vunpack.c.l.b16 %v3557
        %v3879 = vunpack.c.h.b16 %v3557
        %v3880 = vunpack.c.l.b16 %v3558
        %v3881 = vunpack.c.h.b16 %v3558
        %v3882 = vunpack.c.l.b16 %v3559
        %v3883 = vunpack.c.h.b16 %v3559
        %v3884 = vunpack.c.l.b16 %v3560
        %v3885 = vunpack.c.h.b16 %v3560
        %v3886 = vunpack.c.l.b16 %v3561
        %v3887 = vunpack.c.h.b16 %v3561
        %v3888 = vunpack.c.l.b16 %v3562
        %v3889 = vunpack.c.h.b16 %v3562
        %v3890 = vunpack.c.l.b16 %v3563
        %v3891 = vunpack.c.h.b16 %v3563
        %v3892 = vunpack.c.l.b16 %v3564
        %v3893 = vunpack.c.h.b16 %v3564
        %v3894 = vunpack.c.l.b16 %v3565
        %v3895 = vunpack.c.h.b16 %v3565
        %v3896 = vunpack.c.l.b16 %v3566
        %v3897 = vunpack.c.h.b16 %v3566
        %v3898 = vunpack.c.l.b16 %v3567
        %v3899 = vunpack.c.h.b16 %v3567
        %v3900 = vunpack.c.l.b16 %v3568
        %v3901 = vunpack.c.h.b16 %v3568
        %v3902 = vunpack.c.l.b16 %v3569
        %v3903 = vunpack.c.h.b16 %v3569
        %v3904 = vunpack.c.l.b16 %v3570
        %v3905 = vunpack.c.h.b16 %v3570
        %v3906 = vunpack.c.l.b16 %v3571
        %v3907 = vunpack.c.h.b16 %v3571
        %v3908 = vunpack.c.l.b16 %v3572
        %v3909 = vunpack.c.h.b16 %v3572
        %v3910 = vunpack.c.l.b16 %v3573
        %v3911 = vunpack.c.h.b16 %v3573
        %v3912 = vunpack.c.l.b16 %v3574
        %v3913 = vunpack.c.h.b16 %v3574
        %v3914 = vunpack.c.l.b16 %v3575
        %v3915 = vunpack.c.h.b16 %v3575
        %v3916 = vunpack.c.l.b16 %v3576
        %v3917 = vunpack.c.h.b16 %v3576
        %v3918 = vunpack.c.l.b16 %v3577
        %v3919 = vunpack.c.h.b16 %v3577
        %v3920 = vunpack.c.l.b16 %v3578
        %v3921 = vunpack.c.h.b16 %v3578
        %v3922 = vunpack.c.l.b16 %v3579
        %v3923 = vunpack.c.h.b16 %v3579
        %v3924 = vunpack.c.l.b16 %v3580
        %v3925 = vunpack.c.h.b16 %v3580
        %v3926 = vunpack.c.l.b16 %v3581
        %v3927 = vunpack.c.h.b16 %v3581
        %v3928 = vunpack.c.l.b16 %v3582
        %v3929 = vunpack.c.h.b16 %v3582
        %v3930 = vunpack.c.l.b16 %v3583
        %v3931 = vunpack.c.h.b16 %v3583
        %v3932 = vunpack.c.l.b16 %v3584
        %v3933 = vunpack.c.h.b16 %v3584
        %v3934 = vunpack.c.l.b16 %v3585
        %v3935 = vunpack.c.h.b16 %v3585
        %v3936 = vunpack.c.l.b16 %v3586
        %v3937 = vunpack.c.h.b16 %v3586
        %v3938 = vunpack.c.l.b16 %v3587
        %v3939 = vunpack.c.h.b16 %v3587
        %v3940 = vunpack.c.l.b16 %v3588
        %v3941 = vunpack.c.h.b16 %v3588
        %v3942 = vunpack.c.l.b16 %v3589
        %v3943 = vunpack.c.h.b16 %v3589
        %v3944 = vunpack.c.l.b16 %v3590
        %v3945 = vunpack.c.h.b16 %v3590
        %v3946 = vunpack.c.l.b16 %v3591
        %v3947 = vunpack.c.h.b16 %v3591
        %v3948 = vunpack.c.l.b16 %v3592
        %v3949 = vunpack.c.h.b16 %v3592
        %v3950 = vunpack.c.l.b16 %v3593
        %v3951 = vunpack.c.h.b16 %v3593
        %v3952 = vunpack.c.l.b16 %v3594
        %v3953 = vunpack.c.h.b16 %v3594
        %v3954 = vunpack.c.l.b16 %v3595
        %v3955 = vunpack.c.h.b16 %v3595
        %v3956 = vunpack.c.l.b16 %v3596
        %v3957 = vunpack.c.h.b16 %v3596
        %v3958 = vunpack.c.l.b16 %v3597
        %v3959 = vunpack.c.h.b16 %v3597
        %v3960 = vunpack.c.l.b16 %v3598
        %v3961 = vunpack.c.h.b16 %v3598
        %v3962 = vunpack.c.l.b16 %v3599
        %v3963 = vunpack.c.h.b16 %v3599
        %v3964 = vunpack.c.l.b16 %v3600
        %v3965 = vunpack.c.h.b16 %v3600
        %v3966 = vunpack.c.l.b16 %v3601
        %v3967 = vunpack.c.h.b16 %v3601
        %v3968 = vunpack.c.l.b16 %v3602
        %v3969 = vunpack.c.h.b16 %v3602
        %v3970 = vunpack.c.l.b16 %v3603
        %v3971 = vunpack.c.h.b16 %v3603
        %v3972 = vunpack.c.l.b16 %v3604
        %v3973 = vunpack.c.h.b16 %v3604
        %v3974 = vunpack.c.l.b16 %v3605
        %v3975 = vunpack.c.h.b16 %v3605
        %v3976 = vunpack.c.l.b16 %v3606
        %v3977 = vunpack.c.h.b16 %v3606
        %v3978 = vunpack.c.l.b16 %v3607
        %v3979 = vunpack.c.h.b16 %v3607
        %v3980 = vunpack.c.l.b16 %v3608
        %v3981 = vunpack.c.h.b16 %v3608
        %v3982 = vunpack.c.l.b16 %v3609
        %v3983 = vunpack.c.h.b16 %v3609
        %v3984 = vunpack.c.l.b16 %v3610
        %v3985 = vunpack.c.h.b16 %v3610
        %v3986 = vunpack.c.l.b16 %v3611
        %v3987 = vunpack.c.h.b16 %v3611
        %v3988 = vunpack.c.l.b16 %v3612
        %v3989 = vunpack.c.h.b16 %v3612
        %v3990 = vunpack.c.l.b16 %v3613
        %v3991 = vunpack.c.h.b16 %v3613
        %v3992 = vunpack.c.l.b16 %v3614
        %v3993 = vunpack.c.h.b16 %v3614
        %v3994 = vunpack.c.l.b16 %v3615
        %v3995 = vunpack.c.h.b16 %v3615
        %v3996 = vunpack.c.l.b16 %v3616
        %v3997 = vunpack.c.h.b16 %v3616
        %v3998 = vunpack.c.l.b16 %v3617
        %v3999 = vunpack.c.h.b16 %v3617
        %v4000 = vunpack.c.l.b16 %v3618
        %v4001 = vunpack.c.h.b16 %v3618
        %v4002 = vunpack.c.l.b16 %v3619
        %v4003 = vunpack.c.h.b16 %v3619
        %v4004 = vunpack.c.l.b16 %v3620
        %v4005 = vunpack.c.h.b16 %v3620
        %v4006 = vunpack.c.l.b16 %v3621
        %v4007 = vunpack.c.h.b16 %v3621
        %v4008 = vunpack.c.l.b16 %v3622
        %v4009 = vunpack.c.h.b16 %v3622
        %v4010 = vunpack.c.l.b16 %v3623
        %v4011 = vunpack.c.h.b16 %v3623
        %v4012 = vunpack.c.l.b16 %v3624
        %v4013 = vunpack.c.h.b16 %v3624
        %v4014 = vunpack.c.l.b16 %v3625
        %v4015 = vunpack.c.h.b16 %v3625
        %v4016 = vunpack.c.l.b16 %v3626
        %v4017 = vunpack.c.h.b16 %v3626
        %v4018 = vunpack.c.l.b16 %v3627
        %v4019 = vunpack.c.h.b16 %v3627
        %v4020 = vunpack.c.l.b16 %v3628
        %v4021 = vunpack.c.h.b16 %v3628
        %v4022 = vunpack.c.l.b16 %v3629
        %v4023 = vunpack.c.h.b16 %v3629
        %v4024 = vunpack.c.l.b16 %v3630
        %v4025 = vunpack.c.h.b16 %v3630
        %v4026 = vunpack.c.l.b16 %v3631
        %v4027 = vunpack.c.h.b16 %v3631
        %v4028 = vunpack.c.l.b16 %v3632
        %v4029 = vunpack.c.h.b16 %v3632
        %v4030 = vunpack.c.l.b16 %v3633
        %v4031 = vunpack.c.h.b16 %v3633
        %v4032 = vunpack.c.l.b16 %v3634
        %v4033 = vunpack.c.h.b16 %v3634
        %v4034 = vunpack.c.l.b16 %v3635
        %v4035 = vunpack.c.h.b16 %v3635
        %v4036 = vunpack.c.l.b16 %v3636
        %v4037 = vunpack.c.h.b16 %v3636
        %v4038 = vunpack.c.l.b16 %v3637
        %v4039 = vunpack.c.h.b16 %v3637
        %v4040 = vunpack.c.l.b16 %v3638
        %v4041 = vunpack.c.h.b16 %v3638
        %v4042 = vunpack.c.l.b16 %v3639
        %v4043 = vunpack.c.h.b16 %v3639
        %v4044 = vunpack.c.l.b16 %v3640
        %v4045 = vunpack.c.h.b16 %v3640
        %v4046 = vunpack.c.l.b16 %v3641
        %v4047 = vunpack.c.h.b16 %v3641
        %v4048 = vunpack.c.l.b16 %v3642
        %v4049 = vunpack.c.h.b16 %v3642
        %v4050 = vunpack.c.l.b16 %v3643
        %v4051 = vunpack.c.h.b16 %v3643
        %v4052 = vunpack.c.l.b16 %v3644
        %v4053 = vunpack.c.h.b16 %v3644
        %v4054 = vunpack.c.l.b16 %v3645
        %v4055 = vunpack.c.h.b16 %v3645
        %v4056 = vunpack.c.l.b16 %v3646
        %v4057 = vunpack.c.h.b16 %v3646
        %v4058 = vunpack.c.l.b16 %v3647
        %v4059 = vunpack.c.h.b16 %v3647
        %v4060 = vunpack.c.l.b16 %v3648
        %v4061 = vunpack.c.h.b16 %v3648
        %v4062 = vunpack.c.l.b16 %v3649
        %v4063 = vunpack.c.h.b16 %v3649
        %v4064 = vunpack.c.l.b16 %v3650
        %v4065 = vunpack.c.h.b16 %v3650
        %v4066 = vunpack.c.l.b16 %v3651
        %v4067 = vunpack.c.h.b16 %v3651
        %v4068 = vunpack.c.l.b16 %v3652
        %v4069 = vunpack.c.h.b16 %v3652
        %v4070 = vunpack.c.l.b16 %v3653
        %v4071 = vunpack.c.h.b16 %v3653
        %v4072 = vunpack.c.l.b16 %v3654
        %v4073 = vunpack.c.h.b16 %v3654
        %v4074 = vunpack.c.l.b16 %v3655
        %v4075 = vunpack.c.h.b16 %v3655
        %v4076 = vpack.c.b16 %v3824, %v3820
        %v4077 = vpack.c.b16 %v3825, %v3821
        %v4078 = vpack.c.b16 %v3826, %v3822
        %v4079 = vpack.c.b16 %v3827, %v3823
        %v4080 = vpack.c.b16 %v3832, %v3828
        %v4081 = vpack.c.b16 %v3833, %v3829
        %v4082 = vpack.c.b16 %v3834, %v3830
        %v4083 = vpack.c.b16 %v3835, %v3831
        %v4084 = vpack.c.b16 %v3840, %v3836
        %v4085 = vpack.c.b16 %v3841, %v3837
        %v4086 = vpack.c.b16 %v3842, %v3838
        %v4087 = vpack.c.b16 %v3843, %v3839
        %v4088 = vpack.c.b16 %v3848, %v3844
        %v4089 = vpack.c.b16 %v3849, %v3845
        %v4090 = vpack.c.b16 %v3850, %v3846
        %v4091 = vpack.c.b16 %v3851, %v3847
        %v4092 = vpack.c.b16 %v3856, %v3852
        %v4093 = vpack.c.b16 %v3857, %v3853
        %v4094 = vpack.c.b16 %v3858, %v3854
        %v4095 = vpack.c.b16 %v3859, %v3855
        %v4096 = vpack.c.b16 %v3864, %v3860
        %v4097 = vpack.c.b16 %v3865, %v3861
        %v4098 = vpack.c.b16 %v3866, %v3862
        %v4099 = vpack.c.b16 %v3867, %v3863
        %v4100 = vpack.c.b16 %v3872, %v3868
        %v4101 = vpack.c.b16 %v3873, %v3869
        %v4102 = vpack.c.b16 %v3874, %v3870
        %v4103 = vpack.c.b16 %v3875, %v3871
        %v4104 = vpack.c.b16 %v3880, %v3876
        %v4105 = vpack.c.b16 %v3881, %v3877
        %v4106 = vpack.c.b16 %v3882, %v3878
        %v4107 = vpack.c.b16 %v3883, %v3879
        %v4108 = vpack.c.b16 %v3888, %v3884
        %v4109 = vpack.c.b16 %v3889, %v3885
        %v4110 = vpack.c.b16 %v3890, %v3886
        %v4111 = vpack.c.b16 %v3891, %v3887
        %v4112 = vpack.c.b16 %v3896, %v3892
        %v4113 = vpack.c.b16 %v3897, %v3893
        %v4114 = vpack.c.b16 %v3898, %v3894
        %v4115 = vpack.c.b16 %v3899, %v3895
        %v4116 = vpack.c.b16 %v3904, %v3900
        %v4117 = vpack.c.b16 %v3905, %v3901
        %v4118 = vpack.c.b16 %v3906, %v3902
        %v4119 = vpack.c.b16 %v3907, %v3903
        %v4120 = vpack.c.b16 %v3912, %v3908
        %v4121 = vpack.c.b16 %v3913, %v3909
        %v4122 = vpack.c.b16 %v3914, %v3910
        %v4123 = vpack.c.b16 %v3915, %v3911
        %v4124 = vpack.c.b16 %v3920, %v3916
        %v4125 = vpack.c.b16 %v3921, %v3917
        %v4126 = vpack.c.b16 %v3922, %v3918
        %v4127 = vpack.c.b16 %v3923, %v3919
        %v4128 = vpack.c.b16 %v3928, %v3924
        %v4129 = vpack.c.b16 %v3929, %v3925
        %v4130 = vpack.c.b16 %v3930, %v3926
        %v4131 = vpack.c.b16 %v3931, %v3927
        %v4132 = vpack.c.b16 %v3936, %v3932
        %v4133 = vpack.c.b16 %v3937, %v3933
        %v4134 = vpack.c.b16 %v3938, %v3934
        %v4135 = vpack.c.b16 %v3939, %v3935
        %v4136 = vpack.c.b16 %v3944, %v3940
        %v4137 = vpack.c.b16 %v3945, %v3941
        %v4138 = vpack.c.b16 %v3946, %v3942
        %v4139 = vpack.c.b16 %v3947, %v3943
        %v4140 = vpack.c.b16 %v3952, %v3948
        %v4141 = vpack.c.b16 %v3953, %v3949
        %v4142 = vpack.c.b16 %v3954, %v3950
        %v4143 = vpack.c.b16 %v3955, %v3951
        %v4144 = vpack.c.b16 %v3960, %v3956
        %v4145 = vpack.c.b16 %v3961, %v3957
        %v4146 = vpack.c.b16 %v3962, %v3958
        %v4147 = vpack.c.b16 %v3963, %v3959
        %v4148 = vpack.c.b16 %v3968, %v3964
        %v4149 = vpack.c.b16 %v3969, %v3965
        %v4150 = vpack.c.b16 %v3970, %v3966
        %v4151 = vpack.c.b16 %v3971, %v3967
        %v4152 = vpack.c.b16 %v3976, %v3972
        %v4153 = vpack.c.b16 %v3977, %v3973
        %v4154 = vpack.c.b16 %v3978, %v3974
        %v4155 = vpack.c.b16 %v3979, %v3975
        %v4156 = vpack.c.b16 %v3984, %v3980
        %v4157 = vpack.c.b16 %v3985, %v3981
        %v4158 = vpack.c.b16 %v3986, %v3982
        %v4159 = vpack.c.b16 %v3987, %v3983
        %v4160 = vpack.c.b16 %v3992, %v3988
        %v4161 = vpack.c.b16 %v3993, %v3989
        %v4162 = vpack.c.b16 %v3994, %v3990
        %v4163 = vpack.c.b16 %v3995, %v3991
        %v4164 = vpack.c.b16 %v4000, %v3996
        %v4165 = vpack.c.b16 %v4001, %v3997
        %v4166 = vpack.c.b16 %v4002, %v3998
        %v4167 = vpack.c.b16 %v4003, %v3999
        %v4168 = vpack.c.b16 %v4008, %v4004
        %v4169 = vpack.c.b16 %v4009, %v4005
        %v4170 = vpack.c.b16 %v4010, %v4006
        %v4171 = vpack.c.b16 %v4011, %v4007
        %v4172 = vpack.c.b16 %v4016, %v4012
        %v4173 = vpack.c.b16 %v4017, %v4013
        %v4174 = vpack.c.b16 %v4018, %v4014
        %v4175 = vpack.c.b16 %v4019, %v4015
        %v4176 = vpack.c.b16 %v4024, %v4020
        %v4177 = vpack.c.b16 %v4025, %v4021
        %v4178 = vpack.c.b16 %v4026, %v4022
        %v4179 = vpack.c.b16 %v4027, %v4023
        %v4180 = vpack.c.b16 %v4032, %v4028
        %v4181 = vpack.c.b16 %v4033, %v4029
        %v4182 = vpack.c.b16 %v4034, %v4030
        %v4183 = vpack.c.b16 %v4035, %v4031
        %v4184 = vpack.c.b16 %v4040, %v4036
        %v4185 = vpack.c.b16 %v4041, %v4037
        %v4186 = vpack.c.b16 %v4042, %v4038
        %v4187 = vpack.c.b16 %v4043, %v4039
        %v4188 = vpack.c.b16 %v4048, %v4044
        %v4189 = vpack.c.b16 %v4049, %v4045
        %v4190 = vpack.c.b16 %v4050, %v4046
        %v4191 = vpack.c.b16 %v4051, %v4047
        %v4192 = vpack.c.b16 %v4056, %v4052
        %v4193 = vpack.c.b16 %v4057, %v4053
        %v4194 = vpack.c.b16 %v4058, %v4054
        %v4195 = vpack.c.b16 %v4059, %v4055
        %v4196 = vpack.c.b16 %v4064, %v4060
        %v4197 = vpack.c.b16 %v4065, %v4061
        %v4198 = vpack.c.b16 %v4066, %v4062
        %v4199 = vpack.c.b16 %v4067, %v4063
        %v4200 = vpack.c.b16 %v4072, %v4068
        %v4201 = vpack.c.b16 %v4073, %v4069
        %v4202 = vpack.c.b16 %v4074, %v4070
        %v4203 = vpack.c.b16 %v4075, %v4071
        %4332 = vmatprep.subr.bf16.mxu0 %v4077
        %4333 = vmatpush1.bf16.msra.mxu0 %v4076
        %4334 = vmatprep.subr.bf16.mxu0 %v4081
        %4335 = vmatpush1.bf16.msra.mxu0 %v4080
        %4336 = vmatprep.subr.bf16.mxu0 %v4085
        %4337 = vmatpush1.bf16.msra.mxu0 %v4084
        %4338 = vmatprep.subr.bf16.mxu0 %v4089
        %4339 = vmatpush1.bf16.msra.mxu0 %v4088
        %4340 = vmatprep.subr.bf16.mxu0 %v4093
        %4341 = vmatpush1.bf16.msra.mxu0 %v4092
        %4342 = vmatprep.subr.bf16.mxu0 %v4097
        %4343 = vmatpush1.bf16.msra.mxu0 %v4096
        %4344 = vmatprep.subr.bf16.mxu0 %v4101
        %4345 = vmatpush1.bf16.msra.mxu0 %v4100
        %4346 = vmatprep.subr.bf16.mxu0 %v4105
        %4347 = vmatpush1.bf16.msra.mxu0 %v4104
        %4348 = vmatprep.subr.bf16.mxu0 %v4109
        %4349 = vmatpush1.bf16.msra.mxu0 %v4108
        %4350 = vmatprep.subr.bf16.mxu0 %v4113
        %4351 = vmatpush1.bf16.msra.mxu0 %v4112
        %4352 = vmatprep.subr.bf16.mxu0 %v4117
        %4353 = vmatpush1.bf16.msra.mxu0 %v4116
        %4354 = vmatprep.subr.bf16.mxu0 %v4121
        %4355 = vmatpush1.bf16.msra.mxu0 %v4120
        %4356 = vmatprep.subr.bf16.mxu0 %v4125
        %4357 = vmatpush1.bf16.msra.mxu0 %v4124
        %4358 = vmatprep.subr.bf16.mxu0 %v4129
        %4359 = vmatpush1.bf16.msra.mxu0 %v4128
        %4360 = vmatprep.subr.bf16.mxu0 %v4133
        %4361 = vmatpush1.bf16.msra.mxu0 %v4132
        %4362 = vmatprep.subr.bf16.mxu0 %v4137
        %4363 = vmatpush1.bf16.msra.mxu0 %v4136
        %4364 = vmatprep.mubr.bf16.mxu0 %v3464
        %4365 = vmatmul.mubr.bf16.gmra.mrb[0].mxu0 %v3463
        %v4366 = vpop.f32.mrb[0].mxu0
        %v4367 = vadd.f32 %v3679, %v4366
        %v4368 = vpop.f32.mrb[0].mxu0
        %v4369 = vadd.f32 %v3683, %v4368
        %v4370 = vpop.f32.mrb[0].mxu0
        %v4371 = vadd.f32 %v3679, %v4370
        %v4372 = vpop.f32.mrb[0].mxu0
        %v4373 = vadd.f32 %v3683, %v4372
        %4374 = vmatprep.mubr.bf16.mxu0 %v3468
        %4375 = vmatmul.mubr.bf16.gmra.mrb[0].mxu0 %v3467
        %v4376 = vpop.f32.mrb[0].mxu0
        %v4377 = vadd.f32 %v3679, %v4376
        %v4378 = vpop.f32.mrb[0].mxu0
        %v4379 = vadd.f32 %v3683, %v4378
        %v4380 = vpop.f32.mrb[0].mxu0
        %v4381 = vadd.f32 %v3679, %v4380
        %v4382 = vpop.f32.mrb[0].mxu0
        %v4383 = vadd.f32 %v3683, %v4382
        %4384 = vmatprep.mubr.bf16.mxu0 %v3472
        %4385 = vmatmul.mubr.bf16.gmra.mrb[0].mxu0 %v3471
        %v4386 = vpop.f32.mrb[0].mxu0
        %v4387 = vadd.f32 %v3679, %v4386
        %v4388 = vpop.f32.mrb[0].mxu0
        %v4389 = vadd.f32 %v3683, %v4388
        %v4390 = vpop.f32.mrb[0].mxu0
        %v4391 = vadd.f32 %v3679, %v4390
        %v4392 = vpop.f32.mrb[0].mxu0
        %v4393 = vadd.f32 %v3683, %v4392
        %4394 = vmatprep.mubr.bf16.mxu0 %v3476
        %4395 = vmatmul.mubr.bf16.gmra.mrb[0].mxu0 %v3475
        %v4396 = vpop.f32.mrb[0].mxu0
        %v4397 = vadd.f32 %v3679, %v4396
        %v4398 = vpop.f32.mrb[0].mxu0
        %v4399 = vadd.f32 %v3683, %v4398
        %v4400 = vpop.f32.mrb[0].mxu0
        %v4401 = vadd.f32 %v3679, %v4400
        %v4402 = vpop.f32.mrb[0].mxu0
        %v4403 = vadd.f32 %v3683, %v4402
        %4404 = vmatprep.mubr.bf16.mxu0 %v3480
        %4405 = vmatmul.mubr.bf16.gmra.mrb[0].mxu0 %v3479
        %v4406 = vpop.f32.mrb[0].mxu0
        %v4407 = vadd.f32 %v3679, %v4406
        %v4408 = vpop.f32.mrb[0].mxu0
        %v4409 = vadd.f32 %v3683, %v4408
        %v4410 = vpop.f32.mrb[0].mxu0
        %v4411 = vadd.f32 %v3679, %v4410
        %v4412 = vpop.f32.mrb[0].mxu0
        %v4413 = vadd.f32 %v3683, %v4412
        %4414 = vmatprep.mubr.bf16.mxu0 %v3484
        %4415 = vmatmul.mubr.bf16.gmra.mrb[0].mxu0 %v3483
        %v4416 = vpop.f32.mrb[0].mxu0
        %v4417 = vadd.f32 %v3679, %v4416
        %v4418 = vpop.f32.mrb[0].mxu0
        %v4419 = vadd.f32 %v3683, %v4418
        %v4420 = vpop.f32.mrb[0].mxu0
        %v4421 = vadd.f32 %v3679, %v4420
        %v4422 = vpop.f32.mrb[0].mxu0
        %v4423 = vadd.f32 %v3683, %v4422
        %4424 = vmatprep.mubr.bf16.mxu0 %v3488
        %4425 = vmatmul.mubr.bf16.gmra.mrb[0].mxu0 %v3487
        %v4426 = vpop.f32.mrb[0].mxu0
        %v4427 = vadd.f32 %v3679, %v4426
        %v4428 = vpop.f32.mrb[0].mxu0
        %v4429 = vadd.f32 %v3683, %v4428
        %v4430 = vpop.f32.mrb[0].mxu0
        %v4431 = vadd.f32 %v3679, %v4430
        %v4432 = vpop.f32.mrb[0].mxu0
        %v4433 = vadd.f32 %v3683, %v4432
        %4434 = vmatprep.mubr.bf16.mxu0 %v3492
        %4435 = vmatmul.mubr.bf16.gmra.mrb[0].mxu0 %v3491
        %v4436 = vpop.f32.mrb[0].mxu0
        %v4437 = vadd.f32 %v3679, %v4436
        %v4438 = vpop.f32.mrb[0].mxu0
        %v4439 = vadd.f32 %v3683, %v4438
        %v4440 = vpop.f32.mrb[0].mxu0
        %v4441 = vadd.f32 %v3679, %v4440
        %v4442 = vpop.f32.mrb[0].mxu0
        %v4443 = vadd.f32 %v3683, %v4442
        %4444 = vmatprep.mubr.bf16.mxu0 %v3496
        %4445 = vmatmul.mubr.bf16.gmra.mrb[0].mxu0 %v3495
        %v4446 = vpop.f32.mrb[0].mxu0
        %v4447 = vadd.f32 %v3679, %v4446
        %v4448 = vpop.f32.mrb[0].mxu0
        %v4449 = vadd.f32 %v3683, %v4448
        %v4450 = vpop.f32.mrb[0].mxu0
        %v4451 = vadd.f32 %v3679, %v4450
        %v4452 = vpop.f32.mrb[0].mxu0
        %v4453 = vadd.f32 %v3683, %v4452
        %4454 = vmatprep.mubr.bf16.mxu0 %v3500
        %4455 = vmatmul.mubr.bf16.gmra.mrb[0].mxu0 %v3499
        %v4456 = vpop.f32.mrb[0].mxu0
        %v4457 = vadd.f32 %v3679, %v4456
        %v4458 = vpop.f32.mrb[0].mxu0
        %v4459 = vadd.f32 %v3683, %v4458
        %v4460 = vpop.f32.mrb[0].mxu0
        %v4461 = vadd.f32 %v3679, %v4460
        %v4462 = vpop.f32.mrb[0].mxu0
        %v4463 = vadd.f32 %v3683, %v4462
        %4464 = vmatprep.mubr.bf16.mxu0 %v3504
        %4465 = vmatmul.mubr.bf16.gmra.mrb[0].mxu0 %v3503
        %v4466 = vpop.f32.mrb[0].mxu0
        %v4467 = vadd.f32 %v3679, %v4466
        %v4468 = vpop.f32.mrb[0].mxu0
        %v4469 = vadd.f32 %v3683, %v4468
        %v4470 = vpop.f32.mrb[0].mxu0
        %v4471 = vadd.f32 %v3679, %v4470
        %v4472 = vpop.f32.mrb[0].mxu0
        %v4473 = vadd.f32 %v3683, %v4472
        %4474 = vmatprep.mubr.bf16.mxu0 %v3508
        %4475 = vmatmul.mubr.bf16.gmra.mrb[0].mxu0 %v3507
        %v4476 = vpop.f32.mrb[0].mxu0
        %v4477 = vadd.f32 %v3679, %v4476
        %v4478 = vpop.f32.mrb[0].mxu0
        %v4479 = vadd.f32 %v3683, %v4478
        %v4480 = vpop.f32.mrb[0].mxu0
        %v4481 = vadd.f32 %v3679, %v4480
        %v4482 = vpop.f32.mrb[0].mxu0
        %v4483 = vadd.f32 %v3683, %v4482
        %4484 = vmatprep.mubr.bf16.mxu0 %v3512
        %4485 = vmatmul.mubr.bf16.gmra.mrb[0].mxu0 %v3511
        %v4486 = vpop.f32.mrb[0].mxu0
        %v4487 = vadd.f32 %v3679, %v4486
        %v4488 = vpop.f32.mrb[0].mxu0
        %v4489 = vadd.f32 %v3683, %v4488
        %v4490 = vpop.f32.mrb[0].mxu0
        %v4491 = vadd.f32 %v3679, %v4490
        %v4492 = vpop.f32.mrb[0].mxu0
        %v4493 = vadd.f32 %v3683, %v4492
        %4494 = vmatprep.mubr.bf16.mxu0 %v3516
        %4495 = vmatmul.mubr.bf16.gmra.mrb[0].mxu0 %v3515
        %v4496 = vpop.f32.mrb[0].mxu0
        %v4497 = vadd.f32 %v3679, %v4496
        %v4498 = vpop.f32.mrb[0].mxu0
        %v4499 = vadd.f32 %v3683, %v4498
        %v4500 = vpop.f32.mrb[0].mxu0
        %v4501 = vadd.f32 %v3679, %v4500
        %v4502 = vpop.f32.mrb[0].mxu0
        %v4503 = vadd.f32 %v3683, %v4502
        %4504 = vmatprep.mubr.bf16.mxu0 %v3520
        %4505 = vmatmul.mubr.bf16.gmra.mrb[0].mxu0 %v3519
        %v4506 = vpop.f32.mrb[0].mxu0
        %v4507 = vadd.f32 %v3679, %v4506
        %v4508 = vpop.f32.mrb[0].mxu0
        %v4509 = vadd.f32 %v3683, %v4508
        %v4510 = vpop.f32.mrb[0].mxu0
        %v4511 = vadd.f32 %v3679, %v4510
        %v4512 = vpop.f32.mrb[0].mxu0
        %v4513 = vadd.f32 %v3683, %v4512
        %4514 = vmatprep.mubr.bf16.mxu0 %v3524
        %4515 = vmatmul.mubr.bf16.gmra.mrb[0].mxu0 %v3523
        %v4516 = vpop.f32.mrb[0].mxu0
        %v4517 = vadd.f32 %v3679, %v4516
        %v4518 = vpop.f32.mrb[0].mxu0
        %v4519 = vadd.f32 %v3683, %v4518
        %v4520 = vpop.f32.mrb[0].mxu0
        %v4521 = vadd.f32 %v3679, %v4520
        %v4522 = vpop.f32.mrb[0].mxu0
        %v4523 = vadd.f32 %v3683, %v4522
        %4524 = vdwg.mxu0
        %4525 = vmatprep.subr.bf16.mxu0 %v4141
        %4526 = vmatpush1.bf16.msra.mxu0 %v4140
        %4527 = vmatprep.subr.bf16.mxu0 %v4145
        %4528 = vmatpush1.bf16.msra.mxu0 %v4144
        %4529 = vmatprep.subr.bf16.mxu0 %v4149
        %4530 = vmatpush1.bf16.msra.mxu0 %v4148
        %4531 = vmatprep.subr.bf16.mxu0 %v4153
        %4532 = vmatpush1.bf16.msra.mxu0 %v4152
        %4533 = vmatprep.subr.bf16.mxu0 %v4157
        %4534 = vmatpush1.bf16.msra.mxu0 %v4156
        %4535 = vmatprep.subr.bf16.mxu0 %v4161
        %4536 = vmatpush1.bf16.msra.mxu0 %v4160
        %4537 = vmatprep.subr.bf16.mxu0 %v4165
        %4538 = vmatpush1.bf16.msra.mxu0 %v4164
        %4539 = vmatprep.subr.bf16.mxu0 %v4169
        %4540 = vmatpush1.bf16.msra.mxu0 %v4168
        %4541 = vmatprep.subr.bf16.mxu0 %v4173
        %4542 = vmatpush1.bf16.msra.mxu0 %v4172
        %4543 = vmatprep.subr.bf16.mxu0 %v4177
        %4544 = vmatpush1.bf16.msra.mxu0 %v4176
        %4545 = vmatprep.subr.bf16.mxu0 %v4181
        %4546 = vmatpush1.bf16.msra.mxu0 %v4180
        %4547 = vmatprep.subr.bf16.mxu0 %v4185
        %4548 = vmatpush1.bf16.msra.mxu0 %v4184
        %4549 = vmatprep.subr.bf16.mxu0 %v4189
        %4550 = vmatpush1.bf16.msra.mxu0 %v4188
        %4551 = vmatprep.subr.bf16.mxu0 %v4193
        %4552 = vmatpush1.bf16.msra.mxu0 %v4192
        %4553 = vmatprep.subr.bf16.mxu0 %v4197
        %4554 = vmatpush1.bf16.msra.mxu0 %v4196
        %4555 = vmatprep.subr.bf16.mxu0 %v4201
        %4556 = vmatpush1.bf16.msra.mxu0 %v4200
        %4557 = vmatprep.mubr.bf16.mxu0 %v3466
        %4558 = vmatmul.mubr.bf16.gmra.mrb[0].mxu0 %v3465
        %v4559 = vpop.f32.mrb[0].mxu0
        %v4560 = vadd.f32 %v4367, %v4559
        %v4561 = vpop.f32.mrb[0].mxu0
        %v4562 = vadd.f32 %v4369, %v4561
        %v4563 = vpop.f32.mrb[0].mxu0
        %v4564 = vadd.f32 %v4371, %v4563
        %v4565 = vpop.f32.mrb[0].mxu0
        %v4566 = vadd.f32 %v4373, %v4565
        %4567 = vmatprep.mubr.bf16.mxu0 %v3470
        %4568 = vmatmul.mubr.bf16.gmra.mrb[0].mxu0 %v3469
        %v4569 = vpop.f32.mrb[0].mxu0
        %v4570 = vadd.f32 %v4377, %v4569
        %v4571 = vpop.f32.mrb[0].mxu0
        %v4572 = vadd.f32 %v4379, %v4571
        %v4573 = vpop.f32.mrb[0].mxu0
        %v4574 = vadd.f32 %v4381, %v4573
        %v4575 = vpop.f32.mrb[0].mxu0
        %v4576 = vadd.f32 %v4383, %v4575
        %4577 = vmatprep.mubr.bf16.mxu0 %v3474
        %4578 = vmatmul.mubr.bf16.gmra.mrb[0].mxu0 %v3473
        %v4579 = vpop.f32.mrb[0].mxu0
        %v4580 = vadd.f32 %v4387, %v4579
        %v4581 = vpop.f32.mrb[0].mxu0
        %v4582 = vadd.f32 %v4389, %v4581
        %v4583 = vpop.f32.mrb[0].mxu0
        %v4584 = vadd.f32 %v4391, %v4583
        %v4585 = vpop.f32.mrb[0].mxu0
        %v4586 = vadd.f32 %v4393, %v4585
        %4587 = vmatprep.mubr.bf16.mxu0 %v3478
        %4588 = vmatmul.mubr.bf16.gmra.mrb[0].mxu0 %v3477
        %v4589 = vpop.f32.mrb[0].mxu0
        %v4590 = vadd.f32 %v4397, %v4589
        %v4591 = vpop.f32.mrb[0].mxu0
        %v4592 = vadd.f32 %v4399, %v4591
        %v4593 = vpop.f32.mrb[0].mxu0
        %v4594 = vadd.f32 %v4401, %v4593
        %v4595 = vpop.f32.mrb[0].mxu0
        %v4596 = vadd.f32 %v4403, %v4595
        %4597 = vmatprep.mubr.bf16.mxu0 %v3482
        %4598 = vmatmul.mubr.bf16.gmra.mrb[0].mxu0 %v3481
        %v4599 = vpop.f32.mrb[0].mxu0
        %v4600 = vadd.f32 %v4407, %v4599
        %v4601 = vpop.f32.mrb[0].mxu0
        %v4602 = vadd.f32 %v4409, %v4601
        %v4603 = vpop.f32.mrb[0].mxu0
        %v4604 = vadd.f32 %v4411, %v4603
        %v4605 = vpop.f32.mrb[0].mxu0
        %v4606 = vadd.f32 %v4413, %v4605
        %4607 = vmatprep.mubr.bf16.mxu0 %v3486
        %4608 = vmatmul.mubr.bf16.gmra.mrb[0].mxu0 %v3485
        %v4609 = vpop.f32.mrb[0].mxu0
        %v4610 = vadd.f32 %v4417, %v4609
        %v4611 = vpop.f32.mrb[0].mxu0
        %v4612 = vadd.f32 %v4419, %v4611
        %v4613 = vpop.f32.mrb[0].mxu0
        %v4614 = vadd.f32 %v4421, %v4613
        %v4615 = vpop.f32.mrb[0].mxu0
        %v4616 = vadd.f32 %v4423, %v4615
        %4617 = vmatprep.mubr.bf16.mxu0 %v3490
        %4618 = vmatmul.mubr.bf16.gmra.mrb[0].mxu0 %v3489
        %v4619 = vpop.f32.mrb[0].mxu0
        %v4620 = vadd.f32 %v4427, %v4619
        %v4621 = vpop.f32.mrb[0].mxu0
        %v4622 = vadd.f32 %v4429, %v4621
        %v4623 = vpop.f32.mrb[0].mxu0
        %v4624 = vadd.f32 %v4431, %v4623
        %v4625 = vpop.f32.mrb[0].mxu0
        %v4626 = vadd.f32 %v4433, %v4625
        %4627 = vmatprep.mubr.bf16.mxu0 %v3494
        %4628 = vmatmul.mubr.bf16.gmra.mrb[0].mxu0 %v3493
        %v4629 = vpop.f32.mrb[0].mxu0
        %v4630 = vadd.f32 %v4437, %v4629
        %v4631 = vpop.f32.mrb[0].mxu0
        %v4632 = vadd.f32 %v4439, %v4631
        %v4633 = vpop.f32.mrb[0].mxu0
        %v4634 = vadd.f32 %v4441, %v4633
        %v4635 = vpop.f32.mrb[0].mxu0
        %v4636 = vadd.f32 %v4443, %v4635
        %4637 = vmatprep.mubr.bf16.mxu0 %v3498
        %4638 = vmatmul.mubr.bf16.gmra.mrb[0].mxu0 %v3497
        %v4639 = vpop.f32.mrb[0].mxu0
        %v4640 = vadd.f32 %v4447, %v4639
        %v4641 = vpop.f32.mrb[0].mxu0
        %v4642 = vadd.f32 %v4449, %v4641
        %v4643 = vpop.f32.mrb[0].mxu0
        %v4644 = vadd.f32 %v4451, %v4643
        %v4645 = vpop.f32.mrb[0].mxu0
        %v4646 = vadd.f32 %v4453, %v4645
        %4647 = vmatprep.mubr.bf16.mxu0 %v3502
        %4648 = vmatmul.mubr.bf16.gmra.mrb[0].mxu0 %v3501
        %v4649 = vpop.f32.mrb[0].mxu0
        %v4650 = vadd.f32 %v4457, %v4649
        %v4651 = vpop.f32.mrb[0].mxu0
        %v4652 = vadd.f32 %v4459, %v4651
        %v4653 = vpop.f32.mrb[0].mxu0
        %v4654 = vadd.f32 %v4461, %v4653
        %v4655 = vpop.f32.mrb[0].mxu0
        %v4656 = vadd.f32 %v4463, %v4655
        %4657 = vmatprep.mubr.bf16.mxu0 %v3506
        %4658 = vmatmul.mubr.bf16.gmra.mrb[0].mxu0 %v3505
        %v4659 = vpop.f32.mrb[0].mxu0
        %v4660 = vadd.f32 %v4467, %v4659
        %v4661 = vpop.f32.mrb[0].mxu0
        %v4662 = vadd.f32 %v4469, %v4661
        %v4663 = vpop.f32.mrb[0].mxu0
        %v4664 = vadd.f32 %v4471, %v4663
        %v4665 = vpop.f32.mrb[0].mxu0
        %v4666 = vadd.f32 %v4473, %v4665
        %4667 = vmatprep.mubr.bf16.mxu0 %v3510
        %4668 = vmatmul.mubr.bf16.gmra.mrb[0].mxu0 %v3509
        %v4669 = vpop.f32.mrb[0].mxu0
        %v4670 = vadd.f32 %v4477, %v4669
        %v4671 = vpop.f32.mrb[0].mxu0
        %v4672 = vadd.f32 %v4479, %v4671
        %v4673 = vpop.f32.mrb[0].mxu0
        %v4674 = vadd.f32 %v4481, %v4673
        %v4675 = vpop.f32.mrb[0].mxu0
        %v4676 = vadd.f32 %v4483, %v4675
        %4677 = vmatprep.mubr.bf16.mxu0 %v3514
        %4678 = vmatmul.mubr.bf16.gmra.mrb[0].mxu0 %v3513
        %v4679 = vpop.f32.mrb[0].mxu0
        %v4680 = vadd.f32 %v4487, %v4679
        %v4681 = vpop.f32.mrb[0].mxu0
        %v4682 = vadd.f32 %v4489, %v4681
        %v4683 = vpop.f32.mrb[0].mxu0
        %v4684 = vadd.f32 %v4491, %v4683
        %v4685 = vpop.f32.mrb[0].mxu0
        %v4686 = vadd.f32 %v4493, %v4685
        %4687 = vmatprep.mubr.bf16.mxu0 %v3518
        %4688 = vmatmul.mubr.bf16.gmra.mrb[0].mxu0 %v3517
        %v4689 = vpop.f32.mrb[0].mxu0
        %v4690 = vadd.f32 %v4497, %v4689
        %v4691 = vpop.f32.mrb[0].mxu0
        %v4692 = vadd.f32 %v4499, %v4691
        %v4693 = vpop.f32.mrb[0].mxu0
        %v4694 = vadd.f32 %v4501, %v4693
        %v4695 = vpop.f32.mrb[0].mxu0
        %v4696 = vadd.f32 %v4503, %v4695
        %4697 = vmatprep.mubr.bf16.mxu0 %v3522
        %4698 = vmatmul.mubr.bf16.gmra.mrb[0].mxu0 %v3521
        %v4699 = vpop.f32.mrb[0].mxu0
        %v4700 = vadd.f32 %v4507, %v4699
        %v4701 = vpop.f32.mrb[0].mxu0
        %v4702 = vadd.f32 %v4509, %v4701
        %v4703 = vpop.f32.mrb[0].mxu0
        %v4704 = vadd.f32 %v4511, %v4703
        %v4705 = vpop.f32.mrb[0].mxu0
        %v4706 = vadd.f32 %v4513, %v4705
        %4707 = vmatprep.mubr.bf16.mxu0 %v3526
        %4708 = vmatmul.mubr.bf16.gmra.mrb[0].mxu0 %v3525
        %v4709 = vpop.f32.mrb[0].mxu0
        %v4710 = vadd.f32 %v4517, %v4709
        %v4711 = vpop.f32.mrb[0].mxu0
        %v4712 = vadd.f32 %v4519, %v4711
        %v4713 = vpop.f32.mrb[0].mxu0
        %v4714 = vadd.f32 %v4521, %v4713
        %v4715 = vpop.f32.mrb[0].mxu0
        %v4716 = vadd.f32 %v4523, %v4715
        %4717 = vdwg.mxu0
        %4718 = vmatprep.subr.bf16.mxu0 %v4079
        %4719 = vmatpush1.bf16.msra.mxu0 %v4078
        %4720 = vmatprep.subr.bf16.mxu0 %v4083
        %4721 = vmatpush1.bf16.msra.mxu0 %v4082
        %4722 = vmatprep.subr.bf16.mxu0 %v4087
        %4723 = vmatpush1.bf16.msra.mxu0 %v4086
        %4724 = vmatprep.subr.bf16.mxu0 %v4091
        %4725 = vmatpush1.bf16.msra.mxu0 %v4090
        %4726 = vmatprep.subr.bf16.mxu0 %v4095
        %4727 = vmatpush1.bf16.msra.mxu0 %v4094
        %4728 = vmatprep.subr.bf16.mxu0 %v4099
        %4729 = vmatpush1.bf16.msra.mxu0 %v4098
        %4730 = vmatprep.subr.bf16.mxu0 %v4103
        %4731 = vmatpush1.bf16.msra.mxu0 %v4102
        %4732 = vmatprep.subr.bf16.mxu0 %v4107
        %4733 = vmatpush1.bf16.msra.mxu0 %v4106
        %4734 = vmatprep.subr.bf16.mxu0 %v4111
        %4735 = vmatpush1.bf16.msra.mxu0 %v4110
        %4736 = vmatprep.subr.bf16.mxu0 %v4115
        %4737 = vmatpush1.bf16.msra.mxu0 %v4114
        %4738 = vmatprep.subr.bf16.mxu0 %v4119
        %4739 = vmatpush1.bf16.msra.mxu0 %v4118
        %4740 = vmatprep.subr.bf16.mxu0 %v4123
        %4741 = vmatpush1.bf16.msra.mxu0 %v4122
        %4742 = vmatprep.subr.bf16.mxu0 %v4127
        %4743 = vmatpush1.bf16.msra.mxu0 %v4126
        %4744 = vmatprep.subr.bf16.mxu0 %v4131
        %4745 = vmatpush1.bf16.msra.mxu0 %v4130
        %4746 = vmatprep.subr.bf16.mxu0 %v4135
        %4747 = vmatpush1.bf16.msra.mxu0 %v4134
        %4748 = vmatprep.subr.bf16.mxu0 %v4139
        %4749 = vmatpush1.bf16.msra.mxu0 %v4138
        %4750 = vmatprep.mubr.bf16.mxu0 %v3464
        %4751 = vmatmul.mubr.bf16.gmra.mrb[0].mxu0 %v3463
        %v4752 = vpop.f32.mrb[0].mxu0
        %v4753 = vadd.f32 %v3687, %v4752
        %v4754 = vpop.f32.mrb[0].mxu0
        %v4755 = vadd.f32 %v3691, %v4754
        %v4756 = vpop.f32.mrb[0].mxu0
        %v4757 = vadd.f32 %v3687, %v4756
        %v4758 = vpop.f32.mrb[0].mxu0
        %v4759 = vadd.f32 %v3691, %v4758
        %4760 = vmatprep.mubr.bf16.mxu0 %v3468
        %4761 = vmatmul.mubr.bf16.gmra.mrb[0].mxu0 %v3467
        %v4762 = vpop.f32.mrb[0].mxu0
        %v4763 = vadd.f32 %v3687, %v4762
        %v4764 = vpop.f32.mrb[0].mxu0
        %v4765 = vadd.f32 %v3691, %v4764
        %v4766 = vpop.f32.mrb[0].mxu0
        %v4767 = vadd.f32 %v3687, %v4766
        %v4768 = vpop.f32.mrb[0].mxu0
        %v4769 = vadd.f32 %v3691, %v4768
        %4770 = vmatprep.mubr.bf16.mxu0 %v3472
        %4771 = vmatmul.mubr.bf16.gmra.mrb[0].mxu0 %v3471
        %v4772 = vpop.f32.mrb[0].mxu0
        %v4773 = vadd.f32 %v3687, %v4772
        %v4774 = vpop.f32.mrb[0].mxu0
        %v4775 = vadd.f32 %v3691, %v4774
        %v4776 = vpop.f32.mrb[0].mxu0
        %v4777 = vadd.f32 %v3687, %v4776
        %v4778 = vpop.f32.mrb[0].mxu0
        %v4779 = vadd.f32 %v3691, %v4778
        %4780 = vmatprep.mubr.bf16.mxu0 %v3476
        %4781 = vmatmul.mubr.bf16.gmra.mrb[0].mxu0 %v3475
        %v4782 = vpop.f32.mrb[0].mxu0
        %v4783 = vadd.f32 %v3687, %v4782
        %v4784 = vpop.f32.mrb[0].mxu0
        %v4785 = vadd.f32 %v3691, %v4784
        %v4786 = vpop.f32.mrb[0].mxu0
        %v4787 = vadd.f32 %v3687, %v4786
        %v4788 = vpop.f32.mrb[0].mxu0
        %v4789 = vadd.f32 %v3691, %v4788
        %4790 = vmatprep.mubr.bf16.mxu0 %v3480
        %4791 = vmatmul.mubr.bf16.gmra.mrb[0].mxu0 %v3479
        %v4792 = vpop.f32.mrb[0].mxu0
        %v4793 = vadd.f32 %v3687, %v4792
        %v4794 = vpop.f32.mrb[0].mxu0
        %v4795 = vadd.f32 %v3691, %v4794
        %v4796 = vpop.f32.mrb[0].mxu0
        %v4797 = vadd.f32 %v3687, %v4796
        %v4798 = vpop.f32.mrb[0].mxu0
        %v4799 = vadd.f32 %v3691, %v4798
        %4800 = vmatprep.mubr.bf16.mxu0 %v3484
        %4801 = vmatmul.mubr.bf16.gmra.mrb[0].mxu0 %v3483
        %v4802 = vpop.f32.mrb[0].mxu0
        %v4803 = vadd.f32 %v3687, %v4802
        %v4804 = vpop.f32.mrb[0].mxu0
        %v4805 = vadd.f32 %v3691, %v4804
        %v4806 = vpop.f32.mrb[0].mxu0
        %v4807 = vadd.f32 %v3687, %v4806
        %v4808 = vpop.f32.mrb[0].mxu0
        %v4809 = vadd.f32 %v3691, %v4808
        %4810 = vmatprep.mubr.bf16.mxu0 %v3488
        %4811 = vmatmul.mubr.bf16.gmra.mrb[0].mxu0 %v3487
        %v4812 = vpop.f32.mrb[0].mxu0
        %v4813 = vadd.f32 %v3687, %v4812
        %v4814 = vpop.f32.mrb[0].mxu0
        %v4815 = vadd.f32 %v3691, %v4814
        %v4816 = vpop.f32.mrb[0].mxu0
        %v4817 = vadd.f32 %v3687, %v4816
        %v4818 = vpop.f32.mrb[0].mxu0
        %v4819 = vadd.f32 %v3691, %v4818
        %4820 = vmatprep.mubr.bf16.mxu0 %v3492
        %4821 = vmatmul.mubr.bf16.gmra.mrb[0].mxu0 %v3491
        %v4822 = vpop.f32.mrb[0].mxu0
        %v4823 = vadd.f32 %v3687, %v4822
        %v4824 = vpop.f32.mrb[0].mxu0
        %v4825 = vadd.f32 %v3691, %v4824
        %v4826 = vpop.f32.mrb[0].mxu0
        %v4827 = vadd.f32 %v3687, %v4826
        %v4828 = vpop.f32.mrb[0].mxu0
        %v4829 = vadd.f32 %v3691, %v4828
        %4830 = vmatprep.mubr.bf16.mxu0 %v3496
        %4831 = vmatmul.mubr.bf16.gmra.mrb[0].mxu0 %v3495
        %v4832 = vpop.f32.mrb[0].mxu0
        %v4833 = vadd.f32 %v3687, %v4832
        %v4834 = vpop.f32.mrb[0].mxu0
        %v4835 = vadd.f32 %v3691, %v4834
        %v4836 = vpop.f32.mrb[0].mxu0
        %v4837 = vadd.f32 %v3687, %v4836
        %v4838 = vpop.f32.mrb[0].mxu0
        %v4839 = vadd.f32 %v3691, %v4838
        %4840 = vmatprep.mubr.bf16.mxu0 %v3500
        %4841 = vmatmul.mubr.bf16.gmra.mrb[0].mxu0 %v3499
        %v4842 = vpop.f32.mrb[0].mxu0
        %v4843 = vadd.f32 %v3687, %v4842
        %v4844 = vpop.f32.mrb[0].mxu0
        %v4845 = vadd.f32 %v3691, %v4844
        %v4846 = vpop.f32.mrb[0].mxu0
        %v4847 = vadd.f32 %v3687, %v4846
        %v4848 = vpop.f32.mrb[0].mxu0
        %v4849 = vadd.f32 %v3691, %v4848
        %4850 = vmatprep.mubr.bf16.mxu0 %v3504
        %4851 = vmatmul.mubr.bf16.gmra.mrb[0].mxu0 %v3503
        %v4852 = vpop.f32.mrb[0].mxu0
        %v4853 = vadd.f32 %v3687, %v4852
        %v4854 = vpop.f32.mrb[0].mxu0
        %v4855 = vadd.f32 %v3691, %v4854
        %v4856 = vpop.f32.mrb[0].mxu0
        %v4857 = vadd.f32 %v3687, %v4856
        %v4858 = vpop.f32.mrb[0].mxu0
        %v4859 = vadd.f32 %v3691, %v4858
        %4860 = vmatprep.mubr.bf16.mxu0 %v3508
        %4861 = vmatmul.mubr.bf16.gmra.mrb[0].mxu0 %v3507
        %v4862 = vpop.f32.mrb[0].mxu0
        %v4863 = vadd.f32 %v3687, %v4862
        %v4864 = vpop.f32.mrb[0].mxu0
        %v4865 = vadd.f32 %v3691, %v4864
        %v4866 = vpop.f32.mrb[0].mxu0
        %v4867 = vadd.f32 %v3687, %v4866
        %v4868 = vpop.f32.mrb[0].mxu0
        %v4869 = vadd.f32 %v3691, %v4868
        %4870 = vmatprep.mubr.bf16.mxu0 %v3512
        %4871 = vmatmul.mubr.bf16.gmra.mrb[0].mxu0 %v3511
        %v4872 = vpop.f32.mrb[0].mxu0
        %v4873 = vadd.f32 %v3687, %v4872
        %v4874 = vpop.f32.mrb[0].mxu0
        %v4875 = vadd.f32 %v3691, %v4874
        %v4876 = vpop.f32.mrb[0].mxu0
        %v4877 = vadd.f32 %v3687, %v4876
        %v4878 = vpop.f32.mrb[0].mxu0
        %v4879 = vadd.f32 %v3691, %v4878
        %4880 = vmatprep.mubr.bf16.mxu0 %v3516
        %4881 = vmatmul.mubr.bf16.gmra.mrb[0].mxu0 %v3515
        %v4882 = vpop.f32.mrb[0].mxu0
        %v4883 = vadd.f32 %v3687, %v4882
        %v4884 = vpop.f32.mrb[0].mxu0
        %v4885 = vadd.f32 %v3691, %v4884
        %v4886 = vpop.f32.mrb[0].mxu0
        %v4887 = vadd.f32 %v3687, %v4886
        %v4888 = vpop.f32.mrb[0].mxu0
        %v4889 = vadd.f32 %v3691, %v4888
        %4890 = vmatprep.mubr.bf16.mxu0 %v3520
        %4891 = vmatmul.mubr.bf16.gmra.mrb[0].mxu0 %v3519
        %v4892 = vpop.f32.mrb[0].mxu0
        %v4893 = vadd.f32 %v3687, %v4892
        %v4894 = vpop.f32.mrb[0].mxu0
        %v4895 = vadd.f32 %v3691, %v4894
        %v4896 = vpop.f32.mrb[0].mxu0
        %v4897 = vadd.f32 %v3687, %v4896
        %v4898 = vpop.f32.mrb[0].mxu0
        %v4899 = vadd.f32 %v3691, %v4898
        %4900 = vmatprep.mubr.bf16.mxu0 %v3524
        %4901 = vmatmul.mubr.bf16.gmra.mrb[0].mxu0 %v3523
        %v4902 = vpop.f32.mrb[0].mxu0
        %v4903 = vadd.f32 %v3687, %v4902
        %v4904 = vpop.f32.mrb[0].mxu0
        %v4905 = vadd.f32 %v3691, %v4904
        %v4906 = vpop.f32.mrb[0].mxu0
        %v4907 = vadd.f32 %v3687, %v4906
        %v4908 = vpop.f32.mrb[0].mxu0
        %v4909 = vadd.f32 %v3691, %v4908
        %4910 = vdwg.mxu0
        %4911 = vmatprep.subr.bf16.mxu0 %v4143
        %4912 = vmatpush1.bf16.msra.mxu0 %v4142
        %4913 = vmatprep.subr.bf16.mxu0 %v4147
        %4914 = vmatpush1.bf16.msra.mxu0 %v4146
        %4915 = vmatprep.subr.bf16.mxu0 %v4151
        %4916 = vmatpush1.bf16.msra.mxu0 %v4150
        %4917 = vmatprep.subr.bf16.mxu0 %v4155
        %4918 = vmatpush1.bf16.msra.mxu0 %v4154
        %4919 = vmatprep.subr.bf16.mxu0 %v4159
        %4920 = vmatpush1.bf16.msra.mxu0 %v4158
        %4921 = vmatprep.subr.bf16.mxu0 %v4163
        %4922 = vmatpush1.bf16.msra.mxu0 %v4162
        %4923 = vmatprep.subr.bf16.mxu0 %v4167
        %4924 = vmatpush1.bf16.msra.mxu0 %v4166
        %4925 = vmatprep.subr.bf16.mxu0 %v4171
        %4926 = vmatpush1.bf16.msra.mxu0 %v4170
        %4927 = vmatprep.subr.bf16.mxu0 %v4175
        %4928 = vmatpush1.bf16.msra.mxu0 %v4174
        %4929 = vmatprep.subr.bf16.mxu0 %v4179
        %4930 = vmatpush1.bf16.msra.mxu0 %v4178
        %4931 = vmatprep.subr.bf16.mxu0 %v4183
        %4932 = vmatpush1.bf16.msra.mxu0 %v4182
        %4933 = vmatprep.subr.bf16.mxu0 %v4187
        %4934 = vmatpush1.bf16.msra.mxu0 %v4186
        %4935 = vmatprep.subr.bf16.mxu0 %v4191
        %4936 = vmatpush1.bf16.msra.mxu0 %v4190
        %4937 = vmatprep.subr.bf16.mxu0 %v4195
        %4938 = vmatpush1.bf16.msra.mxu0 %v4194
        %4939 = vmatprep.subr.bf16.mxu0 %v4199
        %4940 = vmatpush1.bf16.msra.mxu0 %v4198
        %4941 = vmatprep.subr.bf16.mxu0 %v4203
        %4942 = vmatpush1.bf16.msra.mxu0 %v4202
        %4943 = vmatprep.mubr.bf16.mxu0 %v3466
        %4944 = vmatmul.mubr.bf16.gmra.mrb[0].mxu0 %v3465
        %v4945 = vpop.f32.mrb[0].mxu0
        %v4946 = vadd.f32 %v4753, %v4945
        %v4947 = vpop.f32.mrb[0].mxu0
        %v4948 = vadd.f32 %v4755, %v4947
        %v4949 = vpop.f32.mrb[0].mxu0
        %v4950 = vadd.f32 %v4757, %v4949
        %v4951 = vpop.f32.mrb[0].mxu0
        %v4952 = vadd.f32 %v4759, %v4951
        %4953 = vmatprep.mubr.bf16.mxu0 %v3470
        %4954 = vmatmul.mubr.bf16.gmra.mrb[0].mxu0 %v3469
        %v4955 = vpop.f32.mrb[0].mxu0
        %v4956 = vadd.f32 %v4763, %v4955
        %v4957 = vpop.f32.mrb[0].mxu0
        %v4958 = vadd.f32 %v4765, %v4957
        %v4959 = vpop.f32.mrb[0].mxu0
        %v4960 = vadd.f32 %v4767, %v4959
        %v4961 = vpop.f32.mrb[0].mxu0
        %v4962 = vadd.f32 %v4769, %v4961
        %4963 = vmatprep.mubr.bf16.mxu0 %v3474
        %4964 = vmatmul.mubr.bf16.gmra.mrb[0].mxu0 %v3473
        %v4965 = vpop.f32.mrb[0].mxu0
        %v4966 = vadd.f32 %v4773, %v4965
        %v4967 = vpop.f32.mrb[0].mxu0
        %v4968 = vadd.f32 %v4775, %v4967
        %v4969 = vpop.f32.mrb[0].mxu0
        %v4970 = vadd.f32 %v4777, %v4969
        %v4971 = vpop.f32.mrb[0].mxu0
        %v4972 = vadd.f32 %v4779, %v4971
        %4973 = vmatprep.mubr.bf16.mxu0 %v3478
        %4974 = vmatmul.mubr.bf16.gmra.mrb[0].mxu0 %v3477
        %v4975 = vpop.f32.mrb[0].mxu0
        %v4976 = vadd.f32 %v4783, %v4975
        %v4977 = vpop.f32.mrb[0].mxu0
        %v4978 = vadd.f32 %v4785, %v4977
        %v4979 = vpop.f32.mrb[0].mxu0
        %v4980 = vadd.f32 %v4787, %v4979
        %v4981 = vpop.f32.mrb[0].mxu0
        %v4982 = vadd.f32 %v4789, %v4981
        %4983 = vmatprep.mubr.bf16.mxu0 %v3482
        %4984 = vmatmul.mubr.bf16.gmra.mrb[0].mxu0 %v3481
        %v4985 = vpop.f32.mrb[0].mxu0
        %v4986 = vadd.f32 %v4793, %v4985
        %v4987 = vpop.f32.mrb[0].mxu0
        %v4988 = vadd.f32 %v4795, %v4987
        %v4989 = vpop.f32.mrb[0].mxu0
        %v4990 = vadd.f32 %v4797, %v4989
        %v4991 = vpop.f32.mrb[0].mxu0
        %v4992 = vadd.f32 %v4799, %v4991
        %4993 = vmatprep.mubr.bf16.mxu0 %v3486
        %4994 = vmatmul.mubr.bf16.gmra.mrb[0].mxu0 %v3485
        %v4995 = vpop.f32.mrb[0].mxu0
        %v4996 = vadd.f32 %v4803, %v4995
        %v4997 = vpop.f32.mrb[0].mxu0
        %v4998 = vadd.f32 %v4805, %v4997
        %v4999 = vpop.f32.mrb[0].mxu0
        %v5000 = vadd.f32 %v4807, %v4999
        %v5001 = vpop.f32.mrb[0].mxu0
        %v5002 = vadd.f32 %v4809, %v5001
        %5003 = vmatprep.mubr.bf16.mxu0 %v3490
        %5004 = vmatmul.mubr.bf16.gmra.mrb[0].mxu0 %v3489
        %v5005 = vpop.f32.mrb[0].mxu0
        %v5006 = vadd.f32 %v4813, %v5005
        %v5007 = vpop.f32.mrb[0].mxu0
        %v5008 = vadd.f32 %v4815, %v5007
        %v5009 = vpop.f32.mrb[0].mxu0
        %v5010 = vadd.f32 %v4817, %v5009
        %v5011 = vpop.f32.mrb[0].mxu0
        %v5012 = vadd.f32 %v4819, %v5011
        %5013 = vmatprep.mubr.bf16.mxu0 %v3494
        %5014 = vmatmul.mubr.bf16.gmra.mrb[0].mxu0 %v3493
        %v5015 = vpop.f32.mrb[0].mxu0
        %v5016 = vadd.f32 %v4823, %v5015
        %v5017 = vpop.f32.mrb[0].mxu0
        %v5018 = vadd.f32 %v4825, %v5017
        %v5019 = vpop.f32.mrb[0].mxu0
        %v5020 = vadd.f32 %v4827, %v5019
        %v5021 = vpop.f32.mrb[0].mxu0
        %v5022 = vadd.f32 %v4829, %v5021
        %5023 = vmatprep.mubr.bf16.mxu0 %v3498
        %5024 = vmatmul.mubr.bf16.gmra.mrb[0].mxu0 %v3497
        %v5025 = vpop.f32.mrb[0].mxu0
        %v5026 = vadd.f32 %v4833, %v5025
        %v5027 = vpop.f32.mrb[0].mxu0
        %v5028 = vadd.f32 %v4835, %v5027
        %v5029 = vpop.f32.mrb[0].mxu0
        %v5030 = vadd.f32 %v4837, %v5029
        %v5031 = vpop.f32.mrb[0].mxu0
        %v5032 = vadd.f32 %v4839, %v5031
        %5033 = vmatprep.mubr.bf16.mxu0 %v3502
        %5034 = vmatmul.mubr.bf16.gmra.mrb[0].mxu0 %v3501
        %v5035 = vpop.f32.mrb[0].mxu0
        %v5036 = vadd.f32 %v4843, %v5035
        %v5037 = vpop.f32.mrb[0].mxu0
        %v5038 = vadd.f32 %v4845, %v5037
        %v5039 = vpop.f32.mrb[0].mxu0
        %v5040 = vadd.f32 %v4847, %v5039
        %v5041 = vpop.f32.mrb[0].mxu0
        %v5042 = vadd.f32 %v4849, %v5041
        %5043 = vmatprep.mubr.bf16.mxu0 %v3506
        %5044 = vmatmul.mubr.bf16.gmra.mrb[0].mxu0 %v3505
        %v5045 = vpop.f32.mrb[0].mxu0
        %v5046 = vadd.f32 %v4853, %v5045
        %v5047 = vpop.f32.mrb[0].mxu0
        %v5048 = vadd.f32 %v4855, %v5047
        %v5049 = vpop.f32.mrb[0].mxu0
        %v5050 = vadd.f32 %v4857, %v5049
        %v5051 = vpop.f32.mrb[0].mxu0
        %v5052 = vadd.f32 %v4859, %v5051
        %5053 = vmatprep.mubr.bf16.mxu0 %v3510
        %5054 = vmatmul.mubr.bf16.gmra.mrb[0].mxu0 %v3509
        %v5055 = vpop.f32.mrb[0].mxu0
        %v5056 = vadd.f32 %v4863, %v5055
        %v5057 = vpop.f32.mrb[0].mxu0
        %v5058 = vadd.f32 %v4865, %v5057
        %v5059 = vpop.f32.mrb[0].mxu0
        %v5060 = vadd.f32 %v4867, %v5059
        %v5061 = vpop.f32.mrb[0].mxu0
        %v5062 = vadd.f32 %v4869, %v5061
        %5063 = vmatprep.mubr.bf16.mxu0 %v3514
        %5064 = vmatmul.mubr.bf16.gmra.mrb[0].mxu0 %v3513
        %v5065 = vpop.f32.mrb[0].mxu0
        %v5066 = vadd.f32 %v4873, %v5065
        %v5067 = vpop.f32.mrb[0].mxu0
        %v5068 = vadd.f32 %v4875, %v5067
        %v5069 = vpop.f32.mrb[0].mxu0
        %v5070 = vadd.f32 %v4877, %v5069
        %v5071 = vpop.f32.mrb[0].mxu0
        %v5072 = vadd.f32 %v4879, %v5071
        %5073 = vmatprep.mubr.bf16.mxu0 %v3518
        %5074 = vmatmul.mubr.bf16.gmra.mrb[0].mxu0 %v3517
        %v5075 = vpop.f32.mrb[0].mxu0
        %v5076 = vadd.f32 %v4883, %v5075
        %v5077 = vpop.f32.mrb[0].mxu0
        %v5078 = vadd.f32 %v4885, %v5077
        %v5079 = vpop.f32.mrb[0].mxu0
        %v5080 = vadd.f32 %v4887, %v5079
        %v5081 = vpop.f32.mrb[0].mxu0
        %v5082 = vadd.f32 %v4889, %v5081
        %5083 = vmatprep.mubr.bf16.mxu0 %v3522
        %5084 = vmatmul.mubr.bf16.gmra.mrb[0].mxu0 %v3521
        %v5085 = vpop.f32.mrb[0].mxu0
        %v5086 = vadd.f32 %v4893, %v5085
        %v5087 = vpop.f32.mrb[0].mxu0
        %v5088 = vadd.f32 %v4895, %v5087
        %v5089 = vpop.f32.mrb[0].mxu0
        %v5090 = vadd.f32 %v4897, %v5089
        %v5091 = vpop.f32.mrb[0].mxu0
        %v5092 = vadd.f32 %v4899, %v5091
        %5093 = vmatprep.mubr.bf16.mxu0 %v3526
        %5094 = vmatmul.mubr.bf16.gmra.mrb[0].mxu0 %v3525
        %v5095 = vpop.f32.mrb[0].mxu0
        %v5096 = vadd.f32 %v4903, %v5095
        %v5097 = vpop.f32.mrb[0].mxu0
        %v5098 = vadd.f32 %v4905, %v5097
        %v5099 = vpop.f32.mrb[0].mxu0
        %v5100 = vadd.f32 %v4907, %v5099
        %v5101 = vpop.f32.mrb[0].mxu0
        %v5102 = vadd.f32 %v4909, %v5101
        %5103 = vdwg.mxu0
        %v5104 = vadd.f32 %v4560, %v1308
        %v5105 = vadd.f32 %v4562, %v1309
        %v5106 = vadd.f32 %v4946, %v1310
        %v5107 = vadd.f32 %v4948, %v1311
        %v5108 = vadd.f32 %v4564, %v1312
        %v5109 = vadd.f32 %v4566, %v1313
        %v5110 = vadd.f32 %v4950, %v1314
        %v5111 = vadd.f32 %v4952, %v1315
        %v5112 = vadd.f32 %v4570, %v1316
        %v5113 = vadd.f32 %v4572, %v1317
        %v5114 = vadd.f32 %v4956, %v1318
        %v5115 = vadd.f32 %v4958, %v1319
        %v5116 = vadd.f32 %v4574, %v1320
        %v5117 = vadd.f32 %v4576, %v1321
        %v5118 = vadd.f32 %v4960, %v1322
        %v5119 = vadd.f32 %v4962, %v1323
        %v5120 = vadd.f32 %v4580, %v1324
        %v5121 = vadd.f32 %v4582, %v1325
        %v5122 = vadd.f32 %v4966, %v1326
        %v5123 = vadd.f32 %v4968, %v1327
        %v5124 = vadd.f32 %v4584, %v1328
        %v5125 = vadd.f32 %v4586, %v1329
        %v5126 = vadd.f32 %v4970, %v1330
        %v5127 = vadd.f32 %v4972, %v1331
        %v5128 = vadd.f32 %v4590, %v1332
        %v5129 = vadd.f32 %v4592, %v1333
        %v5130 = vadd.f32 %v4976, %v1334
        %v5131 = vadd.f32 %v4978, %v1335
        %v5132 = vadd.f32 %v4594, %v1336
        %v5133 = vadd.f32 %v4596, %v1337
        %v5134 = vadd.f32 %v4980, %v1338
        %v5135 = vadd.f32 %v4982, %v1339
        %v5136 = vadd.f32 %v4600, %v1340
        %v5137 = vadd.f32 %v4602, %v1341
        %v5138 = vadd.f32 %v4986, %v1342
        %v5139 = vadd.f32 %v4988, %v1343
        %v5140 = vadd.f32 %v4604, %v1344
        %v5141 = vadd.f32 %v4606, %v1345
        %v5142 = vadd.f32 %v4990, %v1346
        %v5143 = vadd.f32 %v4992, %v1347
        %v5144 = vadd.f32 %v4610, %v1348
        %v5145 = vadd.f32 %v4612, %v1349
        %v5146 = vadd.f32 %v4996, %v1350
        %v5147 = vadd.f32 %v4998, %v1351
        %v5148 = vadd.f32 %v4614, %v1352
        %v5149 = vadd.f32 %v4616, %v1353
        %v5150 = vadd.f32 %v5000, %v1354
        %v5151 = vadd.f32 %v5002, %v1355
        %v5152 = vadd.f32 %v4620, %v1356
        %v5153 = vadd.f32 %v4622, %v1357
        %v5154 = vadd.f32 %v5006, %v1358
        %v5155 = vadd.f32 %v5008, %v1359
        %v5156 = vadd.f32 %v4624, %v1360
        %v5157 = vadd.f32 %v4626, %v1361
        %v5158 = vadd.f32 %v5010, %v1362
        %v5159 = vadd.f32 %v5012, %v1363
        %v5160 = vadd.f32 %v4630, %v1364
        %v5161 = vadd.f32 %v4632, %v1365
        %v5162 = vadd.f32 %v5016, %v1366
        %v5163 = vadd.f32 %v5018, %v1367
        %v5164 = vadd.f32 %v4634, %v1368
        %v5165 = vadd.f32 %v4636, %v1369
        %v5166 = vadd.f32 %v5020, %v1370
        %v5167 = vadd.f32 %v5022, %v1371
        %v5168 = vadd.f32 %v4640, %v1372
        %v5169 = vadd.f32 %v4642, %v1373
        %v5170 = vadd.f32 %v5026, %v1374
        %v5171 = vadd.f32 %v5028, %v1375
        %v5172 = vadd.f32 %v4644, %v1376
        %v5173 = vadd.f32 %v4646, %v1377
        %v5174 = vadd.f32 %v5030, %v1378
        %v5175 = vadd.f32 %v5032, %v1379
        %v5176 = vadd.f32 %v4650, %v1380
        %v5177 = vadd.f32 %v4652, %v1381
        %v5178 = vadd.f32 %v5036, %v1382
        %v5179 = vadd.f32 %v5038, %v1383
        %v5180 = vadd.f32 %v4654, %v1384
        %v5181 = vadd.f32 %v4656, %v1385
        %v5182 = vadd.f32 %v5040, %v1386
        %v5183 = vadd.f32 %v5042, %v1387
        %v5184 = vadd.f32 %v4660, %v1388
        %v5185 = vadd.f32 %v4662, %v1389
        %v5186 = vadd.f32 %v5046, %v1390
        %v5187 = vadd.f32 %v5048, %v1391
        %v5188 = vadd.f32 %v4664, %v1392
        %v5189 = vadd.f32 %v4666, %v1393
        %v5190 = vadd.f32 %v5050, %v1394
        %v5191 = vadd.f32 %v5052, %v1395
        %v5192 = vadd.f32 %v4670, %v1396
        %v5193 = vadd.f32 %v4672, %v1397
        %v5194 = vadd.f32 %v5056, %v1398
        %v5195 = vadd.f32 %v5058, %v1399
        %v5196 = vadd.f32 %v4674, %v1400
        %v5197 = vadd.f32 %v4676, %v1401
        %v5198 = vadd.f32 %v5060, %v1402
        %v5199 = vadd.f32 %v5062, %v1403
        %v5200 = vadd.f32 %v4680, %v1404
        %v5201 = vadd.f32 %v4682, %v1405
        %v5202 = vadd.f32 %v5066, %v1406
        %v5203 = vadd.f32 %v5068, %v1407
        %v5204 = vadd.f32 %v4684, %v1408
        %v5205 = vadd.f32 %v4686, %v1409
        %v5206 = vadd.f32 %v5070, %v1410
        %v5207 = vadd.f32 %v5072, %v1411
        %v5208 = vadd.f32 %v4690, %v1412
        %v5209 = vadd.f32 %v4692, %v1413
        %v5210 = vadd.f32 %v5076, %v1414
        %v5211 = vadd.f32 %v5078, %v1415
        %v5212 = vadd.f32 %v4694, %v1416
        %v5213 = vadd.f32 %v4696, %v1417
        %v5214 = vadd.f32 %v5080, %v1418
        %v5215 = vadd.f32 %v5082, %v1419
        %v5216 = vadd.f32 %v4700, %v1420
        %v5217 = vadd.f32 %v4702, %v1421
        %v5218 = vadd.f32 %v5086, %v1422
        %v5219 = vadd.f32 %v5088, %v1423
        %v5220 = vadd.f32 %v4704, %v1424
        %v5221 = vadd.f32 %v4706, %v1425
        %v5222 = vadd.f32 %v5090, %v1426
        %v5223 = vadd.f32 %v5092, %v1427
        %v5224 = vadd.f32 %v4710, %v1428
        %v5225 = vadd.f32 %v4712, %v1429
        %v5226 = vadd.f32 %v5096, %v1430
        %v5227 = vadd.f32 %v5098, %v1431
        %v5228 = vadd.f32 %v4714, %v1432
        %v5229 = vadd.f32 %v4716, %v1433
        %v5230 = vadd.f32 %v5100, %v1434
        %v5231 = vadd.f32 %v5102, %v1435
        %5232 = vst [vmem:[#allocation2] sm:$0xff] %v5104
        %5233 = vst [vmem:[#allocation2 + $0x8] sm:$0xff] %v5105
        %5234 = vst [vmem:[#allocation2 + $0x10] sm:$0xff] %v5106
        %5235 = vst [vmem:[#allocation2 + $0x18] sm:$0xff] %v5107
        %5236 = vst [vmem:[#allocation2 + $0x20] sm:$0xff] %v5108
        %5237 = vst [vmem:[#allocation2 + $0x28] sm:$0xff] %v5109
        %5238 = vst [vmem:[#allocation2 + $0x30] sm:$0xff] %v5110
        %5239 = vst [vmem:[#allocation2 + $0x38] sm:$0xff] %v5111
        %5240 = vst [vmem:[#allocation2 + $0x40] sm:$0xff] %v5112
        %5241 = vst [vmem:[#allocation2 + $0x48] sm:$0xff] %v5113
        %5242 = vst [vmem:[#allocation2 + $0x50] sm:$0xff] %v5114
        %5243 = vst [vmem:[#allocation2 + $0x58] sm:$0xff] %v5115
        %5244 = vst [vmem:[#allocation2 + $0x60] sm:$0xff] %v5116
        %5245 = vst [vmem:[#allocation2 + $0x68] sm:$0xff] %v5117
        %5246 = vst [vmem:[#allocation2 + $0x70] sm:$0xff] %v5118
        %5247 = vst [vmem:[#allocation2 + $0x78] sm:$0xff] %v5119
        %5248 = vst [vmem:[#allocation2 + $0x80] sm:$0xff] %v5120
        %5249 = vst [vmem:[#allocation2 + $0x88] sm:$0xff] %v5121
        %5250 = vst [vmem:[#allocation2 + $0x90] sm:$0xff] %v5122
        %5251 = vst [vmem:[#allocation2 + $0x98] sm:$0xff] %v5123
        %5252 = vst [vmem:[#allocation2 + $0xa0] sm:$0xff] %v5124
        %5253 = vst [vmem:[#allocation2 + $0xa8] sm:$0xff] %v5125
        %5254 = vst [vmem:[#allocation2 + $0xb0] sm:$0xff] %v5126
        %5255 = vst [vmem:[#allocation2 + $0xb8] sm:$0xff] %v5127
        %5256 = vst [vmem:[#allocation2 + $0xc0] sm:$0xff] %v5128
        %5257 = vst [vmem:[#allocation2 + $0xc8] sm:$0xff] %v5129
        %5258 = vst [vmem:[#allocation2 + $0xd0] sm:$0xff] %v5130
        %5259 = vst [vmem:[#allocation2 + $0xd8] sm:$0xff] %v5131
        %5260 = vst [vmem:[#allocation2 + $0xe0] sm:$0xff] %v5132
        %5261 = vst [vmem:[#allocation2 + $0xe8] sm:$0xff] %v5133
        %5262 = vst [vmem:[#allocation2 + $0xf0] sm:$0xff] %v5134
        %5263 = vst [vmem:[#allocation2 + $0xf8] sm:$0xff] %v5135
        %5264 = vst [vmem:[#allocation2 + $0x100] sm:$0xff] %v5136
        %5265 = vst [vmem:[#allocation2 + $0x108] sm:$0xff] %v5137
        %5266 = vst [vmem:[#allocation2 + $0x110] sm:$0xff] %v5138
        %5267 = vst [vmem:[#allocation2 + $0x118] sm:$0xff] %v5139
        %5268 = vst [vmem:[#allocation2 + $0x120] sm:$0xff] %v5140
        %5269 = vst [vmem:[#allocation2 + $0x128] sm:$0xff] %v5141
        %5270 = vst [vmem:[#allocation2 + $0x130] sm:$0xff] %v5142
        %5271 = vst [vmem:[#allocation2 + $0x138] sm:$0xff] %v5143
        %5272 = vst [vmem:[#allocation2 + $0x140] sm:$0xff] %v5144
        %5273 = vst [vmem:[#allocation2 + $0x148] sm:$0xff] %v5145
        %5274 = vst [vmem:[#allocation2 + $0x150] sm:$0xff] %v5146
        %5275 = vst [vmem:[#allocation2 + $0x158] sm:$0xff] %v5147
        %5276 = vst [vmem:[#allocation2 + $0x160] sm:$0xff] %v5148
        %5277 = vst [vmem:[#allocation2 + $0x168] sm:$0xff] %v5149
        %5278 = vst [vmem:[#allocation2 + $0x170] sm:$0xff] %v5150
        %5279 = vst [vmem:[#allocation2 + $0x178] sm:$0xff] %v5151
        %5280 = vst [vmem:[#allocation2 + $0x180] sm:$0xff] %v5152
        %5281 = vst [vmem:[#allocation2 + $0x188] sm:$0xff] %v5153
        %5282 = vst [vmem:[#allocation2 + $0x190] sm:$0xff] %v5154
        %5283 = vst [vmem:[#allocation2 + $0x198] sm:$0xff] %v5155
        %5284 = vst [vmem:[#allocation2 + $0x1a0] sm:$0xff] %v5156
        %5285 = vst [vmem:[#allocation2 + $0x1a8] sm:$0xff] %v5157
        %5286 = vst [vmem:[#allocation2 + $0x1b0] sm:$0xff] %v5158
        %5287 = vst [vmem:[#allocation2 + $0x1b8] sm:$0xff] %v5159
        %5288 = vst [vmem:[#allocation2 + $0x1c0] sm:$0xff] %v5160
        %5289 = vst [vmem:[#allocation2 + $0x1c8] sm:$0xff] %v5161
        %5290 = vst [vmem:[#allocation2 + $0x1d0] sm:$0xff] %v5162
        %5291 = vst [vmem:[#allocation2 + $0x1d8] sm:$0xff] %v5163
        %5292 = vst [vmem:[#allocation2 + $0x1e0] sm:$0xff] %v5164
        %5293 = vst [vmem:[#allocation2 + $0x1e8] sm:$0xff] %v5165
        %5294 = vst [vmem:[#allocation2 + $0x1f0] sm:$0xff] %v5166
        %5295 = vst [vmem:[#allocation2 + $0x1f8] sm:$0xff] %v5167
        %5296 = vst [vmem:[#allocation2 + $0x200] sm:$0xff] %v5168
        %5297 = vst [vmem:[#allocation2 + $0x208] sm:$0xff] %v5169
        %5298 = vst [vmem:[#allocation2 + $0x210] sm:$0xff] %v5170
        %5299 = vst [vmem:[#allocation2 + $0x218] sm:$0xff] %v5171
        %5300 = vst [vmem:[#allocation2 + $0x220] sm:$0xff] %v5172
        %5301 = vst [vmem:[#allocation2 + $0x228] sm:$0xff] %v5173
        %5302 = vst [vmem:[#allocation2 + $0x230] sm:$0xff] %v5174
        %5303 = vst [vmem:[#allocation2 + $0x238] sm:$0xff] %v5175
        %5304 = vst [vmem:[#allocation2 + $0x240] sm:$0xff] %v5176
        %5305 = vst [vmem:[#allocation2 + $0x248] sm:$0xff] %v5177
        %5306 = vst [vmem:[#allocation2 + $0x250] sm:$0xff] %v5178
        %5307 = vst [vmem:[#allocation2 + $0x258] sm:$0xff] %v5179
        %5308 = vst [vmem:[#allocation2 + $0x260] sm:$0xff] %v5180
        %5309 = vst [vmem:[#allocation2 + $0x268] sm:$0xff] %v5181
        %5310 = vst [vmem:[#allocation2 + $0x270] sm:$0xff] %v5182
        %5311 = vst [vmem:[#allocation2 + $0x278] sm:$0xff] %v5183
        %5312 = vst [vmem:[#allocation2 + $0x280] sm:$0xff] %v5184
        %5313 = vst [vmem:[#allocation2 + $0x288] sm:$0xff] %v5185
        %5314 = vst [vmem:[#allocation2 + $0x290] sm:$0xff] %v5186
        %5315 = vst [vmem:[#allocation2 + $0x298] sm:$0xff] %v5187
        %5316 = vst [vmem:[#allocation2 + $0x2a0] sm:$0xff] %v5188
        %5317 = vst [vmem:[#allocation2 + $0x2a8] sm:$0xff] %v5189
        %5318 = vst [vmem:[#allocation2 + $0x2b0] sm:$0xff] %v5190
        %5319 = vst [vmem:[#allocation2 + $0x2b8] sm:$0xff] %v5191
        %5320 = vst [vmem:[#allocation2 + $0x2c0] sm:$0xff] %v5192
        %5321 = vst [vmem:[#allocation2 + $0x2c8] sm:$0xff] %v5193
        %5322 = vst [vmem:[#allocation2 + $0x2d0] sm:$0xff] %v5194
        %5323 = vst [vmem:[#allocation2 + $0x2d8] sm:$0xff] %v5195
        %5324 = vst [vmem:[#allocation2 + $0x2e0] sm:$0xff] %v5196
        %5325 = vst [vmem:[#allocation2 + $0x2e8] sm:$0xff] %v5197
        %5326 = vst [vmem:[#allocation2 + $0x2f0] sm:$0xff] %v5198
        %5327 = vst [vmem:[#allocation2 + $0x2f8] sm:$0xff] %v5199
        %5328 = vst [vmem:[#allocation2 + $0x300] sm:$0xff] %v5200
        %5329 = vst [vmem:[#allocation2 + $0x308] sm:$0xff] %v5201
        %5330 = vst [vmem:[#allocation2 + $0x310] sm:$0xff] %v5202
        %5331 = vst [vmem:[#allocation2 + $0x318] sm:$0xff] %v5203
        %5332 = vst [vmem:[#allocation2 + $0x320] sm:$0xff] %v5204
        %5333 = vst [vmem:[#allocation2 + $0x328] sm:$0xff] %v5205
        %5334 = vst [vmem:[#allocation2 + $0x330] sm:$0xff] %v5206
        %5335 = vst [vmem:[#allocation2 + $0x338] sm:$0xff] %v5207
        %5336 = vst [vmem:[#allocation2 + $0x340] sm:$0xff] %v5208
        %5337 = vst [vmem:[#allocation2 + $0x348] sm:$0xff] %v5209
        %5338 = vst [vmem:[#allocation2 + $0x350] sm:$0xff] %v5210
        %5339 = vst [vmem:[#allocation2 + $0x358] sm:$0xff] %v5211
        %5340 = vst [vmem:[#allocation2 + $0x360] sm:$0xff] %v5212
        %5341 = vst [vmem:[#allocation2 + $0x368] sm:$0xff] %v5213
        %5342 = vst [vmem:[#allocation2 + $0x370] sm:$0xff] %v5214
        %5343 = vst [vmem:[#allocation2 + $0x378] sm:$0xff] %v5215
        %5344 = vst [vmem:[#allocation2 + $0x380] sm:$0xff] %v5216
        %5345 = vst [vmem:[#allocation2 + $0x388] sm:$0xff] %v5217
        %5346 = vst [vmem:[#allocation2 + $0x390] sm:$0xff] %v5218
        %5347 = vst [vmem:[#allocation2 + $0x398] sm:$0xff] %v5219
        %5348 = vst [vmem:[#allocation2 + $0x3a0] sm:$0xff] %v5220
        %5349 = vst [vmem:[#allocation2 + $0x3a8] sm:$0xff] %v5221
        %5350 = vst [vmem:[#allocation2 + $0x3b0] sm:$0xff] %v5222
        %5351 = vst [vmem:[#allocation2 + $0x3b8] sm:$0xff] %v5223
        %5352 = vst [vmem:[#allocation2 + $0x3c0] sm:$0xff] %v5224
        %5353 = vst [vmem:[#allocation2 + $0x3c8] sm:$0xff] %v5225
        %5354 = vst [vmem:[#allocation2 + $0x3d0] sm:$0xff] %v5226
        %5355 = vst [vmem:[#allocation2 + $0x3d8] sm:$0xff] %v5227
        %5356 = vst [vmem:[#allocation2 + $0x3e0] sm:$0xff] %v5228
        %5357 = vst [vmem:[#allocation2 + $0x3e8] sm:$0xff] %v5229
        %5358 = vst [vmem:[#allocation2 + $0x3f0] sm:$0xff] %v5230
        %5359 = vst [vmem:[#allocation2 + $0x3f8] sm:$0xff] %v5231
        %p5360 = scmp.eq.s32.totalorder %s28, 1
        // Predicated region
        $region85: #{cnnmlp_forward.1} parent=51 // pred_check
          %p5361 = pneg %p5360
        $region86: #{cnnmlp_forward.1} parent=51 // pred_check_branch
          %5363 = sbr.rel (%p5361) target = $region88
        $region87: #{cnnmlp_forward.1} parent=51 // pred_region
          %v5364 = vpack.c.bf16 %v5108, %v5104
          %v5365 = vpack.c.bf16 %v5109, %v5105
          %v5366 = vpack.c.bf16 %v5110, %v5106
          %v5367 = vpack.c.bf16 %v5111, %v5107
          %v5368 = vpack.c.bf16 %v5116, %v5112
          %v5369 = vpack.c.bf16 %v5117, %v5113
          %v5370 = vpack.c.bf16 %v5118, %v5114
          %v5371 = vpack.c.bf16 %v5119, %v5115
          %v5372 = vpack.c.bf16 %v5124, %v5120
          %v5373 = vpack.c.bf16 %v5125, %v5121
          %v5374 = vpack.c.bf16 %v5126, %v5122
          %v5375 = vpack.c.bf16 %v5127, %v5123
          %v5376 = vpack.c.bf16 %v5132, %v5128
          %v5377 = vpack.c.bf16 %v5133, %v5129
          %v5378 = vpack.c.bf16 %v5134, %v5130
          %v5379 = vpack.c.bf16 %v5135, %v5131
          %v5380 = vpack.c.bf16 %v5140, %v5136
          %v5381 = vpack.c.bf16 %v5141, %v5137
          %v5382 = vpack.c.bf16 %v5142, %v5138
          %v5383 = vpack.c.bf16 %v5143, %v5139
          %v5384 = vpack.c.bf16 %v5148, %v5144
          %v5385 = vpack.c.bf16 %v5149, %v5145
          %v5386 = vpack.c.bf16 %v5150, %v5146
          %v5387 = vpack.c.bf16 %v5151, %v5147
          %v5388 = vpack.c.bf16 %v5156, %v5152
          %v5389 = vpack.c.bf16 %v5157, %v5153
          %v5390 = vpack.c.bf16 %v5158, %v5154
          %v5391 = vpack.c.bf16 %v5159, %v5155
          %v5392 = vpack.c.bf16 %v5164, %v5160
          %v5393 = vpack.c.bf16 %v5165, %v5161
          %v5394 = vpack.c.bf16 %v5166, %v5162
          %v5395 = vpack.c.bf16 %v5167, %v5163
          %v5396 = vpack.c.bf16 %v5172, %v5168
          %v5397 = vpack.c.bf16 %v5173, %v5169
          %v5398 = vpack.c.bf16 %v5174, %v5170
          %v5399 = vpack.c.bf16 %v5175, %v5171
          %v5400 = vpack.c.bf16 %v5180, %v5176
          %v5401 = vpack.c.bf16 %v5181, %v5177
          %v5402 = vpack.c.bf16 %v5182, %v5178
          %v5403 = vpack.c.bf16 %v5183, %v5179
          %v5404 = vpack.c.bf16 %v5188, %v5184
          %v5405 = vpack.c.bf16 %v5189, %v5185
          %v5406 = vpack.c.bf16 %v5190, %v5186
          %v5407 = vpack.c.bf16 %v5191, %v5187
          %v5408 = vpack.c.bf16 %v5196, %v5192
          %v5409 = vpack.c.bf16 %v5197, %v5193
          %v5410 = vpack.c.bf16 %v5198, %v5194
          %v5411 = vpack.c.bf16 %v5199, %v5195
          %v5412 = vpack.c.bf16 %v5204, %v5200
          %v5413 = vpack.c.bf16 %v5205, %v5201
          %v5414 = vpack.c.bf16 %v5206, %v5202
          %v5415 = vpack.c.bf16 %v5207, %v5203
          %v5416 = vpack.c.bf16 %v5212, %v5208
          %v5417 = vpack.c.bf16 %v5213, %v5209
          %v5418 = vpack.c.bf16 %v5214, %v5210
          %v5419 = vpack.c.bf16 %v5215, %v5211
          %v5420 = vpack.c.bf16 %v5220, %v5216
          %v5421 = vpack.c.bf16 %v5221, %v5217
          %v5422 = vpack.c.bf16 %v5222, %v5218
          %v5423 = vpack.c.bf16 %v5223, %v5219
          %v5424 = vpack.c.bf16 %v5228, %v5224
          %v5425 = vpack.c.bf16 %v5229, %v5225
          %v5426 = vpack.c.bf16 %v5230, %v5226
          %v5427 = vpack.c.bf16 %v5231, %v5227
          %v5428 = vtanh.bf16.pop %v5364
          %v5429 = vtanh.bf16.pop %v5365
          %v5430 = vtanh.bf16.pop %v5366
          %v5431 = vtanh.bf16.pop %v5367
          %v5432 = vtanh.bf16.pop %v5368
          %v5433 = vtanh.bf16.pop %v5369
          %v5434 = vtanh.bf16.pop %v5370
          %v5435 = vtanh.bf16.pop %v5371
          %v5436 = vtanh.bf16.pop %v5372
          %v5437 = vtanh.bf16.pop %v5373
          %v5438 = vtanh.bf16.pop %v5374
          %v5439 = vtanh.bf16.pop %v5375
          %v5440 = vtanh.bf16.pop %v5376
          %v5441 = vtanh.bf16.pop %v5377
          %v5442 = vtanh.bf16.pop %v5378
          %v5443 = vtanh.bf16.pop %v5379
          %v5444 = vtanh.bf16.pop %v5380
          %v5445 = vtanh.bf16.pop %v5381
          %v5446 = vtanh.bf16.pop %v5382
          %v5447 = vtanh.bf16.pop %v5383
          %v5448 = vtanh.bf16.pop %v5384
          %v5449 = vtanh.bf16.pop %v5385
          %v5450 = vtanh.bf16.pop %v5386
          %v5451 = vtanh.bf16.pop %v5387
          %v5452 = vtanh.bf16.pop %v5388
          %v5453 = vtanh.bf16.pop %v5389
          %v5454 = vtanh.bf16.pop %v5390
          %v5455 = vtanh.bf16.pop %v5391
          %v5456 = vtanh.bf16.pop %v5392
          %v5457 = vtanh.bf16.pop %v5393
          %v5458 = vtanh.bf16.pop %v5394
          %v5459 = vtanh.bf16.pop %v5395
          %v5460 = vtanh.bf16.pop %v5396
          %v5461 = vtanh.bf16.pop %v5397
          %v5462 = vtanh.bf16.pop %v5398
          %v5463 = vtanh.bf16.pop %v5399
          %v5464 = vtanh.bf16.pop %v5400
          %v5465 = vtanh.bf16.pop %v5401
          %v5466 = vtanh.bf16.pop %v5402
          %v5467 = vtanh.bf16.pop %v5403
          %v5468 = vtanh.bf16.pop %v5404
          %v5469 = vtanh.bf16.pop %v5405
          %v5470 = vtanh.bf16.pop %v5406
          %v5471 = vtanh.bf16.pop %v5407
          %v5472 = vtanh.bf16.pop %v5408
          %v5473 = vtanh.bf16.pop %v5409
          %v5474 = vtanh.bf16.pop %v5410
          %v5475 = vtanh.bf16.pop %v5411
          %v5476 = vtanh.bf16.pop %v5412
          %v5477 = vtanh.bf16.pop %v5413
          %v5478 = vtanh.bf16.pop %v5414
          %v5479 = vtanh.bf16.pop %v5415
          %v5480 = vtanh.bf16.pop %v5416
          %v5481 = vtanh.bf16.pop %v5417
          %v5482 = vtanh.bf16.pop %v5418
          %v5483 = vtanh.bf16.pop %v5419
          %v5484 = vtanh.bf16.pop %v5420
          %v5485 = vtanh.bf16.pop %v5421
          %v5486 = vtanh.bf16.pop %v5422
          %v5487 = vtanh.bf16.pop %v5423
          %v5488 = vtanh.bf16.pop %v5424
          %v5489 = vtanh.bf16.pop %v5425
          %v5490 = vtanh.bf16.pop %v5426
          %v5491 = vtanh.bf16.pop %v5427
          %v5492 = vld [vmem:[#allocation11] sm:$0xf]
          %v5493 = vld [vmem:[#allocation11 + $0x4] sm:$0xf]
          %v5494 = vld [vmem:[#allocation11 + $0x8] sm:$0xf]
          %v5495 = vld [vmem:[#allocation11 + $0xc] sm:$0xf]
          %v5496 = vld [vmem:[#allocation11 + $0x10] sm:$0xf]
          %v5497 = vld [vmem:[#allocation11 + $0x14] sm:$0xf]
          %v5498 = vld [vmem:[#allocation11 + $0x18] sm:$0xf]
          %v5499 = vld [vmem:[#allocation11 + $0x1c] sm:$0xf]
          %v5500 = vld [vmem:[#allocation11 + $0x20] sm:$0xf]
          %v5501 = vld [vmem:[#allocation11 + $0x24] sm:$0xf]
          %v5502 = vld [vmem:[#allocation11 + $0x28] sm:$0xf]
          %v5503 = vld [vmem:[#allocation11 + $0x2c] sm:$0xf]
          %v5504 = vld [vmem:[#allocation11 + $0x30] sm:$0xf]
          %v5505 = vld [vmem:[#allocation11 + $0x34] sm:$0xf]
          %v5506 = vld [vmem:[#allocation11 + $0x38] sm:$0xf]
          %v5507 = vld [vmem:[#allocation11 + $0x3c] sm:$0xf]
          %v5508 = vld [vmem:[#allocation11 + $0x40] sm:$0xf]
          %v5509 = vld [vmem:[#allocation11 + $0x44] sm:$0xf]
          %v5510 = vld [vmem:[#allocation11 + $0x48] sm:$0xf]
          %v5511 = vld [vmem:[#allocation11 + $0x4c] sm:$0xf]
          %v5512 = vld [vmem:[#allocation11 + $0x50] sm:$0xf]
          %v5513 = vld [vmem:[#allocation11 + $0x54] sm:$0xf]
          %v5514 = vld [vmem:[#allocation11 + $0x58] sm:$0xf]
          %v5515 = vld [vmem:[#allocation11 + $0x5c] sm:$0xf]
          %v5516 = vld [vmem:[#allocation11 + $0x60] sm:$0xf]
          %v5517 = vld [vmem:[#allocation11 + $0x64] sm:$0xf]
          %v5518 = vld [vmem:[#allocation11 + $0x68] sm:$0xf]
          %v5519 = vld [vmem:[#allocation11 + $0x6c] sm:$0xf]
          %v5520 = vld [vmem:[#allocation11 + $0x70] sm:$0xf]
          %v5521 = vld [vmem:[#allocation11 + $0x74] sm:$0xf]
          %v5522 = vld [vmem:[#allocation11 + $0x78] sm:$0xf]
          %v5523 = vld [vmem:[#allocation11 + $0x7c] sm:$0xf]
          %v5524 = vld [vmem:[#allocation11 + $0x80] sm:$0xf]
          %v5525 = vld [vmem:[#allocation11 + $0x84] sm:$0xf]
          %v5526 = vld [vmem:[#allocation11 + $0x88] sm:$0xf]
          %v5527 = vld [vmem:[#allocation11 + $0x8c] sm:$0xf]
          %v5528 = vld [vmem:[#allocation11 + $0x90] sm:$0xf]
          %v5529 = vld [vmem:[#allocation11 + $0x94] sm:$0xf]
          %v5530 = vld [vmem:[#allocation11 + $0x98] sm:$0xf]
          %v5531 = vld [vmem:[#allocation11 + $0x9c] sm:$0xf]
          %v5532 = vld [vmem:[#allocation11 + $0xa0] sm:$0xf]
          %v5533 = vld [vmem:[#allocation11 + $0xa4] sm:$0xf]
          %v5534 = vld [vmem:[#allocation11 + $0xa8] sm:$0xf]
          %v5535 = vld [vmem:[#allocation11 + $0xac] sm:$0xf]
          %v5536 = vld [vmem:[#allocation11 + $0xb0] sm:$0xf]
          %v5537 = vld [vmem:[#allocation11 + $0xb4] sm:$0xf]
          %v5538 = vld [vmem:[#allocation11 + $0xb8] sm:$0xf]
          %v5539 = vld [vmem:[#allocation11 + $0xbc] sm:$0xf]
          %v5540 = vld [vmem:[#allocation11 + $0xc0] sm:$0xf]
          %v5541 = vld [vmem:[#allocation11 + $0xc4] sm:$0xf]
          %v5542 = vld [vmem:[#allocation11 + $0xc8] sm:$0xf]
          %v5543 = vld [vmem:[#allocation11 + $0xcc] sm:$0xf]
          %v5544 = vld [vmem:[#allocation11 + $0xd0] sm:$0xf]
          %v5545 = vld [vmem:[#allocation11 + $0xd4] sm:$0xf]
          %v5546 = vld [vmem:[#allocation11 + $0xd8] sm:$0xf]
          %v5547 = vld [vmem:[#allocation11 + $0xdc] sm:$0xf]
          %v5548 = vld [vmem:[#allocation11 + $0xe0] sm:$0xf]
          %v5549 = vld [vmem:[#allocation11 + $0xe4] sm:$0xf]
          %v5550 = vld [vmem:[#allocation11 + $0xe8] sm:$0xf]
          %v5551 = vld [vmem:[#allocation11 + $0xec] sm:$0xf]
          %v5552 = vld [vmem:[#allocation11 + $0xf0] sm:$0xf]
          %v5553 = vld [vmem:[#allocation11 + $0xf4] sm:$0xf]
          %v5554 = vld [vmem:[#allocation11 + $0xf8] sm:$0xf]
          %v5555 = vld [vmem:[#allocation11 + $0xfc] sm:$0xf]
          %v5556 = vld [vmem:[#allocation13] sm:$0x1]
          %v5558 = vlaneseq
          %v5559 = vshrl.u32 %v5558, 7
          %v5560 = vsub.s32 0, %v5559
          %v5561 = vrot.slane %v5556, %v5560
          %v5627 = vunpack.c.l.b16 %v5492
          %v5628 = vunpack.c.l.b16 %v5493
          %v5629 = vunpack.c.l.b16 %v5494
          %v5630 = vunpack.c.l.b16 %v5495
          %v5631 = vunpack.c.l.b16 %v5496
          %v5632 = vunpack.c.l.b16 %v5497
          %v5633 = vunpack.c.l.b16 %v5498
          %v5634 = vunpack.c.l.b16 %v5499
          %v5635 = vunpack.c.l.b16 %v5500
          %v5636 = vunpack.c.l.b16 %v5501
          %v5637 = vunpack.c.l.b16 %v5502
          %v5638 = vunpack.c.l.b16 %v5503
          %v5639 = vunpack.c.l.b16 %v5504
          %v5640 = vunpack.c.l.b16 %v5505
          %v5641 = vunpack.c.l.b16 %v5506
          %v5642 = vunpack.c.l.b16 %v5507
          %v5643 = vunpack.c.l.b16 %v5508
          %v5644 = vunpack.c.l.b16 %v5509
          %v5645 = vunpack.c.l.b16 %v5510
          %v5646 = vunpack.c.l.b16 %v5511
          %v5647 = vunpack.c.l.b16 %v5512
          %v5648 = vunpack.c.l.b16 %v5513
          %v5649 = vunpack.c.l.b16 %v5514
          %v5650 = vunpack.c.l.b16 %v5515
          %v5651 = vunpack.c.l.b16 %v5516
          %v5652 = vunpack.c.l.b16 %v5517
          %v5653 = vunpack.c.l.b16 %v5518
          %v5654 = vunpack.c.l.b16 %v5519
          %v5655 = vunpack.c.l.b16 %v5520
          %v5656 = vunpack.c.l.b16 %v5521
          %v5657 = vunpack.c.l.b16 %v5522
          %v5658 = vunpack.c.l.b16 %v5523
          %v5659 = vunpack.c.l.b16 %v5524
          %v5660 = vunpack.c.l.b16 %v5525
          %v5661 = vunpack.c.l.b16 %v5526
          %v5662 = vunpack.c.l.b16 %v5527
          %v5663 = vunpack.c.l.b16 %v5528
          %v5664 = vunpack.c.l.b16 %v5529
          %v5665 = vunpack.c.l.b16 %v5530
          %v5666 = vunpack.c.l.b16 %v5531
          %v5667 = vunpack.c.l.b16 %v5532
          %v5668 = vunpack.c.l.b16 %v5533
          %v5669 = vunpack.c.l.b16 %v5534
          %v5670 = vunpack.c.l.b16 %v5535
          %v5671 = vunpack.c.l.b16 %v5536
          %v5672 = vunpack.c.l.b16 %v5537
          %v5673 = vunpack.c.l.b16 %v5538
          %v5674 = vunpack.c.l.b16 %v5539
          %v5675 = vunpack.c.l.b16 %v5540
          %v5676 = vunpack.c.l.b16 %v5541
          %v5677 = vunpack.c.l.b16 %v5542
          %v5678 = vunpack.c.l.b16 %v5543
          %v5679 = vunpack.c.l.b16 %v5544
          %v5680 = vunpack.c.l.b16 %v5545
          %v5681 = vunpack.c.l.b16 %v5546
          %v5682 = vunpack.c.l.b16 %v5547
          %v5683 = vunpack.c.l.b16 %v5548
          %v5684 = vunpack.c.l.b16 %v5549
          %v5685 = vunpack.c.l.b16 %v5550
          %v5686 = vunpack.c.l.b16 %v5551
          %v5687 = vunpack.c.l.b16 %v5552
          %v5688 = vunpack.c.l.b16 %v5553
          %v5689 = vunpack.c.l.b16 %v5554
          %v5690 = vunpack.c.l.b16 %v5555
          %v5691 = vpack.c.b16 %v5628, %v5627
          %v5692 = vpack.c.b16 %v5630, %v5629
          %v5693 = vpack.c.b16 %v5632, %v5631
          %v5694 = vpack.c.b16 %v5634, %v5633
          %v5695 = vpack.c.b16 %v5636, %v5635
          %v5696 = vpack.c.b16 %v5638, %v5637
          %v5697 = vpack.c.b16 %v5640, %v5639
          %v5698 = vpack.c.b16 %v5642, %v5641
          %v5699 = vpack.c.b16 %v5644, %v5643
          %v5700 = vpack.c.b16 %v5646, %v5645
          %v5701 = vpack.c.b16 %v5648, %v5647
          %v5702 = vpack.c.b16 %v5650, %v5649
          %v5703 = vpack.c.b16 %v5652, %v5651
          %v5704 = vpack.c.b16 %v5654, %v5653
          %v5705 = vpack.c.b16 %v5656, %v5655
          %v5706 = vpack.c.b16 %v5658, %v5657
          %v5707 = vpack.c.b16 %v5660, %v5659
          %v5708 = vpack.c.b16 %v5662, %v5661
          %v5709 = vpack.c.b16 %v5664, %v5663
          %v5710 = vpack.c.b16 %v5666, %v5665
          %v5711 = vpack.c.b16 %v5668, %v5667
          %v5712 = vpack.c.b16 %v5670, %v5669
          %v5713 = vpack.c.b16 %v5672, %v5671
          %v5714 = vpack.c.b16 %v5674, %v5673
          %v5715 = vpack.c.b16 %v5676, %v5675
          %v5716 = vpack.c.b16 %v5678, %v5677
          %v5717 = vpack.c.b16 %v5680, %v5679
          %v5718 = vpack.c.b16 %v5682, %v5681
          %v5719 = vpack.c.b16 %v5684, %v5683
          %v5720 = vpack.c.b16 %v5686, %v5685
          %v5721 = vpack.c.b16 %v5688, %v5687
          %v5722 = vpack.c.b16 %v5690, %v5689
          %5755 = vmatprep.subr.bf16.mxu0 0
          %5756 = vmatpush1.bf16.msra.mxu0 %v5691
          %5757 = vmatprep.subr.bf16.mxu0 0
          %5758 = vmatpush1.bf16.msra.mxu0 %v5692
          %5759 = vmatprep.subr.bf16.mxu0 0
          %5760 = vmatpush1.bf16.msra.mxu0 %v5693
          %5761 = vmatprep.subr.bf16.mxu0 0
          %5762 = vmatpush1.bf16.msra.mxu0 %v5694
          %5763 = vmatprep.subr.bf16.mxu0 0
          %5764 = vmatpush1.bf16.msra.mxu0 %v5695
          %5765 = vmatprep.subr.bf16.mxu0 0
          %5766 = vmatpush1.bf16.msra.mxu0 %v5696
          %5767 = vmatprep.subr.bf16.mxu0 0
          %5768 = vmatpush1.bf16.msra.mxu0 %v5697
          %5769 = vmatprep.subr.bf16.mxu0 0
          %5770 = vmatpush1.bf16.msra.mxu0 %v5698
          %5771 = vmatprep.subr.bf16.mxu0 0
          %5772 = vmatpush1.bf16.msra.mxu0 %v5699
          %5773 = vmatprep.subr.bf16.mxu0 0
          %5774 = vmatpush1.bf16.msra.mxu0 %v5700
          %5775 = vmatprep.subr.bf16.mxu0 0
          %5776 = vmatpush1.bf16.msra.mxu0 %v5701
          %5777 = vmatprep.subr.bf16.mxu0 0
          %5778 = vmatpush1.bf16.msra.mxu0 %v5702
          %5779 = vmatprep.subr.bf16.mxu0 0
          %5780 = vmatpush1.bf16.msra.mxu0 %v5703
          %5781 = vmatprep.subr.bf16.mxu0 0
          %5782 = vmatpush1.bf16.msra.mxu0 %v5704
          %5783 = vmatprep.subr.bf16.mxu0 0
          %5784 = vmatpush1.bf16.msra.mxu0 %v5705
          %5785 = vmatprep.subr.bf16.mxu0 0
          %5786 = vmatpush1.bf16.msra.mxu0 %v5706
          %5787 = vmatprep.mubr.bf16.mxu0 %v5429
          %5788 = vmatmul.mubr.bf16.gmra.mrb[0].mxu0 %v5428
          %v5789 = vpop.f32.mrb[0].mxu0
          %v5790 = vadd.f32 %v5561, %v5789
          %v5791 = vpop.f32.mrb[0].mxu0
          %v5792 = vpop.f32.mrb[0].mxu0
          %v5793 = vadd.f32 %v5561, %v5792
          %v5794 = vpop.f32.mrb[0].mxu0
          %5795 = vmatprep.mubr.bf16.mxu0 %v5433
          %5796 = vmatmul.mubr.bf16.gmra.mrb[0].mxu0 %v5432
          %v5797 = vpop.f32.mrb[0].mxu0
          %v5798 = vadd.f32 %v5561, %v5797
          %v5799 = vpop.f32.mrb[0].mxu0
          %v5800 = vpop.f32.mrb[0].mxu0
          %v5801 = vadd.f32 %v5561, %v5800
          %v5802 = vpop.f32.mrb[0].mxu0
          %5803 = vmatprep.mubr.bf16.mxu0 %v5437
          %5804 = vmatmul.mubr.bf16.gmra.mrb[0].mxu0 %v5436
          %v5805 = vpop.f32.mrb[0].mxu0
          %v5806 = vadd.f32 %v5561, %v5805
          %v5807 = vpop.f32.mrb[0].mxu0
          %v5808 = vpop.f32.mrb[0].mxu0
          %v5809 = vadd.f32 %v5561, %v5808
          %v5810 = vpop.f32.mrb[0].mxu0
          %5811 = vmatprep.mubr.bf16.mxu0 %v5441
          %5812 = vmatmul.mubr.bf16.gmra.mrb[0].mxu0 %v5440
          %v5813 = vpop.f32.mrb[0].mxu0
          %v5814 = vadd.f32 %v5561, %v5813
          %v5815 = vpop.f32.mrb[0].mxu0
          %v5816 = vpop.f32.mrb[0].mxu0
          %v5817 = vadd.f32 %v5561, %v5816
          %v5818 = vpop.f32.mrb[0].mxu0
          %5819 = vmatprep.mubr.bf16.mxu0 %v5445
          %5820 = vmatmul.mubr.bf16.gmra.mrb[0].mxu0 %v5444
          %v5821 = vpop.f32.mrb[0].mxu0
          %v5822 = vadd.f32 %v5561, %v5821
          %v5823 = vpop.f32.mrb[0].mxu0
          %v5824 = vpop.f32.mrb[0].mxu0
          %v5825 = vadd.f32 %v5561, %v5824
          %v5826 = vpop.f32.mrb[0].mxu0
          %5827 = vmatprep.mubr.bf16.mxu0 %v5449
          %5828 = vmatmul.mubr.bf16.gmra.mrb[0].mxu0 %v5448
          %v5829 = vpop.f32.mrb[0].mxu0
          %v5830 = vadd.f32 %v5561, %v5829
          %v5831 = vpop.f32.mrb[0].mxu0
          %v5832 = vpop.f32.mrb[0].mxu0
          %v5833 = vadd.f32 %v5561, %v5832
          %v5834 = vpop.f32.mrb[0].mxu0
          %5835 = vmatprep.mubr.bf16.mxu0 %v5453
          %5836 = vmatmul.mubr.bf16.gmra.mrb[0].mxu0 %v5452
          %v5837 = vpop.f32.mrb[0].mxu0
          %v5838 = vadd.f32 %v5561, %v5837
          %v5839 = vpop.f32.mrb[0].mxu0
          %v5840 = vpop.f32.mrb[0].mxu0
          %v5841 = vadd.f32 %v5561, %v5840
          %v5842 = vpop.f32.mrb[0].mxu0
          %5843 = vmatprep.mubr.bf16.mxu0 %v5457
          %5844 = vmatmul.mubr.bf16.gmra.mrb[0].mxu0 %v5456
          %v5845 = vpop.f32.mrb[0].mxu0
          %v5846 = vadd.f32 %v5561, %v5845
          %v5847 = vpop.f32.mrb[0].mxu0
          %v5848 = vpop.f32.mrb[0].mxu0
          %v5849 = vadd.f32 %v5561, %v5848
          %v5850 = vpop.f32.mrb[0].mxu0
          %5851 = vmatprep.mubr.bf16.mxu0 %v5461
          %5852 = vmatmul.mubr.bf16.gmra.mrb[0].mxu0 %v5460
          %v5853 = vpop.f32.mrb[0].mxu0
          %v5854 = vadd.f32 %v5561, %v5853
          %v5855 = vpop.f32.mrb[0].mxu0
          %v5856 = vpop.f32.mrb[0].mxu0
          %v5857 = vadd.f32 %v5561, %v5856
          %v5858 = vpop.f32.mrb[0].mxu0
          %5859 = vmatprep.mubr.bf16.mxu0 %v5465
          %5860 = vmatmul.mubr.bf16.gmra.mrb[0].mxu0 %v5464
          %v5861 = vpop.f32.mrb[0].mxu0
          %v5862 = vadd.f32 %v5561, %v5861
          %v5863 = vpop.f32.mrb[0].mxu0
          %v5864 = vpop.f32.mrb[0].mxu0
          %v5865 = vadd.f32 %v5561, %v5864
          %v5866 = vpop.f32.mrb[0].mxu0
          %5867 = vmatprep.mubr.bf16.mxu0 %v5469
          %5868 = vmatmul.mubr.bf16.gmra.mrb[0].mxu0 %v5468
          %v5869 = vpop.f32.mrb[0].mxu0
          %v5870 = vadd.f32 %v5561, %v5869
          %v5871 = vpop.f32.mrb[0].mxu0
          %v5872 = vpop.f32.mrb[0].mxu0
          %v5873 = vadd.f32 %v5561, %v5872
          %v5874 = vpop.f32.mrb[0].mxu0
          %5875 = vmatprep.mubr.bf16.mxu0 %v5473
          %5876 = vmatmul.mubr.bf16.gmra.mrb[0].mxu0 %v5472
          %v5877 = vpop.f32.mrb[0].mxu0
          %v5878 = vadd.f32 %v5561, %v5877
          %v5879 = vpop.f32.mrb[0].mxu0
          %v5880 = vpop.f32.mrb[0].mxu0
          %v5881 = vadd.f32 %v5561, %v5880
          %v5882 = vpop.f32.mrb[0].mxu0
          %5883 = vmatprep.mubr.bf16.mxu0 %v5477
          %5884 = vmatmul.mubr.bf16.gmra.mrb[0].mxu0 %v5476
          %v5885 = vpop.f32.mrb[0].mxu0
          %v5886 = vadd.f32 %v5561, %v5885
          %v5887 = vpop.f32.mrb[0].mxu0
          %v5888 = vpop.f32.mrb[0].mxu0
          %v5889 = vadd.f32 %v5561, %v5888
          %v5890 = vpop.f32.mrb[0].mxu0
          %5891 = vmatprep.mubr.bf16.mxu0 %v5481
          %5892 = vmatmul.mubr.bf16.gmra.mrb[0].mxu0 %v5480
          %v5893 = vpop.f32.mrb[0].mxu0
          %v5894 = vadd.f32 %v5561, %v5893
          %v5895 = vpop.f32.mrb[0].mxu0
          %v5896 = vpop.f32.mrb[0].mxu0
          %v5897 = vadd.f32 %v5561, %v5896
          %v5898 = vpop.f32.mrb[0].mxu0
          %5899 = vmatprep.mubr.bf16.mxu0 %v5485
          %5900 = vmatmul.mubr.bf16.gmra.mrb[0].mxu0 %v5484
          %v5901 = vpop.f32.mrb[0].mxu0
          %v5902 = vadd.f32 %v5561, %v5901
          %v5903 = vpop.f32.mrb[0].mxu0
          %v5904 = vpop.f32.mrb[0].mxu0
          %v5905 = vadd.f32 %v5561, %v5904
          %v5906 = vpop.f32.mrb[0].mxu0
          %5907 = vmatprep.mubr.bf16.mxu0 %v5489
          %5908 = vmatmul.mubr.bf16.gmra.mrb[0].mxu0 %v5488
          %v5909 = vpop.f32.mrb[0].mxu0
          %v5910 = vadd.f32 %v5561, %v5909
          %v5911 = vpop.f32.mrb[0].mxu0
          %v5912 = vpop.f32.mrb[0].mxu0
          %v5913 = vadd.f32 %v5561, %v5912
          %v5914 = vpop.f32.mrb[0].mxu0
          %5915 = vdwg.mxu0
          %5916 = vmatprep.subr.bf16.mxu0 0
          %5917 = vmatpush1.bf16.msra.mxu0 %v5707
          %5918 = vmatprep.subr.bf16.mxu0 0
          %5919 = vmatpush1.bf16.msra.mxu0 %v5708
          %5920 = vmatprep.subr.bf16.mxu0 0
          %5921 = vmatpush1.bf16.msra.mxu0 %v5709
          %5922 = vmatprep.subr.bf16.mxu0 0
          %5923 = vmatpush1.bf16.msra.mxu0 %v5710
          %5924 = vmatprep.subr.bf16.mxu0 0
          %5925 = vmatpush1.bf16.msra.mxu0 %v5711
          %5926 = vmatprep.subr.bf16.mxu0 0
          %5927 = vmatpush1.bf16.msra.mxu0 %v5712
          %5928 = vmatprep.subr.bf16.mxu0 0
          %5929 = vmatpush1.bf16.msra.mxu0 %v5713
          %5930 = vmatprep.subr.bf16.mxu0 0
          %5931 = vmatpush1.bf16.msra.mxu0 %v5714
          %5932 = vmatprep.subr.bf16.mxu0 0
          %5933 = vmatpush1.bf16.msra.mxu0 %v5715
          %5934 = vmatprep.subr.bf16.mxu0 0
          %5935 = vmatpush1.bf16.msra.mxu0 %v5716
          %5936 = vmatprep.subr.bf16.mxu0 0
          %5937 = vmatpush1.bf16.msra.mxu0 %v5717
          %5938 = vmatprep.subr.bf16.mxu0 0
          %5939 = vmatpush1.bf16.msra.mxu0 %v5718
          %5940 = vmatprep.subr.bf16.mxu0 0
          %5941 = vmatpush1.bf16.msra.mxu0 %v5719
          %5942 = vmatprep.subr.bf16.mxu0 0
          %5943 = vmatpush1.bf16.msra.mxu0 %v5720
          %5944 = vmatprep.subr.bf16.mxu0 0
          %5945 = vmatpush1.bf16.msra.mxu0 %v5721
          %5946 = vmatprep.subr.bf16.mxu0 0
          %5947 = vmatpush1.bf16.msra.mxu0 %v5722
          %5948 = vmatprep.mubr.bf16.mxu0 %v5431
          %5949 = vmatmul.mubr.bf16.gmra.mrb[0].mxu0 %v5430
          %v5950 = vpop.f32.mrb[0].mxu0
          %v5951 = vadd.f32 %v5790, %v5950
          %v5952 = vpop.f32.mrb[0].mxu0
          %v5953 = vpop.f32.mrb[0].mxu0
          %v5954 = vadd.f32 %v5793, %v5953
          %v5955 = vpop.f32.mrb[0].mxu0
          %5956 = vmatprep.mubr.bf16.mxu0 %v5435
          %5957 = vmatmul.mubr.bf16.gmra.mrb[0].mxu0 %v5434
          %v5958 = vpop.f32.mrb[0].mxu0
          %v5959 = vadd.f32 %v5798, %v5958
          %v5960 = vpop.f32.mrb[0].mxu0
          %v5961 = vpop.f32.mrb[0].mxu0
          %v5962 = vadd.f32 %v5801, %v5961
          %v5963 = vpop.f32.mrb[0].mxu0
          %5964 = vmatprep.mubr.bf16.mxu0 %v5439
          %5965 = vmatmul.mubr.bf16.gmra.mrb[0].mxu0 %v5438
          %v5966 = vpop.f32.mrb[0].mxu0
          %v5967 = vadd.f32 %v5806, %v5966
          %v5968 = vpop.f32.mrb[0].mxu0
          %v5969 = vpop.f32.mrb[0].mxu0
          %v5970 = vadd.f32 %v5809, %v5969
          %v5971 = vpop.f32.mrb[0].mxu0
          %5972 = vmatprep.mubr.bf16.mxu0 %v5443
          %5973 = vmatmul.mubr.bf16.gmra.mrb[0].mxu0 %v5442
          %v5974 = vpop.f32.mrb[0].mxu0
          %v5975 = vadd.f32 %v5814, %v5974
          %v5976 = vpop.f32.mrb[0].mxu0
          %v5977 = vpop.f32.mrb[0].mxu0
          %v5978 = vadd.f32 %v5817, %v5977
          %v5979 = vpop.f32.mrb[0].mxu0
          %5980 = vmatprep.mubr.bf16.mxu0 %v5447
          %5981 = vmatmul.mubr.bf16.gmra.mrb[0].mxu0 %v5446
          %v5982 = vpop.f32.mrb[0].mxu0
          %v5983 = vadd.f32 %v5822, %v5982
          %v5984 = vpop.f32.mrb[0].mxu0
          %v5985 = vpop.f32.mrb[0].mxu0
          %v5986 = vadd.f32 %v5825, %v5985
          %v5987 = vpop.f32.mrb[0].mxu0
          %5988 = vmatprep.mubr.bf16.mxu0 %v5451
          %5989 = vmatmul.mubr.bf16.gmra.mrb[0].mxu0 %v5450
          %v5990 = vpop.f32.mrb[0].mxu0
          %v5991 = vadd.f32 %v5830, %v5990
          %v5992 = vpop.f32.mrb[0].mxu0
          %v5993 = vpop.f32.mrb[0].mxu0
          %v5994 = vadd.f32 %v5833, %v5993
          %v5995 = vpop.f32.mrb[0].mxu0
          %5996 = vmatprep.mubr.bf16.mxu0 %v5455
          %5997 = vmatmul.mubr.bf16.gmra.mrb[0].mxu0 %v5454
          %v5998 = vpop.f32.mrb[0].mxu0
          %v5999 = vadd.f32 %v5838, %v5998
          %v6000 = vpop.f32.mrb[0].mxu0
          %v6001 = vpop.f32.mrb[0].mxu0
          %v6002 = vadd.f32 %v5841, %v6001
          %v6003 = vpop.f32.mrb[0].mxu0
          %6004 = vmatprep.mubr.bf16.mxu0 %v5459
          %6005 = vmatmul.mubr.bf16.gmra.mrb[0].mxu0 %v5458
          %v6006 = vpop.f32.mrb[0].mxu0
          %v6007 = vadd.f32 %v5846, %v6006
          %v6008 = vpop.f32.mrb[0].mxu0
          %v6009 = vpop.f32.mrb[0].mxu0
          %v6010 = vadd.f32 %v5849, %v6009
          %v6011 = vpop.f32.mrb[0].mxu0
          %6012 = vmatprep.mubr.bf16.mxu0 %v5463
          %6013 = vmatmul.mubr.bf16.gmra.mrb[0].mxu0 %v5462
          %v6014 = vpop.f32.mrb[0].mxu0
          %v6015 = vadd.f32 %v5854, %v6014
          %v6016 = vpop.f32.mrb[0].mxu0
          %v6017 = vpop.f32.mrb[0].mxu0
          %v6018 = vadd.f32 %v5857, %v6017
          %v6019 = vpop.f32.mrb[0].mxu0
          %6020 = vmatprep.mubr.bf16.mxu0 %v5467
          %6021 = vmatmul.mubr.bf16.gmra.mrb[0].mxu0 %v5466
          %v6022 = vpop.f32.mrb[0].mxu0
          %v6023 = vadd.f32 %v5862, %v6022
          %v6024 = vpop.f32.mrb[0].mxu0
          %v6025 = vpop.f32.mrb[0].mxu0
          %v6026 = vadd.f32 %v5865, %v6025
          %v6027 = vpop.f32.mrb[0].mxu0
          %6028 = vmatprep.mubr.bf16.mxu0 %v5471
          %6029 = vmatmul.mubr.bf16.gmra.mrb[0].mxu0 %v5470
          %v6030 = vpop.f32.mrb[0].mxu0
          %v6031 = vadd.f32 %v5870, %v6030
          %v6032 = vpop.f32.mrb[0].mxu0
          %v6033 = vpop.f32.mrb[0].mxu0
          %v6034 = vadd.f32 %v5873, %v6033
          %v6035 = vpop.f32.mrb[0].mxu0
          %6036 = vmatprep.mubr.bf16.mxu0 %v5475
          %6037 = vmatmul.mubr.bf16.gmra.mrb[0].mxu0 %v5474
          %v6038 = vpop.f32.mrb[0].mxu0
          %v6039 = vadd.f32 %v5878, %v6038
          %v6040 = vpop.f32.mrb[0].mxu0
          %v6041 = vpop.f32.mrb[0].mxu0
          %v6042 = vadd.f32 %v5881, %v6041
          %v6043 = vpop.f32.mrb[0].mxu0
          %6044 = vmatprep.mubr.bf16.mxu0 %v5479
          %6045 = vmatmul.mubr.bf16.gmra.mrb[0].mxu0 %v5478
          %v6046 = vpop.f32.mrb[0].mxu0
          %v6047 = vadd.f32 %v5886, %v6046
          %v6048 = vpop.f32.mrb[0].mxu0
          %v6049 = vpop.f32.mrb[0].mxu0
          %v6050 = vadd.f32 %v5889, %v6049
          %v6051 = vpop.f32.mrb[0].mxu0
          %6052 = vmatprep.mubr.bf16.mxu0 %v5483
          %6053 = vmatmul.mubr.bf16.gmra.mrb[0].mxu0 %v5482
          %v6054 = vpop.f32.mrb[0].mxu0
          %v6055 = vadd.f32 %v5894, %v6054
          %v6056 = vpop.f32.mrb[0].mxu0
          %v6057 = vpop.f32.mrb[0].mxu0
          %v6058 = vadd.f32 %v5897, %v6057
          %v6059 = vpop.f32.mrb[0].mxu0
          %6060 = vmatprep.mubr.bf16.mxu0 %v5487
          %6061 = vmatmul.mubr.bf16.gmra.mrb[0].mxu0 %v5486
          %v6062 = vpop.f32.mrb[0].mxu0
          %v6063 = vadd.f32 %v5902, %v6062
          %v6064 = vpop.f32.mrb[0].mxu0
          %v6065 = vpop.f32.mrb[0].mxu0
          %v6066 = vadd.f32 %v5905, %v6065
          %v6067 = vpop.f32.mrb[0].mxu0
          %6068 = vmatprep.mubr.bf16.mxu0 %v5491
          %6069 = vmatmul.mubr.bf16.gmra.mrb[0].mxu0 %v5490
          %v6070 = vpop.f32.mrb[0].mxu0
          %v6071 = vadd.f32 %v5910, %v6070
          %v6072 = vpop.f32.mrb[0].mxu0
          %v6073 = vpop.f32.mrb[0].mxu0
          %v6074 = vadd.f32 %v5913, %v6073
          %v6075 = vpop.f32.mrb[0].mxu0
          %6076 = vdwg.mxu0
          %6077 = vst [vmem:[%s437] sm:$0xff] %v5951
          %6078 = vst [vmem:[%s437 + $0x8] sm:$0xff] %v5954
          %6079 = vst [vmem:[%s437 + $0x10] sm:$0xff] %v5959
          %6080 = vst [vmem:[%s437 + $0x18] sm:$0xff] %v5962
          %6081 = vst [vmem:[%s437 + $0x20] sm:$0xff] %v5967
          %6082 = vst [vmem:[%s437 + $0x28] sm:$0xff] %v5970
          %6083 = vst [vmem:[%s437 + $0x30] sm:$0xff] %v5975
          %6084 = vst [vmem:[%s437 + $0x38] sm:$0xff] %v5978
          %6085 = vst [vmem:[%s437 + $0x40] sm:$0xff] %v5983
          %6086 = vst [vmem:[%s437 + $0x48] sm:$0xff] %v5986
          %6087 = vst [vmem:[%s437 + $0x50] sm:$0xff] %v5991
          %6088 = vst [vmem:[%s437 + $0x58] sm:$0xff] %v5994
          %6089 = vst [vmem:[%s437 + $0x60] sm:$0xff] %v5999
          %6090 = vst [vmem:[%s437 + $0x68] sm:$0xff] %v6002
          %6091 = vst [vmem:[%s437 + $0x70] sm:$0xff] %v6007
          %6092 = vst [vmem:[%s437 + $0x78] sm:$0xff] %v6010
          %6093 = vst [vmem:[%s437 + $0x80] sm:$0xff] %v6015
          %6094 = vst [vmem:[%s437 + $0x88] sm:$0xff] %v6018
          %6095 = vst [vmem:[%s437 + $0x90] sm:$0xff] %v6023
          %6096 = vst [vmem:[%s437 + $0x98] sm:$0xff] %v6026
          %6097 = vst [vmem:[%s437 + $0xa0] sm:$0xff] %v6031
          %6098 = vst [vmem:[%s437 + $0xa8] sm:$0xff] %v6034
          %6099 = vst [vmem:[%s437 + $0xb0] sm:$0xff] %v6039
          %6100 = vst [vmem:[%s437 + $0xb8] sm:$0xff] %v6042
          %6101 = vst [vmem:[%s437 + $0xc0] sm:$0xff] %v6047
          %6102 = vst [vmem:[%s437 + $0xc8] sm:$0xff] %v6050
          %6103 = vst [vmem:[%s437 + $0xd0] sm:$0xff] %v6055
          %6104 = vst [vmem:[%s437 + $0xd8] sm:$0xff] %v6058
          %6105 = vst [vmem:[%s437 + $0xe0] sm:$0xff] %v6063
          %6106 = vst [vmem:[%s437 + $0xe8] sm:$0xff] %v6066
          %6107 = vst [vmem:[%s437 + $0xf0] sm:$0xff] %v6071
          %6108 = vst [vmem:[%s437 + $0xf8] sm:$0xff] %v6074
        $region88: #{cnnmlp_forward.1} parent=51 // pred_fallthru
          _
        %s6109 = smul.u32 32, %s27
        %p6110 = scmp.lt.s32.totalorder %s6109, 31
        %s6111 = scalar_select %p6110, %s6109, 31
        %s6112 = smul.addr %s6111, 8
        %s6113 = scalar_lea.vmem %s8, %s6112
        // Predicated region
        $region89: #{cnnmlp_forward.1} parent=51 // pred_check
          %p6114 = pneg %p231
        $region90: #{cnnmlp_forward.1} parent=51 // pred_check_branch
          %6116 = sbr.rel (%p6114) target = $region92
        $region91: #{cnnmlp_forward.1} parent=51 // pred_region
          %s6117 = smul.u32 32, %s27
        $region92: #{cnnmlp_forward.1} parent=51 // pred_fallthru
          _
        // Predicated region
        $region93: #{cnnmlp_forward.1} parent=51 // pred_check
          %p6118 = pneg %p231
        $region94: #{cnnmlp_forward.1} parent=51 // pred_check_branch
          %6120 = sbr.rel (%p6118) target = $region96
        $region95: #{cnnmlp_forward.1} parent=51 // pred_region
          %s6121 = smul.u32 32, %s27
          %p6122 = scmp.lt.s32.totalorder %s6121, 31
          %s6123 = scalar_select %p6122, %s6121, 31
          %s6124 = smul.addr %s6123, 8
          %s6125 = scalar_lea.vmem %s8, %s6124
        $region96: #{cnnmlp_forward.1} parent=51 // pred_fallthru
          _
      $region52: #{cnnmlp_forward.1} parent=5 // pred_fallthru
        _
      %p6126 = scmp.le.s32.totalorder 2, %s18
      // Predicated region
      $region97: #{cnnmlp_forward.1} parent=5 // pred_check
        %p6127 = pneg %p6126
      $region98: #{cnnmlp_forward.1} parent=5 // pred_check_branch
        %6129 = sbr.rel (%p6127) target = $region100
      $region99: #{cnnmlp_forward.1} parent=5 // pred_region
        %s6130 = ssub.s32 %s18, 2
      $region100: #{cnnmlp_forward.1} parent=5 // pred_fallthru
        _
    $region6: #{cnnmlp_forward.1} parent=1 // loop_footer
      %s22 = sadd.s32 1, %s18
    $region7: #{cnnmlp_forward.1} parent=1 // loop_footer_branch
      %17 = sbr.rel target = $region3
    $region8: #{cnnmlp_forward.1} parent=1 // loop_exit
      _
    %6131 = vsyncpa [#allocation4], 1
    %s6132 = scalar_lea.sflag [#allocation4], 1
    %6133 = vsyncpa %s6132, 1
    %6134 = vsyncpa [#allocation8], 1
    %6135 = vsyncpa [#allocation12], 1
    %6136 = vsyncpa [#allocation5], 1
    %s6137 = scalar_lea.sflag [#allocation5], 1
    %6138 = vsyncpa %s6137, 1

</llo_original>
